<compile_context>
chip_gen: v6e
topology: v6e:2x2x1
jax: 0.10.0
libtpu: 0.0.40
codegen_flags: <defaults>
</compile_context>

<pallas_src>
import functools

import jax
import jax.numpy as jnp
from jax import lax
from jax.experimental import pallas as pl
from jax.experimental.pallas import tpu as pltpu


# --------------------------------------------------------------------------- kernel body
def _attn_compute(x_ref, wqkv_ref, wp_ref, bp_ref, tf_ref, wt_ref, bt_ref,
                  o_ref, cat_ref, *, batch, seq, num_heads):
    # x_ref  : (B, N, D)  f32     wqkv_ref: (D, 3D) bf16 (scale folded into q columns)
    # wp_ref : (D, D)     bf16    bp_ref  : (1, D)  f32
    # tf_ref : (B, N, F)  f32|None  wt_ref: (F, hd) bf16  bt_ref: (1, hd) f32
    # o_ref  : (B, N, D)  f32     cat_ref : (B*N, D) bf16 VMEM scratch (per-head concat)
    D = o_ref.shape[-1]
    hd = D // num_heads
    BN = batch * seq

    # Fused QKV matmul over the whole batch: M = B*N fills the MXU.
    x = x_ref[...].reshape(BN, D).astype(jnp.bfloat16)                       # (BN, D)
    qkv = jnp.dot(x, wqkv_ref[...], preferred_element_type=jnp.float32)      # (BN, 3D) f32

    if tf_ref is not None:
        t = tf_ref[...].reshape(BN, -1).astype(jnp.bfloat16)                 # (BN, F)
        tproj = (jnp.dot(t, wt_ref[...], preferred_element_type=jnp.float32)
                 + bt_ref[...])                                              # (BN, hd) f32
    else:
        tproj = None

    # Per-(batch, head) attention.  Static unroll: B*H = 4 here.
    # TODO(synk): for production ViT shapes (H=12, hd=64, N=197) switch this to a
    # lax.fori_loop over pl.ds slices and pad N/hd to (8,128) multiples.
    for b in range(batch):
        r0 = b * seq
        for h in range(num_heads):  # hd = 128 -> slices are 128-lane aligned
            qh = qkv[r0:r0 + seq, h * hd:(h + 1) * hd].astype(jnp.bfloat16)          # scale already folded
            kh = qkv[r0:r0 + seq, D + h * hd:D + (h + 1) * hd].astype(jnp.bfloat16)
            vh = qkv[r0:r0 + seq, 2 * D + h * hd:2 * D + (h + 1) * hd]               # f32
            if tproj is not None:
                vh = vh + tproj[r0:r0 + seq, :]
            vh = vh.astype(jnp.bfloat16)

            # scores = q @ k^T (contract last dims; no explicit transpose materialized)
            s = lax.dot_general(qh, kh, (((1,), (1,)), ((), ())),
                                preferred_element_type=jnp.float32)          # (N, N) f32
            s = s - jnp.max(s, axis=-1, keepdims=True)
            e = jnp.exp(s)
            p = e * pl.reciprocal(jnp.sum(e, axis=-1, keepdims=True), approx=True)

            oh = jnp.dot(p.astype(jnp.bfloat16), vh,
                         preferred_element_type=jnp.float32)                 # (N, hd) f32
            # lane-aligned store into the concat scratch (no concatenate op)
            cat_ref[r0:r0 + seq, h * hd:(h + 1) * hd] = oh.astype(jnp.bfloat16)

    # Single output projection over the whole batch: (B*N, D) x (D, D), K = D = 256.
    y = jnp.dot(cat_ref[...], wp_ref[...], preferred_element_type=jnp.float32) + bp_ref[...]
    # attn_drop / proj_drop are identity at the module's default rate 0.0
    o_ref[...] = y.reshape(batch, seq, D)


def attention_kernel(x_ref, wqkv_ref, wp_ref, bp_ref, o_ref, cat_ref,
                     *, batch, seq, num_heads):
    _attn_compute(x_ref, wqkv_ref, wp_ref, bp_ref, None, None, None,
                  o_ref, cat_ref, batch=batch, seq=seq, num_heads=num_heads)


def attention_text_kernel(x_ref, wqkv_ref, wp_ref, bp_ref, tf_ref, wt_ref, bt_ref,
                          o_ref, cat_ref, *, batch, seq, num_heads):
    _attn_compute(x_ref, wqkv_ref, wp_ref, bp_ref, tf_ref, wt_ref, bt_ref,
                  o_ref, cat_ref, batch=batch, seq=seq, num_heads=num_heads)


# --------------------------------------------------------------------------- weight prep
def prepare_attention_weights(wqkv, wp, bp, *, num_heads, scale=None, wt=None, bt=None):
    """One-time weight preparation (do NOT call per forward pass):
       - cast weights to bf16 (halves weight DMA bytes)
       - fold the softmax scale into the q columns of Wqkv (removes in-kernel mul)."""
    D = wqkv.shape[0]
    hd = D // num_heads
    if scale is None:
        scale = hd ** -0.5
    col_scale = jnp.concatenate([jnp.full((D,), scale, wqkv.dtype),
                                 jnp.ones((2 * D,), wqkv.dtype)])
    wqkv_b = (wqkv * col_scale[None, :]).astype(jnp.bfloat16)                # (D, 3D)
    wp_b = wp.astype(jnp.bfloat16)                                           # (D, D)
    bp_f = bp.reshape(1, D).astype(jnp.float32)                              # (1, D)
    if wt is None:
        return wqkv_b, wp_b, bp_f, None, None
    wt_b = wt.astype(jnp.bfloat16)                                           # (F, hd)
    bt_f = bt.reshape(1, hd).astype(jnp.float32)                             # (1, hd)
    return wqkv_b, wp_b, bp_f, wt_b, bt_f


# --------------------------------------------------------------------------- wrapper
def attention_forward(x, wqkv_b, wp_b, bp, *, num_heads,
                      text_features=None, wt_b=None, bt=None):
    """x: (B,N,D) f32; wqkv_b/wp_b/bp (+ optional wt_b/bt) from prepare_attention_weights."""
    B, N, D = x.shape
    assert D % num_heads == 0

    def _full_spec(a):
        nd = a.ndim
        return pl.BlockSpec(a.shape, lambda i, _nd=nd: (0,) * _nd)

    if text_features is None:
        kernel = functools.partial(attention_kernel, batch=B, seq=N, num_heads=num_heads)
        args = (x, wqkv_b, wp_b, bp)
    else:
        kernel = functools.partial(attention_text_kernel, batch=B, seq=N, num_heads=num_heads)
        args = (x, wqkv_b, wp_b, bp, text_features, wt_b, bt)

    in_specs = [_full_spec(a) for a in args]
    out_spec = pl.BlockSpec((B, N, D), lambda i: (0, 0, 0))

    # TODO(synk): on v7x (2 TensorCores) a grid=(B,) "parallel" split of the batch would
    # use both cores; here we fold the batch into one invocation (best for v5e/v6e).
    return pl.pallas_call(
        kernel,
        grid=(1,),
        in_specs=in_specs,
        out_specs=out_spec,
        out_shape=jax.ShapeDtypeStruct((B, N, D), jnp.float32),
        scratch_shapes=[pltpu.VMEM((B * N, D), jnp.bfloat16)],
        compiler_params=pltpu.CompilerParams(dimension_semantics=("arbitrary",)),
    )(*args)


# --------------------------------------------------------------------------- pure-JAX reference
def attention_reference(x, wqkv, wp, bp, *, num_heads, scale=None,
                        text_features=None, wt=None, bt=None):
    B, N, C = x.shape
    hd = C // num_heads
    if scale is None:
        scale = hd ** -0.5
    qkv = (x @ wqkv).reshape(B, N, 3, num_heads, hd).transpose(2, 0, 3, 1, 4)
    q, k, v = qkv[0], qkv[1], qkv[2]
    attn = jnp.einsum("bhqd,bhkd->bhqk", q, k) * scale
    attn = jax.nn.softmax(attn, axis=-1)
    if text_features is not None:
        tproj = text_features @ wt + bt              # (B, N, hd)
        v = v + tproj[:, None, :, :]                 # broadcast over heads
    out = jnp.einsum("bhqk,bhkd->bhqd", attn, v)
    out = out.transpose(0, 2, 1, 3).reshape(B, N, C)
    return out @ wp + bp


# --------------------------------------------------------------------------- main
if __name__ == "__main__":
    B, N, D = 2, 128, 256
    num_heads = 2                      # head_dim = 128 -> lane-tile aligned per-head slices
    head_dim = D // num_heads
    text_dim = 512                     # Attention.text_proj = nn.Linear(512, head_dim)

    key = jax.random.PRNGKey(0)
    kx, kqkv, kp, kbp, ktf, kwt, kbt = jax.random.split(key, 7)
    x = jax.random.normal(kx, (B, N, D), jnp.float32)
    wqkv = jax.random.normal(kqkv, (D, 3 * D), jnp.float32) * (D ** -0.5)
    wp = jax.random.normal(kp, (D, D), jnp.float32) * (D ** -0.5)
    bp = jax.random.normal(kbp, (1, D), jnp.float32) * 0.02
    text_features = jax.random.normal(ktf, (B, N, text_dim), jnp.float32)
    wt = jax.random.normal(kwt, (text_dim, head_dim), jnp.float32) * (text_dim ** -0.5)
    bt = jax.random.normal(kbt, (1, head_dim), jnp.float32) * 0.02

    # one-time weight preparation (bf16 cast + scale folding), outside the per-call path
    wqkv_b, wp_b, bp_f, wt_b, bt_f = prepare_attention_weights(
        wqkv, wp, bp, num_heads=num_heads, wt=wt, bt=bt)
    wqkv_b, wp_b, bp_f, wt_b, bt_f = jax.block_until_ready(
        (wqkv_b, wp_b, bp_f, wt_b, bt_f))

    # --- default path (text_features=None), matches Attention.forward(x) ---
    fwd = jax.jit(functools.partial(attention_forward, num_heads=num_heads))
    out = jax.block_until_ready(fwd(x, wqkv_b, wp_b, bp_f))
    ref = attention_reference(x, wqkv, wp, bp, num_heads=num_heads)
    assert out.shape == (B, N, D), out.shape
    err = float(jnp.max(jnp.abs(out - ref)))
    assert jnp.allclose(out, ref, atol=3e-2, rtol=3e-2), err

    # --- text_features path, matches Attention.forward(x, text_features) ---
    out_t = jax.block_until_ready(
        fwd(x, wqkv_b, wp_b, bp_f, text_features=text_features, wt_b=wt_b, bt=bt_f))
    ref_t = attention_reference(x, wqkv, wp, bp, num_heads=num_heads,
                                text_features=text_features, wt=wt, bt=bt)
    err_t = float(jnp.max(jnp.abs(out_t - ref_t)))
    assert jnp.allclose(out_t, ref_t, atol=3e-2, rtol=3e-2), err_t

    # TODO(synk): attn_drop / proj_drop with rate > 0 (training-mode dropout) not implemented;
    # at the module defaults (0.0) they are identities, which is what this kernel computes.
    print("KERNEL_OK")
</pallas_src>

<mosaic_0001>
module attributes {stable_mosaic.version = 11 : i64} {
  func.func @attention_kernel(%arg0: i32, %arg1: memref<2x128x256xf32, #tpu.memory_space<vmem>>, %arg2: memref<256x768xbf16, #tpu.memory_space<vmem>>, %arg3: memref<256x256xbf16, #tpu.memory_space<vmem>>, %arg4: memref<1x256xf32, #tpu.memory_space<vmem>>, %arg5: memref<2x128x256xf32, #tpu.memory_space<vmem>>, %arg6: memref<256x256xbf16, #tpu.memory_space<vmem>>) attributes {dimension_semantics = [#tpu.dimension_semantics<arbitrary>], iteration_bounds = array<i64: 1>, scalar_prefetch = 0 : i64, scratch_operands = 1 : i64, tpu.core_type = #tpu.core_type<tc>, window_params = [{pipeline_mode = #tpu.pipeline_mode<synchronous>, transform_indices = @transform_0, window_bounds = array<i64: 2, 128, 256>}, {pipeline_mode = #tpu.pipeline_mode<synchronous>, transform_indices = @transform_1, window_bounds = array<i64: 256, 768>}, {pipeline_mode = #tpu.pipeline_mode<synchronous>, transform_indices = @transform_2, window_bounds = array<i64: 256, 256>}, {pipeline_mode = #tpu.pipeline_mode<synchronous>, transform_indices = @transform_3, window_bounds = array<i64: 1, 256>}, {pipeline_mode = #tpu.pipeline_mode<synchronous>, transform_indices = @transform_4, window_bounds = array<i64: 2, 128, 256>}]} {
    %c0 = arith.constant 0 : index
    %c0_0 = arith.constant 0 : index
    %c0_1 = arith.constant 0 : index
    %0 = vector.load %arg1[%c0, %c0_0, %c0_1] : memref<2x128x256xf32, #tpu.memory_space<vmem>>, vector<2x128x256xf32>
    %1 = vector.shape_cast %0 : vector<2x128x256xf32> to vector<256x256xf32>
    %2 = arith.truncf %1 : vector<256x256xf32> to vector<256x256xbf16>
    %c0_2 = arith.constant 0 : index
    %c0_3 = arith.constant 0 : index
    %3 = vector.load %arg2[%c0_2, %c0_3] : memref<256x768xbf16, #tpu.memory_space<vmem>>, vector<256x768xbf16>
    %cst = arith.constant dense<0.000000e+00> : vector<256x768xf32>
    %4 = tpu.matmul %2, %3, %cst {dimension_numbers = #tpu.dot_dimension_numbers<[1], [0], [0], [1], [0, 0, 1, 1], [], []>} : vector<256x256xbf16>, vector<256x768xbf16>, vector<256x768xf32> -> vector<256x768xf32>
    %5 = vector.extract_strided_slice %4 {offsets = [0, 0], sizes = [128, 128], strides = [1, 1]} : vector<256x768xf32> to vector<128x128xf32>
    %6 = arith.truncf %5 : vector<128x128xf32> to vector<128x128xbf16>
    %7 = vector.extract_strided_slice %4 {offsets = [0, 256], sizes = [128, 128], strides = [1, 1]} : vector<256x768xf32> to vector<128x128xf32>
    %8 = arith.truncf %7 : vector<128x128xf32> to vector<128x128xbf16>
    %9 = vector.extract_strided_slice %4 {offsets = [0, 512], sizes = [128, 128], strides = [1, 1]} : vector<256x768xf32> to vector<128x128xf32>
    %10 = arith.truncf %9 : vector<128x128xf32> to vector<128x128xbf16>
    %cst_4 = arith.constant dense<0.000000e+00> : vector<128x128xf32>
    %11 = tpu.matmul %6, %8, %cst_4 {dimension_numbers = #tpu.dot_dimension_numbers<[1], [1], [0], [0], [0, 0, 1, 0], [], []>} : vector<128x128xbf16>, vector<128x128xbf16>, vector<128x128xf32> -> vector<128x128xf32>
    %cst_5 = arith.constant dense<0xFF800000> : vector<128xf32>
    %12 = vector.multi_reduction <maximumf>, %11, %cst_5 [1] : vector<128x128xf32> to vector<128xf32>
    %13 = vector.shape_cast %12 : vector<128xf32> to vector<128x1xf32>
    %14 = vector.broadcast %13 : vector<128x1xf32> to vector<128x128xf32>
    %15 = arith.subf %11, %14 : vector<128x128xf32>
    %16 = math.exp %15 : vector<128x128xf32>
    %cst_6 = arith.constant dense<0.000000e+00> : vector<128xf32>
    %17 = vector.multi_reduction <add>, %16, %cst_6 [1] : vector<128x128xf32> to vector<128xf32>
    %18 = vector.shape_cast %17 : vector<128xf32> to vector<128x1xf32>
    %19 = tpu.reciprocal %18 {approx = true} : vector<128x1xf32> -> vector<128x1xf32>
    %20 = vector.broadcast %19 : vector<128x1xf32> to vector<128x128xf32>
    %21 = arith.mulf %16, %20 : vector<128x128xf32>
    %22 = arith.truncf %21 : vector<128x128xf32> to vector<128x128xbf16>
    %cst_7 = arith.constant dense<0.000000e+00> : vector<128x128xf32>
    %23 = tpu.matmul %22, %10, %cst_7 {dimension_numbers = #tpu.dot_dimension_numbers<[1], [0], [0], [1], [0, 0, 1, 1], [], []>} : vector<128x128xbf16>, vector<128x128xbf16>, vector<128x128xf32> -> vector<128x128xf32>
    %24 = arith.truncf %23 : vector<128x128xf32> to vector<128x128xbf16>
    %c0_8 = arith.constant 0 : index
    %c0_9 = arith.constant 0 : index
    %25 = vector.load %arg6[%c0_8, %c0_9] : memref<256x256xbf16, #tpu.memory_space<vmem>>, vector<128x128xbf16>
    tpu.vector_store %arg6[%c0_8, %c0_9], %24 {strides = array<i32>} : memref<256x256xbf16, #tpu.memory_space<vmem>>, vector<128x128xbf16>,
    %26 = vector.extract_strided_slice %4 {offsets = [0, 128], sizes = [128, 128], strides = [1, 1]} : vector<256x768xf32> to vector<128x128xf32>
    %27 = arith.truncf %26 : vector<128x128xf32> to vector<128x128xbf16>
    %28 = vector.extract_strided_slice %4 {offsets = [0, 384], sizes = [128, 128], strides = [1, 1]} : vector<256x768xf32> to vector<128x128xf32>
    %29 = arith.truncf %28 : vector<128x128xf32> to vector<128x128xbf16>
    %30 = vector.extract_strided_slice %4 {offsets = [0, 640], sizes = [128, 128], strides = [1, 1]} : vector<256x768xf32> to vector<128x128xf32>
    %31 = arith.truncf %30 : vector<128x128xf32> to vector<128x128xbf16>
    %cst_10 = arith.constant dense<0.000000e+00> : vector<128x128xf32>
    %32 = tpu.matmul %27, %29, %cst_10 {dimension_numbers = #tpu.dot_dimension_numbers<[1], [1], [0], [0], [0, 0, 1, 0], [], []>} : vector<128x128xbf16>, vector<128x128xbf16>, vector<128x128xf32> -> vector<128x128xf32>
    %cst_11 = arith.constant dense<0xFF800000> : vector<128xf32>
    %33 = vector.multi_reduction <maximumf>, %32, %cst_11 [1] : vector<128x128xf32> to vector<128xf32>
    %34 = vector.shape_cast %33 : vector<128xf32> to vector<128x1xf32>
    %35 = vector.broadcast %34 : vector<128x1xf32> to vector<128x128xf32>
    %36 = arith.subf %32, %35 : vector<128x128xf32>
    %37 = math.exp %36 : vector<128x128xf32>
    %cst_12 = arith.constant dense<0.000000e+00> : vector<128xf32>
    %38 = vector.multi_reduction <add>, %37, %cst_12 [1] : vector<128x128xf32> to vector<128xf32>
    %39 = vector.shape_cast %38 : vector<128xf32> to vector<128x1xf32>
    %40 = tpu.reciprocal %39 {approx = true} : vector<128x1xf32> -> vector<128x1xf32>
    %41 = vector.broadcast %40 : vector<128x1xf32> to vector<128x128xf32>
    %42 = arith.mulf %37, %41 : vector<128x128xf32>
    %43 = arith.truncf %42 : vector<128x128xf32> to vector<128x128xbf16>
    %cst_13 = arith.constant dense<0.000000e+00> : vector<128x128xf32>
    %44 = tpu.matmul %43, %31, %cst_13 {dimension_numbers = #tpu.dot_dimension_numbers<[1], [0], [0], [1], [0, 0, 1, 1], [], []>} : vector<128x128xbf16>, vector<128x128xbf16>, vector<128x128xf32> -> vector<128x128xf32>
    %45 = arith.truncf %44 : vector<128x128xf32> to vector<128x128xbf16>
    %c0_14 = arith.constant 0 : index
    %c128 = arith.constant 128 : index
    %46 = vector.load %arg6[%c0_14, %c128] : memref<256x256xbf16, #tpu.memory_space<vmem>>, vector<128x128xbf16>
    tpu.vector_store %arg6[%c0_14, %c128], %45 {strides = array<i32>} : memref<256x256xbf16, #tpu.memory_space<vmem>>, vector<128x128xbf16>,
    %47 = vector.extract_strided_slice %4 {offsets = [128, 0], sizes = [128, 128], strides = [1, 1]} : vector<256x768xf32> to vector<128x128xf32>
    %48 = arith.truncf %47 : vector<128x128xf32> to vector<128x128xbf16>
    %49 = vector.extract_strided_slice %4 {offsets = [128, 256], sizes = [128, 128], strides = [1, 1]} : vector<256x768xf32> to vector<128x128xf32>
    %50 = arith.truncf %49 : vector<128x128xf32> to vector<128x128xbf16>
    %51 = vector.extract_strided_slice %4 {offsets = [128, 512], sizes = [128, 128], strides = [1, 1]} : vector<256x768xf32> to vector<128x128xf32>
    %52 = arith.truncf %51 : vector<128x128xf32> to vector<128x128xbf16>
    %cst_15 = arith.constant dense<0.000000e+00> : vector<128x128xf32>
    %53 = tpu.matmul %48, %50, %cst_15 {dimension_numbers = #tpu.dot_dimension_numbers<[1], [1], [0], [0], [0, 0, 1, 0], [], []>} : vector<128x128xbf16>, vector<128x128xbf16>, vector<128x128xf32> -> vector<128x128xf32>
    %cst_16 = arith.constant dense<0xFF800000> : vector<128xf32>
    %54 = vector.multi_reduction <maximumf>, %53, %cst_16 [1] : vector<128x128xf32> to vector<128xf32>
    %55 = vector.shape_cast %54 : vector<128xf32> to vector<128x1xf32>
    %56 = vector.broadcast %55 : vector<128x1xf32> to vector<128x128xf32>
    %57 = arith.subf %53, %56 : vector<128x128xf32>
    %58 = math.exp %57 : vector<128x128xf32>
    %cst_17 = arith.constant dense<0.000000e+00> : vector<128xf32>
    %59 = vector.multi_reduction <add>, %58, %cst_17 [1] : vector<128x128xf32> to vector<128xf32>
    %60 = vector.shape_cast %59 : vector<128xf32> to vector<128x1xf32>
    %61 = tpu.reciprocal %60 {approx = true} : vector<128x1xf32> -> vector<128x1xf32>
    %62 = vector.broadcast %61 : vector<128x1xf32> to vector<128x128xf32>
    %63 = arith.mulf %58, %62 : vector<128x128xf32>
    %64 = arith.truncf %63 : vector<128x128xf32> to vector<128x128xbf16>
    %cst_18 = arith.constant dense<0.000000e+00> : vector<128x128xf32>
    %65 = tpu.matmul %64, %52, %cst_18 {dimension_numbers = #tpu.dot_dimension_numbers<[1], [0], [0], [1], [0, 0, 1, 1], [], []>} : vector<128x128xbf16>, vector<128x128xbf16>, vector<128x128xf32> -> vector<128x128xf32>
    %66 = arith.truncf %65 : vector<128x128xf32> to vector<128x128xbf16>
    %c128_19 = arith.constant 128 : index
    %c0_20 = arith.constant 0 : index
    %67 = vector.load %arg6[%c128_19, %c0_20] : memref<256x256xbf16, #tpu.memory_space<vmem>>, vector<128x128xbf16>
    tpu.vector_store %arg6[%c128_19, %c0_20], %66 {strides = array<i32>} : memref<256x256xbf16, #tpu.memory_space<vmem>>, vector<128x128xbf16>,
    %68 = vector.extract_strided_slice %4 {offsets = [128, 128], sizes = [128, 128], strides = [1, 1]} : vector<256x768xf32> to vector<128x128xf32>
    %69 = arith.truncf %68 : vector<128x128xf32> to vector<128x128xbf16>
    %70 = vector.extract_strided_slice %4 {offsets = [128, 384], sizes = [128, 128], strides = [1, 1]} : vector<256x768xf32> to vector<128x128xf32>
    %71 = arith.truncf %70 : vector<128x128xf32> to vector<128x128xbf16>
    %72 = vector.extract_strided_slice %4 {offsets = [128, 640], sizes = [128, 128], strides = [1, 1]} : vector<256x768xf32> to vector<128x128xf32>
    %73 = arith.truncf %72 : vector<128x128xf32> to vector<128x128xbf16>
    %cst_21 = arith.constant dense<0.000000e+00> : vector<128x128xf32>
    %74 = tpu.matmul %69, %71, %cst_21 {dimension_numbers = #tpu.dot_dimension_numbers<[1], [1], [0], [0], [0, 0, 1, 0], [], []>} : vector<128x128xbf16>, vector<128x128xbf16>, vector<128x128xf32> -> vector<128x128xf32>
    %cst_22 = arith.constant dense<0xFF800000> : vector<128xf32>
    %75 = vector.multi_reduction <maximumf>, %74, %cst_22 [1] : vector<128x128xf32> to vector<128xf32>
    %76 = vector.shape_cast %75 : vector<128xf32> to vector<128x1xf32>
    %77 = vector.broadcast %76 : vector<128x1xf32> to vector<128x128xf32>
    %78 = arith.subf %74, %77 : vector<128x128xf32>
    %79 = math.exp %78 : vector<128x128xf32>
    %cst_23 = arith.constant dense<0.000000e+00> : vector<128xf32>
    %80 = vector.multi_reduction <add>, %79, %cst_23 [1] : vector<128x128xf32> to vector<128xf32>
    %81 = vector.shape_cast %80 : vector<128xf32> to vector<128x1xf32>
    %82 = tpu.reciprocal %81 {approx = true} : vector<128x1xf32> -> vector<128x1xf32>
    %83 = vector.broadcast %82 : vector<128x1xf32> to vector<128x128xf32>
    %84 = arith.mulf %79, %83 : vector<128x128xf32>
    %85 = arith.truncf %84 : vector<128x128xf32> to vector<128x128xbf16>
    %cst_24 = arith.constant dense<0.000000e+00> : vector<128x128xf32>
    %86 = tpu.matmul %85, %73, %cst_24 {dimension_numbers = #tpu.dot_dimension_numbers<[1], [0], [0], [1], [0, 0, 1, 1], [], []>} : vector<128x128xbf16>, vector<128x128xbf16>, vector<128x128xf32> -> vector<128x128xf32>
    %87 = arith.truncf %86 : vector<128x128xf32> to vector<128x128xbf16>
    %c128_25 = arith.constant 128 : index
    %c128_26 = arith.constant 128 : index
    %88 = vector.load %arg6[%c128_25, %c128_26] : memref<256x256xbf16, #tpu.memory_space<vmem>>, vector<128x128xbf16>
    tpu.vector_store %arg6[%c128_25, %c128_26], %87 {strides = array<i32>} : memref<256x256xbf16, #tpu.memory_space<vmem>>, vector<128x128xbf16>,
    %c0_27 = arith.constant 0 : index
    %c0_28 = arith.constant 0 : index
    %89 = vector.load %arg6[%c0_27, %c0_28] : memref<256x256xbf16, #tpu.memory_space<vmem>>, vector<256x256xbf16>
    %c0_29 = arith.constant 0 : index
    %c0_30 = arith.constant 0 : index
    %90 = vector.load %arg3[%c0_29, %c0_30] : memref<256x256xbf16, #tpu.memory_space<vmem>>, vector<256x256xbf16>
    %cst_31 = arith.constant dense<0.000000e+00> : vector<256x256xf32>
    %91 = tpu.matmul %89, %90, %cst_31 {dimension_numbers = #tpu.dot_dimension_numbers<[1], [0], [0], [1], [0, 0, 1, 1], [], []>} : vector<256x256xbf16>, vector<256x256xbf16>, vector<256x256xf32> -> vector<256x256xf32>
    %c0_32 = arith.constant 0 : index
    %c0_33 = arith.constant 0 : index
    %92 = vector.load %arg4[%c0_32, %c0_33] : memref<1x256xf32, #tpu.memory_space<vmem>>, vector<1x256xf32>
    %93 = vector.broadcast %92 : vector<1x256xf32> to vector<256x256xf32>
    %94 = arith.addf %91, %93 : vector<256x256xf32>
    %95 = vector.shape_cast %94 : vector<256x256xf32> to vector<2x128x256xf32>
    %c0_34 = arith.constant 0 : index
    %c0_35 = arith.constant 0 : index
    %c0_36 = arith.constant 0 : index
    %96 = vector.load %arg5[%c0_34, %c0_35, %c0_36] : memref<2x128x256xf32, #tpu.memory_space<vmem>>, vector<2x128x256xf32>
    tpu.vector_store %arg5[%c0_34, %c0_35, %c0_36], %95 {strides = array<i32>} : memref<2x128x256xf32, #tpu.memory_space<vmem>>, vector<2x128x256xf32>,
    return
  }
  func.func @transform_0(%arg0: i32) -> (i32, i32, i32) {
    %c0_i32 = arith.constant 0 : i32
    %c0_i32_0 = arith.constant 0 : i32
    %c0_i32_1 = arith.constant 0 : i32
    %c0_i32_2 = arith.constant 0 : i32
    return %c0_i32, %c0_i32_0, %c0_i32_1 : i32, i32, i32
  }
  func.func @transform_1(%arg0: i32) -> (i32, i32) {
    %c0_i32 = arith.constant 0 : i32
    %c0_i32_0 = arith.constant 0 : i32
    %c0_i32_1 = arith.constant 0 : i32
    return %c0_i32, %c0_i32_0 : i32, i32
  }
  func.func @transform_2(%arg0: i32) -> (i32, i32) {
    %c0_i32 = arith.constant 0 : i32
    %c0_i32_0 = arith.constant 0 : i32
    %c0_i32_1 = arith.constant 0 : i32
    return %c0_i32, %c0_i32_0 : i32, i32
  }
  func.func @transform_3(%arg0: i32) -> (i32, i32) {
    %c0_i32 = arith.constant 0 : i32
    %c0_i32_0 = arith.constant 0 : i32
    %c0_i32_1 = arith.constant 0 : i32
    return %c0_i32, %c0_i32_0 : i32, i32
  }
  func.func @transform_4(%arg0: i32) -> (i32, i32, i32) {
    %c0_i32 = arith.constant 0 : i32
    %c0_i32_0 = arith.constant 0 : i32
    %c0_i32_1 = arith.constant 0 : i32
    %c0_i32_2 = arith.constant 0 : i32
    return %c0_i32, %c0_i32_0, %c0_i32_1 : i32, i32, i32
  }
}

</mosaic_0001>

<llo_original>
// kernel: attention_forward.1
$region0: #{attention_forward.1}
  #allocation0 [shape = 'u32[]', space=smem, size = 0x4, offset = 0x4, fixed_abs, tag = 'smem constant byte address 0x4 - core index']
  #allocation1 [shape = 'u32[144,128]{1,0:T(1,128)}', space=vmem, size = 0x12000, scoped, tag = 'internal scratch']
  #allocation2 [shape = 'bf16[256,256]{1,0:T(8,128)(2,1)}', space=vmem, size = 0x20000, scoped, tag = 'scratch operand']
  %s0 = inlined_call_operand.hbm [shape: f32[2,128,256], index: 0, kind: input, shape index: {}]
  %s1 = inlined_call_operand.hbm [shape: bf16[256,768], index: 1, kind: input, shape index: {}]
  %s2 = inlined_call_operand.hbm [shape: bf16[256,256], index: 2, kind: input, shape index: {}]
  %s3 = inlined_call_operand.vmem [shape: f32[1,256], index: 3, kind: input, shape index: {}]
  %s4 = inlined_call_operand.hbm [shape: f32[2,128,256], index: 4, kind: output, shape index: {}]
  %s5 = sld [smem:[#allocation0]]
  $region38: #{attention_forward.1} parent=0
    _
  %s7 = ssub.s32 1, %s5
  %s8 = scalar_select 0, %s7, %s5
  $region1: #{attention_forward.1} parent=0
    #allocation3 [shape = 'u8[262144]{0}', space=vmem, size = 0x40000, scoped, tag = 'input window, operand 0, single buffered']
    #allocation4 [shape = 's32[1]{0}', space=sflag, size = 0x4, scoped, tag = 'scoped memory for attention_forward.1']
    #allocation5 [shape = 's32[1]{0}', space=sflag, size = 0x4, scoped, tag = 'scoped memory for attention_forward.1']
    #allocation6 [shape = 'u8[393216]{0}', space=vmem, size = 0x60000, scoped, tag = 'input window, operand 1, single buffered']
    #allocation7 [shape = 's32[1]{0}', space=sflag, size = 0x4, scoped, tag = 'scoped memory for attention_forward.1']
    #allocation8 [shape = 'u8[131072]{0}', space=vmem, size = 0x20000, scoped, tag = 'input window, operand 2, single buffered']
    #allocation9 [shape = 'u8[262144]{0}', space=vmem, size = 0x40000, scoped, tag = 'output window, operand 0, single buffered']
    %9 = vsyncpa [#allocation4], 0
    %10 = vsyncpa [#allocation7], 0
    %11 = vsyncpa [#allocation5], 0
    // Predicated region
    $region2: #{attention_forward.1} parent=1 // pred_check
      _
    $region3: #{attention_forward.1} parent=1 // pred_check_branch
      %13 = sbr.rel (0) target = $region5
    $region4: #{attention_forward.1} parent=1 // pred_region
      %s15 = ssub.s32 8192, 8192
      %16 = vsyncadd [#allocation4], %s15
      %s17 = sshll.u32 [#allocation3], 4
      %s18 = int_to_ptr.vmem [resolvable:$true] %s17
      %23 = dma.hbm_to_vmem [thread:$0]  %s0, 8192, %s18, [#allocation4], 256, 256, 16
    $region5: #{attention_forward.1} parent=1 // pred_fallthru
      _
    // Predicated region
    $region6: #{attention_forward.1} parent=1 // pred_check
      _
    $region7: #{attention_forward.1} parent=1 // pred_check_branch
      %25 = sbr.rel (0) target = $region9
    $region8: #{attention_forward.1} parent=1 // pred_region
      %s27 = ssub.s32 12288, 12288
      %28 = vsyncadd [#allocation7], %s27
      %s29 = sshll.u32 [#allocation6], 4
      %s30 = int_to_ptr.vmem [resolvable:$true] %s29
      %35 = dma.hbm_to_vmem [thread:$0]  %s1, 12288, %s30, [#allocation7], 384, 384, 24
    $region9: #{attention_forward.1} parent=1 // pred_fallthru
      _
    // Predicated region
    $region10: #{attention_forward.1} parent=1 // pred_check
      _
    $region11: #{attention_forward.1} parent=1 // pred_check_branch
      %37 = sbr.rel (0) target = $region13
    $region12: #{attention_forward.1} parent=1 // pred_region
      %s39 = ssub.s32 4096, 4096
      %40 = vsyncadd [#allocation7], %s39
      %s41 = sshll.u32 [#allocation8], 4
      %s42 = int_to_ptr.vmem [resolvable:$true] %s41
      %47 = dma.hbm_to_vmem [thread:$0]  %s2, 4096, %s42, [#allocation7], 128, 128, 8
    $region13: #{attention_forward.1} parent=1 // pred_fallthru
      _
    // Predicated region
    $region14: #{attention_forward.1} parent=1 // pred_check
      _
    $region15: #{attention_forward.1} parent=1 // pred_check_branch
      %49 = sbr.rel (0) target = $region17
    $region16: #{attention_forward.1} parent=1 // pred_region
      _
    $region17: #{attention_forward.1} parent=1 // pred_fallthru
      _
    // Predicated region
    $region18: #{attention_forward.1} parent=1 // pred_check
      _
    $region19: #{attention_forward.1} parent=1 // pred_check_branch
      %51 = sbr.rel (0) target = $region21
    $region20: #{attention_forward.1} parent=1 // pred_region
      %52 = dma.done [#allocation4], 8192
    $region21: #{attention_forward.1} parent=1 // pred_fallthru
      _
    // Predicated region
    $region22: #{attention_forward.1} parent=1 // pred_check
      _
    $region23: #{attention_forward.1} parent=1 // pred_check_branch
      %54 = sbr.rel (0) target = $region25
    $region24: #{attention_forward.1} parent=1 // pred_region
      %55 = dma.done [#allocation7], 12288
    $region25: #{attention_forward.1} parent=1 // pred_fallthru
      _
    // Predicated region
    $region26: #{attention_forward.1} parent=1 // pred_check
      _
    $region27: #{attention_forward.1} parent=1 // pred_check_branch
      %57 = sbr.rel (0) target = $region29
    $region28: #{attention_forward.1} parent=1 // pred_region
      %58 = dma.done [#allocation7], 4096
    $region29: #{attention_forward.1} parent=1 // pred_fallthru
      _
    %v60 = vld [vmem:[#allocation3] sm:$0xff]
    %v61 = vld [vmem:[#allocation3 + $0x8] sm:$0xff]
    %v62 = vld [vmem:[#allocation3 + $0x10] sm:$0xff]
    %v63 = vld [vmem:[#allocation3 + $0x18] sm:$0xff]
    %v64 = vld [vmem:[#allocation3 + $0x20] sm:$0xff]
    %v65 = vld [vmem:[#allocation3 + $0x28] sm:$0xff]
    %v66 = vld [vmem:[#allocation3 + $0x30] sm:$0xff]
    %v67 = vld [vmem:[#allocation3 + $0x38] sm:$0xff]
    %v68 = vld [vmem:[#allocation3 + $0x40] sm:$0xff]
    %v69 = vld [vmem:[#allocation3 + $0x48] sm:$0xff]
    %v70 = vld [vmem:[#allocation3 + $0x50] sm:$0xff]
    %v71 = vld [vmem:[#allocation3 + $0x58] sm:$0xff]
    %v72 = vld [vmem:[#allocation3 + $0x60] sm:$0xff]
    %v73 = vld [vmem:[#allocation3 + $0x68] sm:$0xff]
    %v74 = vld [vmem:[#allocation3 + $0x70] sm:$0xff]
    %v75 = vld [vmem:[#allocation3 + $0x78] sm:$0xff]
    %v76 = vld [vmem:[#allocation3 + $0x80] sm:$0xff]
    %v77 = vld [vmem:[#allocation3 + $0x88] sm:$0xff]
    %v78 = vld [vmem:[#allocation3 + $0x90] sm:$0xff]
    %v79 = vld [vmem:[#allocation3 + $0x98] sm:$0xff]
    %v80 = vld [vmem:[#allocation3 + $0xa0] sm:$0xff]
    %v81 = vld [vmem:[#allocation3 + $0xa8] sm:$0xff]
    %v82 = vld [vmem:[#allocation3 + $0xb0] sm:$0xff]
    %v83 = vld [vmem:[#allocation3 + $0xb8] sm:$0xff]
    %v84 = vld [vmem:[#allocation3 + $0xc0] sm:$0xff]
    %v85 = vld [vmem:[#allocation3 + $0xc8] sm:$0xff]
    %v86 = vld [vmem:[#allocation3 + $0xd0] sm:$0xff]
    %v87 = vld [vmem:[#allocation3 + $0xd8] sm:$0xff]
    %v88 = vld [vmem:[#allocation3 + $0xe0] sm:$0xff]
    %v89 = vld [vmem:[#allocation3 + $0xe8] sm:$0xff]
    %v90 = vld [vmem:[#allocation3 + $0xf0] sm:$0xff]
    %v91 = vld [vmem:[#allocation3 + $0xf8] sm:$0xff]
    %v92 = vld [vmem:[#allocation3 + $0x100] sm:$0xff]
    %v93 = vld [vmem:[#allocation3 + $0x108] sm:$0xff]
    %v94 = vld [vmem:[#allocation3 + $0x110] sm:$0xff]
    %v95 = vld [vmem:[#allocation3 + $0x118] sm:$0xff]
    %v96 = vld [vmem:[#allocation3 + $0x120] sm:$0xff]
    %v97 = vld [vmem:[#allocation3 + $0x128] sm:$0xff]
    %v98 = vld [vmem:[#allocation3 + $0x130] sm:$0xff]
    %v99 = vld [vmem:[#allocation3 + $0x138] sm:$0xff]
    %v100 = vld [vmem:[#allocation3 + $0x140] sm:$0xff]
    %v101 = vld [vmem:[#allocation3 + $0x148] sm:$0xff]
    %v102 = vld [vmem:[#allocation3 + $0x150] sm:$0xff]
    %v103 = vld [vmem:[#allocation3 + $0x158] sm:$0xff]
    %v104 = vld [vmem:[#allocation3 + $0x160] sm:$0xff]
    %v105 = vld [vmem:[#allocation3 + $0x168] sm:$0xff]
    %v106 = vld [vmem:[#allocation3 + $0x170] sm:$0xff]
    %v107 = vld [vmem:[#allocation3 + $0x178] sm:$0xff]
    %v108 = vld [vmem:[#allocation3 + $0x180] sm:$0xff]
    %v109 = vld [vmem:[#allocation3 + $0x188] sm:$0xff]
    %v110 = vld [vmem:[#allocation3 + $0x190] sm:$0xff]
    %v111 = vld [vmem:[#allocation3 + $0x198] sm:$0xff]
    %v112 = vld [vmem:[#allocation3 + $0x1a0] sm:$0xff]
    %v113 = vld [vmem:[#allocation3 + $0x1a8] sm:$0xff]
    %v114 = vld [vmem:[#allocation3 + $0x1b0] sm:$0xff]
    %v115 = vld [vmem:[#allocation3 + $0x1b8] sm:$0xff]
    %v116 = vld [vmem:[#allocation3 + $0x1c0] sm:$0xff]
    %v117 = vld [vmem:[#allocation3 + $0x1c8] sm:$0xff]
    %v118 = vld [vmem:[#allocation3 + $0x1d0] sm:$0xff]
    %v119 = vld [vmem:[#allocation3 + $0x1d8] sm:$0xff]
    %v120 = vld [vmem:[#allocation3 + $0x1e0] sm:$0xff]
    %v121 = vld [vmem:[#allocation3 + $0x1e8] sm:$0xff]
    %v122 = vld [vmem:[#allocation3 + $0x1f0] sm:$0xff]
    %v123 = vld [vmem:[#allocation3 + $0x1f8] sm:$0xff]
    %v124 = vpack.c.bf16 %v62, %v60
    %v125 = vpack.c.bf16 %v63, %v61
    %v126 = vpack.c.bf16 %v66, %v64
    %v127 = vpack.c.bf16 %v67, %v65
    %v128 = vpack.c.bf16 %v70, %v68
    %v129 = vpack.c.bf16 %v71, %v69
    %v130 = vpack.c.bf16 %v74, %v72
    %v131 = vpack.c.bf16 %v75, %v73
    %v132 = vpack.c.bf16 %v78, %v76
    %v133 = vpack.c.bf16 %v79, %v77
    %v134 = vpack.c.bf16 %v82, %v80
    %v135 = vpack.c.bf16 %v83, %v81
    %v136 = vpack.c.bf16 %v86, %v84
    %v137 = vpack.c.bf16 %v87, %v85
    %v138 = vpack.c.bf16 %v90, %v88
    %v139 = vpack.c.bf16 %v91, %v89
    %v140 = vpack.c.bf16 %v94, %v92
    %v141 = vpack.c.bf16 %v95, %v93
    %v142 = vpack.c.bf16 %v98, %v96
    %v143 = vpack.c.bf16 %v99, %v97
    %v144 = vpack.c.bf16 %v102, %v100
    %v145 = vpack.c.bf16 %v103, %v101
    %v146 = vpack.c.bf16 %v106, %v104
    %v147 = vpack.c.bf16 %v107, %v105
    %v148 = vpack.c.bf16 %v110, %v108
    %v149 = vpack.c.bf16 %v111, %v109
    %v150 = vpack.c.bf16 %v114, %v112
    %v151 = vpack.c.bf16 %v115, %v113
    %v152 = vpack.c.bf16 %v118, %v116
    %v153 = vpack.c.bf16 %v119, %v117
    %v154 = vpack.c.bf16 %v122, %v120
    %v155 = vpack.c.bf16 %v123, %v121
    %v156 = vld [vmem:[#allocation6] sm:$0xff]
    %v157 = vld [vmem:[#allocation6 + $0x8] sm:$0xff]
    %v158 = vld [vmem:[#allocation6 + $0x10] sm:$0xff]
    %v159 = vld [vmem:[#allocation6 + $0x18] sm:$0xff]
    %v160 = vld [vmem:[#allocation6 + $0x20] sm:$0xff]
    %v161 = vld [vmem:[#allocation6 + $0x28] sm:$0xff]
    %v162 = vld [vmem:[#allocation6 + $0x30] sm:$0xff]
    %v163 = vld [vmem:[#allocation6 + $0x38] sm:$0xff]
    %v164 = vld [vmem:[#allocation6 + $0x40] sm:$0xff]
    %v165 = vld [vmem:[#allocation6 + $0x48] sm:$0xff]
    %v166 = vld [vmem:[#allocation6 + $0x50] sm:$0xff]
    %v167 = vld [vmem:[#allocation6 + $0x58] sm:$0xff]
    %v168 = vld [vmem:[#allocation6 + $0x60] sm:$0xff]
    %v169 = vld [vmem:[#allocation6 + $0x68] sm:$0xff]
    %v170 = vld [vmem:[#allocation6 + $0x70] sm:$0xff]
    %v171 = vld [vmem:[#allocation6 + $0x78] sm:$0xff]
    %v172 = vld [vmem:[#allocation6 + $0x80] sm:$0xff]
    %v173 = vld [vmem:[#allocation6 + $0x88] sm:$0xff]
    %v174 = vld [vmem:[#allocation6 + $0x90] sm:$0xff]
    %v175 = vld [vmem:[#allocation6 + $0x98] sm:$0xff]
    %v176 = vld [vmem:[#allocation6 + $0xa0] sm:$0xff]
    %v177 = vld [vmem:[#allocation6 + $0xa8] sm:$0xff]
    %v178 = vld [vmem:[#allocation6 + $0xb0] sm:$0xff]
    %v179 = vld [vmem:[#allocation6 + $0xb8] sm:$0xff]
    %v180 = vld [vmem:[#allocation6 + $0xc0] sm:$0xff]
    %v181 = vld [vmem:[#allocation6 + $0xc8] sm:$0xff]
    %v182 = vld [vmem:[#allocation6 + $0xd0] sm:$0xff]
    %v183 = vld [vmem:[#allocation6 + $0xd8] sm:$0xff]
    %v184 = vld [vmem:[#allocation6 + $0xe0] sm:$0xff]
    %v185 = vld [vmem:[#allocation6 + $0xe8] sm:$0xff]
    %v186 = vld [vmem:[#allocation6 + $0xf0] sm:$0xff]
    %v187 = vld [vmem:[#allocation6 + $0xf8] sm:$0xff]
    %v188 = vld [vmem:[#allocation6 + $0x100] sm:$0xff]
    %v189 = vld [vmem:[#allocation6 + $0x108] sm:$0xff]
    %v190 = vld [vmem:[#allocation6 + $0x110] sm:$0xff]
    %v191 = vld [vmem:[#allocation6 + $0x118] sm:$0xff]
    %v192 = vld [vmem:[#allocation6 + $0x120] sm:$0xff]
    %v193 = vld [vmem:[#allocation6 + $0x128] sm:$0xff]
    %v194 = vld [vmem:[#allocation6 + $0x130] sm:$0xff]
    %v195 = vld [vmem:[#allocation6 + $0x138] sm:$0xff]
    %v196 = vld [vmem:[#allocation6 + $0x140] sm:$0xff]
    %v197 = vld [vmem:[#allocation6 + $0x148] sm:$0xff]
    %v198 = vld [vmem:[#allocation6 + $0x150] sm:$0xff]
    %v199 = vld [vmem:[#allocation6 + $0x158] sm:$0xff]
    %v200 = vld [vmem:[#allocation6 + $0x160] sm:$0xff]
    %v201 = vld [vmem:[#allocation6 + $0x168] sm:$0xff]
    %v202 = vld [vmem:[#allocation6 + $0x170] sm:$0xff]
    %v203 = vld [vmem:[#allocation6 + $0x178] sm:$0xff]
    %v204 = vld [vmem:[#allocation6 + $0x180] sm:$0xff]
    %v205 = vld [vmem:[#allocation6 + $0x188] sm:$0xff]
    %v206 = vld [vmem:[#allocation6 + $0x190] sm:$0xff]
    %v207 = vld [vmem:[#allocation6 + $0x198] sm:$0xff]
    %v208 = vld [vmem:[#allocation6 + $0x1a0] sm:$0xff]
    %v209 = vld [vmem:[#allocation6 + $0x1a8] sm:$0xff]
    %v210 = vld [vmem:[#allocation6 + $0x1b0] sm:$0xff]
    %v211 = vld [vmem:[#allocation6 + $0x1b8] sm:$0xff]
    %v212 = vld [vmem:[#allocation6 + $0x1c0] sm:$0xff]
    %v213 = vld [vmem:[#allocation6 + $0x1c8] sm:$0xff]
    %v214 = vld [vmem:[#allocation6 + $0x1d0] sm:$0xff]
    %v215 = vld [vmem:[#allocation6 + $0x1d8] sm:$0xff]
    %v216 = vld [vmem:[#allocation6 + $0x1e0] sm:$0xff]
    %v217 = vld [vmem:[#allocation6 + $0x1e8] sm:$0xff]
    %v218 = vld [vmem:[#allocation6 + $0x1f0] sm:$0xff]
    %v219 = vld [vmem:[#allocation6 + $0x1f8] sm:$0xff]
    %v220 = vld [vmem:[#allocation6 + $0x200] sm:$0xff]
    %v221 = vld [vmem:[#allocation6 + $0x208] sm:$0xff]
    %v222 = vld [vmem:[#allocation6 + $0x210] sm:$0xff]
    %v223 = vld [vmem:[#allocation6 + $0x218] sm:$0xff]
    %v224 = vld [vmem:[#allocation6 + $0x220] sm:$0xff]
    %v225 = vld [vmem:[#allocation6 + $0x228] sm:$0xff]
    %v226 = vld [vmem:[#allocation6 + $0x230] sm:$0xff]
    %v227 = vld [vmem:[#allocation6 + $0x238] sm:$0xff]
    %v228 = vld [vmem:[#allocation6 + $0x240] sm:$0xff]
    %v229 = vld [vmem:[#allocation6 + $0x248] sm:$0xff]
    %v230 = vld [vmem:[#allocation6 + $0x250] sm:$0xff]
    %v231 = vld [vmem:[#allocation6 + $0x258] sm:$0xff]
    %v232 = vld [vmem:[#allocation6 + $0x260] sm:$0xff]
    %v233 = vld [vmem:[#allocation6 + $0x268] sm:$0xff]
    %v234 = vld [vmem:[#allocation6 + $0x270] sm:$0xff]
    %v235 = vld [vmem:[#allocation6 + $0x278] sm:$0xff]
    %v236 = vld [vmem:[#allocation6 + $0x280] sm:$0xff]
    %v237 = vld [vmem:[#allocation6 + $0x288] sm:$0xff]
    %v238 = vld [vmem:[#allocation6 + $0x290] sm:$0xff]
    %v239 = vld [vmem:[#allocation6 + $0x298] sm:$0xff]
    %v240 = vld [vmem:[#allocation6 + $0x2a0] sm:$0xff]
    %v241 = vld [vmem:[#allocation6 + $0x2a8] sm:$0xff]
    %v242 = vld [vmem:[#allocation6 + $0x2b0] sm:$0xff]
    %v243 = vld [vmem:[#allocation6 + $0x2b8] sm:$0xff]
    %v244 = vld [vmem:[#allocation6 + $0x2c0] sm:$0xff]
    %v245 = vld [vmem:[#allocation6 + $0x2c8] sm:$0xff]
    %v246 = vld [vmem:[#allocation6 + $0x2d0] sm:$0xff]
    %v247 = vld [vmem:[#allocation6 + $0x2d8] sm:$0xff]
    %v248 = vld [vmem:[#allocation6 + $0x2e0] sm:$0xff]
    %v249 = vld [vmem:[#allocation6 + $0x2e8] sm:$0xff]
    %v250 = vld [vmem:[#allocation6 + $0x2f0] sm:$0xff]
    %v251 = vld [vmem:[#allocation6 + $0x2f8] sm:$0xff]
    %v348 = vunpack.c.l.b16 %v156
    %v349 = vunpack.c.h.b16 %v156
    %v350 = vunpack.c.l.b16 %v157
    %v351 = vunpack.c.h.b16 %v157
    %v352 = vunpack.c.l.b16 %v158
    %v353 = vunpack.c.h.b16 %v158
    %v354 = vunpack.c.l.b16 %v159
    %v355 = vunpack.c.h.b16 %v159
    %v356 = vunpack.c.l.b16 %v160
    %v357 = vunpack.c.h.b16 %v160
    %v358 = vunpack.c.l.b16 %v161
    %v359 = vunpack.c.h.b16 %v161
    %v360 = vunpack.c.l.b16 %v162
    %v361 = vunpack.c.h.b16 %v162
    %v362 = vunpack.c.l.b16 %v163
    %v363 = vunpack.c.h.b16 %v163
    %v364 = vunpack.c.l.b16 %v164
    %v365 = vunpack.c.h.b16 %v164
    %v366 = vunpack.c.l.b16 %v165
    %v367 = vunpack.c.h.b16 %v165
    %v368 = vunpack.c.l.b16 %v166
    %v369 = vunpack.c.h.b16 %v166
    %v370 = vunpack.c.l.b16 %v167
    %v371 = vunpack.c.h.b16 %v167
    %v372 = vunpack.c.l.b16 %v168
    %v373 = vunpack.c.h.b16 %v168
    %v374 = vunpack.c.l.b16 %v169
    %v375 = vunpack.c.h.b16 %v169
    %v376 = vunpack.c.l.b16 %v170
    %v377 = vunpack.c.h.b16 %v170
    %v378 = vunpack.c.l.b16 %v171
    %v379 = vunpack.c.h.b16 %v171
    %v380 = vunpack.c.l.b16 %v172
    %v381 = vunpack.c.h.b16 %v172
    %v382 = vunpack.c.l.b16 %v173
    %v383 = vunpack.c.h.b16 %v173
    %v384 = vunpack.c.l.b16 %v174
    %v385 = vunpack.c.h.b16 %v174
    %v386 = vunpack.c.l.b16 %v175
    %v387 = vunpack.c.h.b16 %v175
    %v388 = vunpack.c.l.b16 %v176
    %v389 = vunpack.c.h.b16 %v176
    %v390 = vunpack.c.l.b16 %v177
    %v391 = vunpack.c.h.b16 %v177
    %v392 = vunpack.c.l.b16 %v178
    %v393 = vunpack.c.h.b16 %v178
    %v394 = vunpack.c.l.b16 %v179
    %v395 = vunpack.c.h.b16 %v179
    %v396 = vunpack.c.l.b16 %v180
    %v397 = vunpack.c.h.b16 %v180
    %v398 = vunpack.c.l.b16 %v181
    %v399 = vunpack.c.h.b16 %v181
    %v400 = vunpack.c.l.b16 %v182
    %v401 = vunpack.c.h.b16 %v182
    %v402 = vunpack.c.l.b16 %v183
    %v403 = vunpack.c.h.b16 %v183
    %v404 = vunpack.c.l.b16 %v184
    %v405 = vunpack.c.h.b16 %v184
    %v406 = vunpack.c.l.b16 %v185
    %v407 = vunpack.c.h.b16 %v185
    %v408 = vunpack.c.l.b16 %v186
    %v409 = vunpack.c.h.b16 %v186
    %v410 = vunpack.c.l.b16 %v187
    %v411 = vunpack.c.h.b16 %v187
    %v412 = vunpack.c.l.b16 %v188
    %v413 = vunpack.c.h.b16 %v188
    %v414 = vunpack.c.l.b16 %v189
    %v415 = vunpack.c.h.b16 %v189
    %v416 = vunpack.c.l.b16 %v190
    %v417 = vunpack.c.h.b16 %v190
    %v418 = vunpack.c.l.b16 %v191
    %v419 = vunpack.c.h.b16 %v191
    %v420 = vunpack.c.l.b16 %v192
    %v421 = vunpack.c.h.b16 %v192
    %v422 = vunpack.c.l.b16 %v193
    %v423 = vunpack.c.h.b16 %v193
    %v424 = vunpack.c.l.b16 %v194
    %v425 = vunpack.c.h.b16 %v194
    %v426 = vunpack.c.l.b16 %v195
    %v427 = vunpack.c.h.b16 %v195
    %v428 = vunpack.c.l.b16 %v196
    %v429 = vunpack.c.h.b16 %v196
    %v430 = vunpack.c.l.b16 %v197
    %v431 = vunpack.c.h.b16 %v197
    %v432 = vunpack.c.l.b16 %v198
    %v433 = vunpack.c.h.b16 %v198
    %v434 = vunpack.c.l.b16 %v199
    %v435 = vunpack.c.h.b16 %v199
    %v436 = vunpack.c.l.b16 %v200
    %v437 = vunpack.c.h.b16 %v200
    %v438 = vunpack.c.l.b16 %v201
    %v439 = vunpack.c.h.b16 %v201
    %v440 = vunpack.c.l.b16 %v202
    %v441 = vunpack.c.h.b16 %v202
    %v442 = vunpack.c.l.b16 %v203
    %v443 = vunpack.c.h.b16 %v203
    %v444 = vunpack.c.l.b16 %v204
    %v445 = vunpack.c.h.b16 %v204
    %v446 = vunpack.c.l.b16 %v205
    %v447 = vunpack.c.h.b16 %v205
    %v448 = vunpack.c.l.b16 %v206
    %v449 = vunpack.c.h.b16 %v206
    %v450 = vunpack.c.l.b16 %v207
    %v451 = vunpack.c.h.b16 %v207
    %v452 = vunpack.c.l.b16 %v208
    %v453 = vunpack.c.h.b16 %v208
    %v454 = vunpack.c.l.b16 %v209
    %v455 = vunpack.c.h.b16 %v209
    %v456 = vunpack.c.l.b16 %v210
    %v457 = vunpack.c.h.b16 %v210
    %v458 = vunpack.c.l.b16 %v211
    %v459 = vunpack.c.h.b16 %v211
    %v460 = vunpack.c.l.b16 %v212
    %v461 = vunpack.c.h.b16 %v212
    %v462 = vunpack.c.l.b16 %v213
    %v463 = vunpack.c.h.b16 %v213
    %v464 = vunpack.c.l.b16 %v214
    %v465 = vunpack.c.h.b16 %v214
    %v466 = vunpack.c.l.b16 %v215
    %v467 = vunpack.c.h.b16 %v215
    %v468 = vunpack.c.l.b16 %v216
    %v469 = vunpack.c.h.b16 %v216
    %v470 = vunpack.c.l.b16 %v217
    %v471 = vunpack.c.h.b16 %v217
    %v472 = vunpack.c.l.b16 %v218
    %v473 = vunpack.c.h.b16 %v218
    %v474 = vunpack.c.l.b16 %v219
    %v475 = vunpack.c.h.b16 %v219
    %v476 = vunpack.c.l.b16 %v220
    %v477 = vunpack.c.h.b16 %v220
    %v478 = vunpack.c.l.b16 %v221
    %v479 = vunpack.c.h.b16 %v221
    %v480 = vunpack.c.l.b16 %v222
    %v481 = vunpack.c.h.b16 %v222
    %v482 = vunpack.c.l.b16 %v223
    %v483 = vunpack.c.h.b16 %v223
    %v484 = vunpack.c.l.b16 %v224
    %v485 = vunpack.c.h.b16 %v224
    %v486 = vunpack.c.l.b16 %v225
    %v487 = vunpack.c.h.b16 %v225
    %v488 = vunpack.c.l.b16 %v226
    %v489 = vunpack.c.h.b16 %v226
    %v490 = vunpack.c.l.b16 %v227
    %v491 = vunpack.c.h.b16 %v227
    %v492 = vunpack.c.l.b16 %v228
    %v493 = vunpack.c.h.b16 %v228
    %v494 = vunpack.c.l.b16 %v229
    %v495 = vunpack.c.h.b16 %v229
    %v496 = vunpack.c.l.b16 %v230
    %v497 = vunpack.c.h.b16 %v230
    %v498 = vunpack.c.l.b16 %v231
    %v499 = vunpack.c.h.b16 %v231
    %v500 = vunpack.c.l.b16 %v232
    %v501 = vunpack.c.h.b16 %v232
    %v502 = vunpack.c.l.b16 %v233
    %v503 = vunpack.c.h.b16 %v233
    %v504 = vunpack.c.l.b16 %v234
    %v505 = vunpack.c.h.b16 %v234
    %v506 = vunpack.c.l.b16 %v235
    %v507 = vunpack.c.h.b16 %v235
    %v508 = vunpack.c.l.b16 %v236
    %v509 = vunpack.c.h.b16 %v236
    %v510 = vunpack.c.l.b16 %v237
    %v511 = vunpack.c.h.b16 %v237
    %v512 = vunpack.c.l.b16 %v238
    %v513 = vunpack.c.h.b16 %v238
    %v514 = vunpack.c.l.b16 %v239
    %v515 = vunpack.c.h.b16 %v239
    %v516 = vunpack.c.l.b16 %v240
    %v517 = vunpack.c.h.b16 %v240
    %v518 = vunpack.c.l.b16 %v241
    %v519 = vunpack.c.h.b16 %v241
    %v520 = vunpack.c.l.b16 %v242
    %v521 = vunpack.c.h.b16 %v242
    %v522 = vunpack.c.l.b16 %v243
    %v523 = vunpack.c.h.b16 %v243
    %v524 = vunpack.c.l.b16 %v244
    %v525 = vunpack.c.h.b16 %v244
    %v526 = vunpack.c.l.b16 %v245
    %v527 = vunpack.c.h.b16 %v245
    %v528 = vunpack.c.l.b16 %v246
    %v529 = vunpack.c.h.b16 %v246
    %v530 = vunpack.c.l.b16 %v247
    %v531 = vunpack.c.h.b16 %v247
    %v532 = vunpack.c.l.b16 %v248
    %v533 = vunpack.c.h.b16 %v248
    %v534 = vunpack.c.l.b16 %v249
    %v535 = vunpack.c.h.b16 %v249
    %v536 = vunpack.c.l.b16 %v250
    %v537 = vunpack.c.h.b16 %v250
    %v538 = vunpack.c.l.b16 %v251
    %v539 = vunpack.c.h.b16 %v251
    %v540 = vpack.c.b16 %v354, %v348
    %v541 = vpack.c.b16 %v355, %v349
    %v542 = vpack.c.b16 %v356, %v350
    %v543 = vpack.c.b16 %v357, %v351
    %v544 = vpack.c.b16 %v358, %v352
    %v545 = vpack.c.b16 %v359, %v353
    %v546 = vpack.c.b16 %v366, %v360
    %v547 = vpack.c.b16 %v367, %v361
    %v548 = vpack.c.b16 %v368, %v362
    %v549 = vpack.c.b16 %v369, %v363
    %v550 = vpack.c.b16 %v370, %v364
    %v551 = vpack.c.b16 %v371, %v365
    %v552 = vpack.c.b16 %v378, %v372
    %v553 = vpack.c.b16 %v379, %v373
    %v554 = vpack.c.b16 %v380, %v374
    %v555 = vpack.c.b16 %v381, %v375
    %v556 = vpack.c.b16 %v382, %v376
    %v557 = vpack.c.b16 %v383, %v377
    %v558 = vpack.c.b16 %v390, %v384
    %v559 = vpack.c.b16 %v391, %v385
    %v560 = vpack.c.b16 %v392, %v386
    %v561 = vpack.c.b16 %v393, %v387
    %v562 = vpack.c.b16 %v394, %v388
    %v563 = vpack.c.b16 %v395, %v389
    %v564 = vpack.c.b16 %v402, %v396
    %v565 = vpack.c.b16 %v403, %v397
    %v566 = vpack.c.b16 %v404, %v398
    %v567 = vpack.c.b16 %v405, %v399
    %v568 = vpack.c.b16 %v406, %v400
    %v569 = vpack.c.b16 %v407, %v401
    %v570 = vpack.c.b16 %v414, %v408
    %v571 = vpack.c.b16 %v415, %v409
    %v572 = vpack.c.b16 %v416, %v410
    %v573 = vpack.c.b16 %v417, %v411
    %v574 = vpack.c.b16 %v418, %v412
    %v575 = vpack.c.b16 %v419, %v413
    %v576 = vpack.c.b16 %v426, %v420
    %v577 = vpack.c.b16 %v427, %v421
    %v578 = vpack.c.b16 %v428, %v422
    %v579 = vpack.c.b16 %v429, %v423
    %v580 = vpack.c.b16 %v430, %v424
    %v581 = vpack.c.b16 %v431, %v425
    %v582 = vpack.c.b16 %v438, %v432
    %v583 = vpack.c.b16 %v439, %v433
    %v584 = vpack.c.b16 %v440, %v434
    %v585 = vpack.c.b16 %v441, %v435
    %v586 = vpack.c.b16 %v442, %v436
    %v587 = vpack.c.b16 %v443, %v437
    %v588 = vpack.c.b16 %v450, %v444
    %v589 = vpack.c.b16 %v451, %v445
    %v590 = vpack.c.b16 %v452, %v446
    %v591 = vpack.c.b16 %v453, %v447
    %v592 = vpack.c.b16 %v454, %v448
    %v593 = vpack.c.b16 %v455, %v449
    %v594 = vpack.c.b16 %v462, %v456
    %v595 = vpack.c.b16 %v463, %v457
    %v596 = vpack.c.b16 %v464, %v458
    %v597 = vpack.c.b16 %v465, %v459
    %v598 = vpack.c.b16 %v466, %v460
    %v599 = vpack.c.b16 %v467, %v461
    %v600 = vpack.c.b16 %v474, %v468
    %v601 = vpack.c.b16 %v475, %v469
    %v602 = vpack.c.b16 %v476, %v470
    %v603 = vpack.c.b16 %v477, %v471
    %v604 = vpack.c.b16 %v478, %v472
    %v605 = vpack.c.b16 %v479, %v473
    %v606 = vpack.c.b16 %v486, %v480
    %v607 = vpack.c.b16 %v487, %v481
    %v608 = vpack.c.b16 %v488, %v482
    %v609 = vpack.c.b16 %v489, %v483
    %v610 = vpack.c.b16 %v490, %v484
    %v611 = vpack.c.b16 %v491, %v485
    %v612 = vpack.c.b16 %v498, %v492
    %v613 = vpack.c.b16 %v499, %v493
    %v614 = vpack.c.b16 %v500, %v494
    %v615 = vpack.c.b16 %v501, %v495
    %v616 = vpack.c.b16 %v502, %v496
    %v617 = vpack.c.b16 %v503, %v497
    %v618 = vpack.c.b16 %v510, %v504
    %v619 = vpack.c.b16 %v511, %v505
    %v620 = vpack.c.b16 %v512, %v506
    %v621 = vpack.c.b16 %v513, %v507
    %v622 = vpack.c.b16 %v514, %v508
    %v623 = vpack.c.b16 %v515, %v509
    %v624 = vpack.c.b16 %v522, %v516
    %v625 = vpack.c.b16 %v523, %v517
    %v626 = vpack.c.b16 %v524, %v518
    %v627 = vpack.c.b16 %v525, %v519
    %v628 = vpack.c.b16 %v526, %v520
    %v629 = vpack.c.b16 %v527, %v521
    %v630 = vpack.c.b16 %v534, %v528
    %v631 = vpack.c.b16 %v535, %v529
    %v632 = vpack.c.b16 %v536, %v530
    %v633 = vpack.c.b16 %v537, %v531
    %v634 = vpack.c.b16 %v538, %v532
    %v635 = vpack.c.b16 %v539, %v533
    %732 = vmatprep.subr.bf16.mxu0 %v583
    %733 = vmatpush1.bf16.msra.mxu0 %v582
    %734 = vmatprep.subr.bf16.mxu0 %v577
    %735 = vmatpush1.bf16.msra.mxu0 %v576
    %736 = vmatprep.subr.bf16.mxu0 %v571
    %737 = vmatpush1.bf16.msra.mxu0 %v570
    %738 = vmatprep.subr.bf16.mxu0 %v565
    %739 = vmatpush1.bf16.msra.mxu0 %v564
    %740 = vmatprep.subr.bf16.mxu0 %v559
    %741 = vmatpush1.bf16.msra.mxu0 %v558
    %742 = vmatprep.subr.bf16.mxu0 %v553
    %743 = vmatpush1.bf16.msra.mxu0 %v552
    %744 = vmatprep.subr.bf16.mxu0 %v547
    %745 = vmatpush1.bf16.msra.mxu0 %v546
    %746 = vmatprep.subr.bf16.mxu0 %v541
    %747 = vmatpush1.bf16.msra.mxu0 %v540
    %748 = vmatprep.subr.bf16.mxu0 %v631
    %749 = vmatpush2.bf16.msra.mxu0 %v630
    %750 = vmatprep.subr.bf16.mxu0 %v625
    %751 = vmatpush2.bf16.msra.mxu0 %v624
    %752 = vmatprep.subr.bf16.mxu0 %v619
    %753 = vmatpush2.bf16.msra.mxu0 %v618
    %754 = vmatprep.subr.bf16.mxu0 %v613
    %755 = vmatpush2.bf16.msra.mxu0 %v612
    %756 = vmatprep.subr.bf16.mxu0 %v607
    %757 = vmatpush2.bf16.msra.mxu0 %v606
    %758 = vmatprep.subr.bf16.mxu0 %v601
    %759 = vmatpush2.bf16.msra.mxu0 %v600
    %760 = vmatprep.subr.bf16.mxu0 %v595
    %761 = vmatpush2.bf16.msra.mxu0 %v594
    %762 = vmatprep.subr.bf16.mxu0 %v589
    %763 = vmatpush2.bf16.msra.mxu0 %v588
    %764 = vmatprep.mubr.bf16.mxu0 %v125
    %765 = vmatmul.mubr.bf16.gmra.mxu0 %v124
    %v766 = vpop.f32.mrf.mxu0
    %v767 = vadd.f32 0.0, %v766
    %v768 = vpop.f32.mrf.mxu0
    %v769 = vadd.f32 0.0, %v768
    %v770 = vpop.f32.mrf.mxu0
    %v771 = vadd.f32 0.0, %v770
    %v772 = vpop.f32.mrf.mxu0
    %v773 = vadd.f32 0.0, %v772
    %774 = vmatprep.mubr.bf16.mxu0 %v127
    %775 = vmatmul.mubr.bf16.gmra.mxu0 %v126
    %v776 = vpop.f32.mrf.mxu0
    %v777 = vadd.f32 0.0, %v776
    %v778 = vpop.f32.mrf.mxu0
    %v779 = vadd.f32 0.0, %v778
    %v780 = vpop.f32.mrf.mxu0
    %v781 = vadd.f32 0.0, %v780
    %v782 = vpop.f32.mrf.mxu0
    %v783 = vadd.f32 0.0, %v782
    %784 = vmatprep.mubr.bf16.mxu0 %v129
    %785 = vmatmul.mubr.bf16.gmra.mxu0 %v128
    %v786 = vpop.f32.mrf.mxu0
    %v787 = vadd.f32 0.0, %v786
    %v788 = vpop.f32.mrf.mxu0
    %v789 = vadd.f32 0.0, %v788
    %v790 = vpop.f32.mrf.mxu0
    %v791 = vadd.f32 0.0, %v790
    %v792 = vpop.f32.mrf.mxu0
    %v793 = vadd.f32 0.0, %v792
    %794 = vmatprep.mubr.bf16.mxu0 %v131
    %795 = vmatmul.mubr.bf16.gmra.mxu0 %v130
    %v796 = vpop.f32.mrf.mxu0
    %v797 = vadd.f32 0.0, %v796
    %v798 = vpop.f32.mrf.mxu0
    %v799 = vadd.f32 0.0, %v798
    %v800 = vpop.f32.mrf.mxu0
    %v801 = vadd.f32 0.0, %v800
    %v802 = vpop.f32.mrf.mxu0
    %v803 = vadd.f32 0.0, %v802
    %804 = vmatprep.mubr.bf16.mxu0 %v133
    %805 = vmatmul.mubr.bf16.gmra.mxu0 %v132
    %v806 = vpop.f32.mrf.mxu0
    %v807 = vadd.f32 0.0, %v806
    %v808 = vpop.f32.mrf.mxu0
    %v809 = vadd.f32 0.0, %v808
    %v810 = vpop.f32.mrf.mxu0
    %v811 = vadd.f32 0.0, %v810
    %v812 = vpop.f32.mrf.mxu0
    %v813 = vadd.f32 0.0, %v812
    %814 = vmatprep.mubr.bf16.mxu0 %v135
    %815 = vmatmul.mubr.bf16.gmra.mxu0 %v134
    %v816 = vpop.f32.mrf.mxu0
    %v817 = vadd.f32 0.0, %v816
    %v818 = vpop.f32.mrf.mxu0
    %v819 = vadd.f32 0.0, %v818
    %v820 = vpop.f32.mrf.mxu0
    %v821 = vadd.f32 0.0, %v820
    %v822 = vpop.f32.mrf.mxu0
    %v823 = vadd.f32 0.0, %v822
    %824 = vmatprep.mubr.bf16.mxu0 %v137
    %825 = vmatmul.mubr.bf16.gmra.mxu0 %v136
    %v826 = vpop.f32.mrf.mxu0
    %v827 = vadd.f32 0.0, %v826
    %v828 = vpop.f32.mrf.mxu0
    %v829 = vadd.f32 0.0, %v828
    %v830 = vpop.f32.mrf.mxu0
    %v831 = vadd.f32 0.0, %v830
    %v832 = vpop.f32.mrf.mxu0
    %v833 = vadd.f32 0.0, %v832
    %834 = vmatprep.mubr.bf16.mxu0 %v139
    %835 = vmatmul.mubr.bf16.gmra.mxu0 %v138
    %v836 = vpop.f32.mrf.mxu0
    %v837 = vadd.f32 0.0, %v836
    %v838 = vpop.f32.mrf.mxu0
    %v839 = vadd.f32 0.0, %v838
    %v840 = vpop.f32.mrf.mxu0
    %v841 = vadd.f32 0.0, %v840
    %v842 = vpop.f32.mrf.mxu0
    %v843 = vadd.f32 0.0, %v842
    %844 = vmatprep.mubr.bf16.mxu0 %v141
    %845 = vmatmul.mubr.bf16.gmra.mxu0 %v140
    %v846 = vpop.f32.mrf.mxu0
    %v847 = vadd.f32 0.0, %v846
    %v848 = vpop.f32.mrf.mxu0
    %v849 = vadd.f32 0.0, %v848
    %v850 = vpop.f32.mrf.mxu0
    %v851 = vadd.f32 0.0, %v850
    %v852 = vpop.f32.mrf.mxu0
    %v853 = vadd.f32 0.0, %v852
    %854 = vmatprep.mubr.bf16.mxu0 %v143
    %855 = vmatmul.mubr.bf16.gmra.mxu0 %v142
    %v856 = vpop.f32.mrf.mxu0
    %v857 = vadd.f32 0.0, %v856
    %v858 = vpop.f32.mrf.mxu0
    %v859 = vadd.f32 0.0, %v858
    %v860 = vpop.f32.mrf.mxu0
    %v861 = vadd.f32 0.0, %v860
    %v862 = vpop.f32.mrf.mxu0
    %v863 = vadd.f32 0.0, %v862
    %864 = vmatprep.mubr.bf16.mxu0 %v145
    %865 = vmatmul.mubr.bf16.gmra.mxu0 %v144
    %v866 = vpop.f32.mrf.mxu0
    %v867 = vadd.f32 0.0, %v866
    %v868 = vpop.f32.mrf.mxu0
    %v869 = vadd.f32 0.0, %v868
    %v870 = vpop.f32.mrf.mxu0
    %v871 = vadd.f32 0.0, %v870
    %v872 = vpop.f32.mrf.mxu0
    %v873 = vadd.f32 0.0, %v872
    %874 = vmatprep.mubr.bf16.mxu0 %v147
    %875 = vmatmul.mubr.bf16.gmra.mxu0 %v146
    %v876 = vpop.f32.mrf.mxu0
    %v877 = vadd.f32 0.0, %v876
    %v878 = vpop.f32.mrf.mxu0
    %v879 = vadd.f32 0.0, %v878
    %v880 = vpop.f32.mrf.mxu0
    %v881 = vadd.f32 0.0, %v880
    %v882 = vpop.f32.mrf.mxu0
    %v883 = vadd.f32 0.0, %v882
    %884 = vmatprep.mubr.bf16.mxu0 %v149
    %885 = vmatmul.mubr.bf16.gmra.mxu0 %v148
    %v886 = vpop.f32.mrf.mxu0
    %v887 = vadd.f32 0.0, %v886
    %v888 = vpop.f32.mrf.mxu0
    %v889 = vadd.f32 0.0, %v888
    %v890 = vpop.f32.mrf.mxu0
    %v891 = vadd.f32 0.0, %v890
    %v892 = vpop.f32.mrf.mxu0
    %v893 = vadd.f32 0.0, %v892
    %894 = vmatprep.mubr.bf16.mxu0 %v151
    %895 = vmatmul.mubr.bf16.gmra.mxu0 %v150
    %v896 = vpop.f32.mrf.mxu0
    %v897 = vadd.f32 0.0, %v896
    %v898 = vpop.f32.mrf.mxu0
    %v899 = vadd.f32 0.0, %v898
    %v900 = vpop.f32.mrf.mxu0
    %v901 = vadd.f32 0.0, %v900
    %v902 = vpop.f32.mrf.mxu0
    %v903 = vadd.f32 0.0, %v902
    %904 = vmatprep.mubr.bf16.mxu0 %v153
    %905 = vmatmul.mubr.bf16.gmra.mxu0 %v152
    %v906 = vpop.f32.mrf.mxu0
    %v907 = vadd.f32 0.0, %v906
    %v908 = vpop.f32.mrf.mxu0
    %v909 = vadd.f32 0.0, %v908
    %v910 = vpop.f32.mrf.mxu0
    %v911 = vadd.f32 0.0, %v910
    %v912 = vpop.f32.mrf.mxu0
    %v913 = vadd.f32 0.0, %v912
    %914 = vmatprep.mubr.bf16.mxu0 %v155
    %915 = vmatmul.mubr.bf16.gmra.mxu0 %v154
    %v916 = vpop.f32.mrf.mxu0
    %v917 = vadd.f32 0.0, %v916
    %v918 = vpop.f32.mrf.mxu0
    %v919 = vadd.f32 0.0, %v918
    %v920 = vpop.f32.mrf.mxu0
    %v921 = vadd.f32 0.0, %v920
    %v922 = vpop.f32.mrf.mxu0
    %v923 = vadd.f32 0.0, %v922
    %924 = vdwg.mxu0
    %925 = vmatprep.subr.bf16.mxu0 %v585
    %926 = vmatpush1.bf16.msra.mxu0 %v584
    %927 = vmatprep.subr.bf16.mxu0 %v579
    %928 = vmatpush1.bf16.msra.mxu0 %v578
    %929 = vmatprep.subr.bf16.mxu0 %v573
    %930 = vmatpush1.bf16.msra.mxu0 %v572
    %931 = vmatprep.subr.bf16.mxu0 %v567
    %932 = vmatpush1.bf16.msra.mxu0 %v566
    %933 = vmatprep.subr.bf16.mxu0 %v561
    %934 = vmatpush1.bf16.msra.mxu0 %v560
    %935 = vmatprep.subr.bf16.mxu0 %v555
    %936 = vmatpush1.bf16.msra.mxu0 %v554
    %937 = vmatprep.subr.bf16.mxu0 %v549
    %938 = vmatpush1.bf16.msra.mxu0 %v548
    %939 = vmatprep.subr.bf16.mxu0 %v543
    %940 = vmatpush1.bf16.msra.mxu0 %v542
    %941 = vmatprep.subr.bf16.mxu0 %v633
    %942 = vmatpush2.bf16.msra.mxu0 %v632
    %943 = vmatprep.subr.bf16.mxu0 %v627
    %944 = vmatpush2.bf16.msra.mxu0 %v626
    %945 = vmatprep.subr.bf16.mxu0 %v621
    %946 = vmatpush2.bf16.msra.mxu0 %v620
    %947 = vmatprep.subr.bf16.mxu0 %v615
    %948 = vmatpush2.bf16.msra.mxu0 %v614
    %949 = vmatprep.subr.bf16.mxu0 %v609
    %950 = vmatpush2.bf16.msra.mxu0 %v608
    %951 = vmatprep.subr.bf16.mxu0 %v603
    %952 = vmatpush2.bf16.msra.mxu0 %v602
    %953 = vmatprep.subr.bf16.mxu0 %v597
    %954 = vmatpush2.bf16.msra.mxu0 %v596
    %955 = vmatprep.subr.bf16.mxu0 %v591
    %956 = vmatpush2.bf16.msra.mxu0 %v590
    %957 = vmatprep.mubr.bf16.mxu0 %v125
    %958 = vmatmul.mubr.bf16.gmra.mxu0 %v124
    %v959 = vpop.f32.mrf.mxu0
    %v960 = vadd.f32 0.0, %v959
    %v961 = vpop.f32.mrf.mxu0
    %v962 = vadd.f32 0.0, %v961
    %v963 = vpop.f32.mrf.mxu0
    %v964 = vadd.f32 0.0, %v963
    %v965 = vpop.f32.mrf.mxu0
    %v966 = vadd.f32 0.0, %v965
    %967 = vmatprep.mubr.bf16.mxu0 %v127
    %968 = vmatmul.mubr.bf16.gmra.mxu0 %v126
    %v969 = vpop.f32.mrf.mxu0
    %v970 = vadd.f32 0.0, %v969
    %v971 = vpop.f32.mrf.mxu0
    %v972 = vadd.f32 0.0, %v971
    %v973 = vpop.f32.mrf.mxu0
    %v974 = vadd.f32 0.0, %v973
    %v975 = vpop.f32.mrf.mxu0
    %v976 = vadd.f32 0.0, %v975
    %977 = vmatprep.mubr.bf16.mxu0 %v129
    %978 = vmatmul.mubr.bf16.gmra.mxu0 %v128
    %v979 = vpop.f32.mrf.mxu0
    %v980 = vadd.f32 0.0, %v979
    %v981 = vpop.f32.mrf.mxu0
    %v982 = vadd.f32 0.0, %v981
    %v983 = vpop.f32.mrf.mxu0
    %v984 = vadd.f32 0.0, %v983
    %v985 = vpop.f32.mrf.mxu0
    %v986 = vadd.f32 0.0, %v985
    %987 = vmatprep.mubr.bf16.mxu0 %v131
    %988 = vmatmul.mubr.bf16.gmra.mxu0 %v130
    %v989 = vpop.f32.mrf.mxu0
    %v990 = vadd.f32 0.0, %v989
    %v991 = vpop.f32.mrf.mxu0
    %v992 = vadd.f32 0.0, %v991
    %v993 = vpop.f32.mrf.mxu0
    %v994 = vadd.f32 0.0, %v993
    %v995 = vpop.f32.mrf.mxu0
    %v996 = vadd.f32 0.0, %v995
    %997 = vmatprep.mubr.bf16.mxu0 %v133
    %998 = vmatmul.mubr.bf16.gmra.mxu0 %v132
    %v999 = vpop.f32.mrf.mxu0
    %v1000 = vadd.f32 0.0, %v999
    %v1001 = vpop.f32.mrf.mxu0
    %v1002 = vadd.f32 0.0, %v1001
    %v1003 = vpop.f32.mrf.mxu0
    %v1004 = vadd.f32 0.0, %v1003
    %v1005 = vpop.f32.mrf.mxu0
    %v1006 = vadd.f32 0.0, %v1005
    %1007 = vmatprep.mubr.bf16.mxu0 %v135
    %1008 = vmatmul.mubr.bf16.gmra.mxu0 %v134
    %v1009 = vpop.f32.mrf.mxu0
    %v1010 = vadd.f32 0.0, %v1009
    %v1011 = vpop.f32.mrf.mxu0
    %v1012 = vadd.f32 0.0, %v1011
    %v1013 = vpop.f32.mrf.mxu0
    %v1014 = vadd.f32 0.0, %v1013
    %v1015 = vpop.f32.mrf.mxu0
    %v1016 = vadd.f32 0.0, %v1015
    %1017 = vmatprep.mubr.bf16.mxu0 %v137
    %1018 = vmatmul.mubr.bf16.gmra.mxu0 %v136
    %v1019 = vpop.f32.mrf.mxu0
    %v1020 = vadd.f32 0.0, %v1019
    %v1021 = vpop.f32.mrf.mxu0
    %v1022 = vadd.f32 0.0, %v1021
    %v1023 = vpop.f32.mrf.mxu0
    %v1024 = vadd.f32 0.0, %v1023
    %v1025 = vpop.f32.mrf.mxu0
    %v1026 = vadd.f32 0.0, %v1025
    %1027 = vmatprep.mubr.bf16.mxu0 %v139
    %1028 = vmatmul.mubr.bf16.gmra.mxu0 %v138
    %v1029 = vpop.f32.mrf.mxu0
    %v1030 = vadd.f32 0.0, %v1029
    %v1031 = vpop.f32.mrf.mxu0
    %v1032 = vadd.f32 0.0, %v1031
    %v1033 = vpop.f32.mrf.mxu0
    %v1034 = vadd.f32 0.0, %v1033
    %v1035 = vpop.f32.mrf.mxu0
    %v1036 = vadd.f32 0.0, %v1035
    %1037 = vmatprep.mubr.bf16.mxu0 %v141
    %1038 = vmatmul.mubr.bf16.gmra.mxu0 %v140
    %v1039 = vpop.f32.mrf.mxu0
    %v1040 = vadd.f32 0.0, %v1039
    %v1041 = vpop.f32.mrf.mxu0
    %v1042 = vadd.f32 0.0, %v1041
    %v1043 = vpop.f32.mrf.mxu0
    %v1044 = vadd.f32 0.0, %v1043
    %v1045 = vpop.f32.mrf.mxu0
    %v1046 = vadd.f32 0.0, %v1045
    %1047 = vmatprep.mubr.bf16.mxu0 %v143
    %1048 = vmatmul.mubr.bf16.gmra.mxu0 %v142
    %v1049 = vpop.f32.mrf.mxu0
    %v1050 = vadd.f32 0.0, %v1049
    %v1051 = vpop.f32.mrf.mxu0
    %v1052 = vadd.f32 0.0, %v1051
    %v1053 = vpop.f32.mrf.mxu0
    %v1054 = vadd.f32 0.0, %v1053
    %v1055 = vpop.f32.mrf.mxu0
    %v1056 = vadd.f32 0.0, %v1055
    %1057 = vmatprep.mubr.bf16.mxu0 %v145
    %1058 = vmatmul.mubr.bf16.gmra.mxu0 %v144
    %v1059 = vpop.f32.mrf.mxu0
    %v1060 = vadd.f32 0.0, %v1059
    %v1061 = vpop.f32.mrf.mxu0
    %v1062 = vadd.f32 0.0, %v1061
    %v1063 = vpop.f32.mrf.mxu0
    %v1064 = vadd.f32 0.0, %v1063
    %v1065 = vpop.f32.mrf.mxu0
    %v1066 = vadd.f32 0.0, %v1065
    %1067 = vmatprep.mubr.bf16.mxu0 %v147
    %1068 = vmatmul.mubr.bf16.gmra.mxu0 %v146
    %v1069 = vpop.f32.mrf.mxu0
    %v1070 = vadd.f32 0.0, %v1069
    %v1071 = vpop.f32.mrf.mxu0
    %v1072 = vadd.f32 0.0, %v1071
    %v1073 = vpop.f32.mrf.mxu0
    %v1074 = vadd.f32 0.0, %v1073
    %v1075 = vpop.f32.mrf.mxu0
    %v1076 = vadd.f32 0.0, %v1075
    %1077 = vmatprep.mubr.bf16.mxu0 %v149
    %1078 = vmatmul.mubr.bf16.gmra.mxu0 %v148
    %v1079 = vpop.f32.mrf.mxu0
    %v1080 = vadd.f32 0.0, %v1079
    %v1081 = vpop.f32.mrf.mxu0
    %v1082 = vadd.f32 0.0, %v1081
    %v1083 = vpop.f32.mrf.mxu0
    %v1084 = vadd.f32 0.0, %v1083
    %v1085 = vpop.f32.mrf.mxu0
    %v1086 = vadd.f32 0.0, %v1085
    %1087 = vmatprep.mubr.bf16.mxu0 %v151
    %1088 = vmatmul.mubr.bf16.gmra.mxu0 %v150
    %v1089 = vpop.f32.mrf.mxu0
    %v1090 = vadd.f32 0.0, %v1089
    %v1091 = vpop.f32.mrf.mxu0
    %v1092 = vadd.f32 0.0, %v1091
    %v1093 = vpop.f32.mrf.mxu0
    %v1094 = vadd.f32 0.0, %v1093
    %v1095 = vpop.f32.mrf.mxu0
    %v1096 = vadd.f32 0.0, %v1095
    %1097 = vmatprep.mubr.bf16.mxu0 %v153
    %1098 = vmatmul.mubr.bf16.gmra.mxu0 %v152
    %v1099 = vpop.f32.mrf.mxu0
    %v1100 = vadd.f32 0.0, %v1099
    %v1101 = vpop.f32.mrf.mxu0
    %v1102 = vadd.f32 0.0, %v1101
    %v1103 = vpop.f32.mrf.mxu0
    %v1104 = vadd.f32 0.0, %v1103
    %v1105 = vpop.f32.mrf.mxu0
    %v1106 = vadd.f32 0.0, %v1105
    %1107 = vmatprep.mubr.bf16.mxu0 %v155
    %1108 = vmatmul.mubr.bf16.gmra.mxu0 %v154
    %v1109 = vpop.f32.mrf.mxu0
    %v1110 = vadd.f32 0.0, %v1109
    %v1111 = vpop.f32.mrf.mxu0
    %v1112 = vadd.f32 0.0, %v1111
    %v1113 = vpop.f32.mrf.mxu0
    %v1114 = vadd.f32 0.0, %v1113
    %v1115 = vpop.f32.mrf.mxu0
    %v1116 = vadd.f32 0.0, %v1115
    %1117 = vdwg.mxu0
    %1118 = vmatprep.subr.bf16.mxu0 %v587
    %1119 = vmatpush1.bf16.msra.mxu0 %v586
    %1120 = vmatprep.subr.bf16.mxu0 %v581
    %1121 = vmatpush1.bf16.msra.mxu0 %v580
    %1122 = vmatprep.subr.bf16.mxu0 %v575
    %1123 = vmatpush1.bf16.msra.mxu0 %v574
    %1124 = vmatprep.subr.bf16.mxu0 %v569
    %1125 = vmatpush1.bf16.msra.mxu0 %v568
    %1126 = vmatprep.subr.bf16.mxu0 %v563
    %1127 = vmatpush1.bf16.msra.mxu0 %v562
    %1128 = vmatprep.subr.bf16.mxu0 %v557
    %1129 = vmatpush1.bf16.msra.mxu0 %v556
    %1130 = vmatprep.subr.bf16.mxu0 %v551
    %1131 = vmatpush1.bf16.msra.mxu0 %v550
    %1132 = vmatprep.subr.bf16.mxu0 %v545
    %1133 = vmatpush1.bf16.msra.mxu0 %v544
    %1134 = vmatprep.subr.bf16.mxu0 %v635
    %1135 = vmatpush2.bf16.msra.mxu0 %v634
    %1136 = vmatprep.subr.bf16.mxu0 %v629
    %1137 = vmatpush2.bf16.msra.mxu0 %v628
    %1138 = vmatprep.subr.bf16.mxu0 %v623
    %1139 = vmatpush2.bf16.msra.mxu0 %v622
    %1140 = vmatprep.subr.bf16.mxu0 %v617
    %1141 = vmatpush2.bf16.msra.mxu0 %v616
    %1142 = vmatprep.subr.bf16.mxu0 %v611
    %1143 = vmatpush2.bf16.msra.mxu0 %v610
    %1144 = vmatprep.subr.bf16.mxu0 %v605
    %1145 = vmatpush2.bf16.msra.mxu0 %v604
    %1146 = vmatprep.subr.bf16.mxu0 %v599
    %1147 = vmatpush2.bf16.msra.mxu0 %v598
    %1148 = vmatprep.subr.bf16.mxu0 %v593
    %1149 = vmatpush2.bf16.msra.mxu0 %v592
    %1150 = vmatprep.mubr.bf16.mxu0 %v125
    %1151 = vmatmul.mubr.bf16.gmra.mxu0 %v124
    %v1152 = vpop.f32.mrf.mxu0
    %v1153 = vadd.f32 0.0, %v1152
    %v1154 = vpop.f32.mrf.mxu0
    %v1155 = vadd.f32 0.0, %v1154
    %v1156 = vpop.f32.mrf.mxu0
    %v1157 = vadd.f32 0.0, %v1156
    %v1158 = vpop.f32.mrf.mxu0
    %v1159 = vadd.f32 0.0, %v1158
    %1160 = vmatprep.mubr.bf16.mxu0 %v127
    %1161 = vmatmul.mubr.bf16.gmra.mxu0 %v126
    %v1162 = vpop.f32.mrf.mxu0
    %v1163 = vadd.f32 0.0, %v1162
    %v1164 = vpop.f32.mrf.mxu0
    %v1165 = vadd.f32 0.0, %v1164
    %v1166 = vpop.f32.mrf.mxu0
    %v1167 = vadd.f32 0.0, %v1166
    %v1168 = vpop.f32.mrf.mxu0
    %v1169 = vadd.f32 0.0, %v1168
    %1170 = vmatprep.mubr.bf16.mxu0 %v129
    %1171 = vmatmul.mubr.bf16.gmra.mxu0 %v128
    %v1172 = vpop.f32.mrf.mxu0
    %v1173 = vadd.f32 0.0, %v1172
    %v1174 = vpop.f32.mrf.mxu0
    %v1175 = vadd.f32 0.0, %v1174
    %v1176 = vpop.f32.mrf.mxu0
    %v1177 = vadd.f32 0.0, %v1176
    %v1178 = vpop.f32.mrf.mxu0
    %v1179 = vadd.f32 0.0, %v1178
    %1180 = vmatprep.mubr.bf16.mxu0 %v131
    %1181 = vmatmul.mubr.bf16.gmra.mxu0 %v130
    %v1182 = vpop.f32.mrf.mxu0
    %v1183 = vadd.f32 0.0, %v1182
    %v1184 = vpop.f32.mrf.mxu0
    %v1185 = vadd.f32 0.0, %v1184
    %v1186 = vpop.f32.mrf.mxu0
    %v1187 = vadd.f32 0.0, %v1186
    %v1188 = vpop.f32.mrf.mxu0
    %v1189 = vadd.f32 0.0, %v1188
    %1190 = vmatprep.mubr.bf16.mxu0 %v133
    %1191 = vmatmul.mubr.bf16.gmra.mxu0 %v132
    %v1192 = vpop.f32.mrf.mxu0
    %v1193 = vadd.f32 0.0, %v1192
    %v1194 = vpop.f32.mrf.mxu0
    %v1195 = vadd.f32 0.0, %v1194
    %v1196 = vpop.f32.mrf.mxu0
    %v1197 = vadd.f32 0.0, %v1196
    %v1198 = vpop.f32.mrf.mxu0
    %v1199 = vadd.f32 0.0, %v1198
    %1200 = vmatprep.mubr.bf16.mxu0 %v135
    %1201 = vmatmul.mubr.bf16.gmra.mxu0 %v134
    %v1202 = vpop.f32.mrf.mxu0
    %v1203 = vadd.f32 0.0, %v1202
    %v1204 = vpop.f32.mrf.mxu0
    %v1205 = vadd.f32 0.0, %v1204
    %v1206 = vpop.f32.mrf.mxu0
    %v1207 = vadd.f32 0.0, %v1206
    %v1208 = vpop.f32.mrf.mxu0
    %v1209 = vadd.f32 0.0, %v1208
    %1210 = vmatprep.mubr.bf16.mxu0 %v137
    %1211 = vmatmul.mubr.bf16.gmra.mxu0 %v136
    %v1212 = vpop.f32.mrf.mxu0
    %v1213 = vadd.f32 0.0, %v1212
    %v1214 = vpop.f32.mrf.mxu0
    %v1215 = vadd.f32 0.0, %v1214
    %v1216 = vpop.f32.mrf.mxu0
    %v1217 = vadd.f32 0.0, %v1216
    %v1218 = vpop.f32.mrf.mxu0
    %v1219 = vadd.f32 0.0, %v1218
    %1220 = vmatprep.mubr.bf16.mxu0 %v139
    %1221 = vmatmul.mubr.bf16.gmra.mxu0 %v138
    %v1222 = vpop.f32.mrf.mxu0
    %v1223 = vadd.f32 0.0, %v1222
    %v1224 = vpop.f32.mrf.mxu0
    %v1225 = vadd.f32 0.0, %v1224
    %v1226 = vpop.f32.mrf.mxu0
    %v1227 = vadd.f32 0.0, %v1226
    %v1228 = vpop.f32.mrf.mxu0
    %v1229 = vadd.f32 0.0, %v1228
    %1230 = vmatprep.mubr.bf16.mxu0 %v141
    %1231 = vmatmul.mubr.bf16.gmra.mxu0 %v140
    %v1232 = vpop.f32.mrf.mxu0
    %v1233 = vadd.f32 0.0, %v1232
    %v1234 = vpop.f32.mrf.mxu0
    %v1235 = vadd.f32 0.0, %v1234
    %v1236 = vpop.f32.mrf.mxu0
    %v1237 = vadd.f32 0.0, %v1236
    %v1238 = vpop.f32.mrf.mxu0
    %v1239 = vadd.f32 0.0, %v1238
    %1240 = vmatprep.mubr.bf16.mxu0 %v143
    %1241 = vmatmul.mubr.bf16.gmra.mxu0 %v142
    %v1242 = vpop.f32.mrf.mxu0
    %v1243 = vadd.f32 0.0, %v1242
    %v1244 = vpop.f32.mrf.mxu0
    %v1245 = vadd.f32 0.0, %v1244
    %v1246 = vpop.f32.mrf.mxu0
    %v1247 = vadd.f32 0.0, %v1246
    %v1248 = vpop.f32.mrf.mxu0
    %v1249 = vadd.f32 0.0, %v1248
    %1250 = vmatprep.mubr.bf16.mxu0 %v145
    %1251 = vmatmul.mubr.bf16.gmra.mxu0 %v144
    %v1252 = vpop.f32.mrf.mxu0
    %v1253 = vadd.f32 0.0, %v1252
    %v1254 = vpop.f32.mrf.mxu0
    %v1255 = vadd.f32 0.0, %v1254
    %v1256 = vpop.f32.mrf.mxu0
    %v1257 = vadd.f32 0.0, %v1256
    %v1258 = vpop.f32.mrf.mxu0
    %v1259 = vadd.f32 0.0, %v1258
    %1260 = vmatprep.mubr.bf16.mxu0 %v147
    %1261 = vmatmul.mubr.bf16.gmra.mxu0 %v146
    %v1262 = vpop.f32.mrf.mxu0
    %v1263 = vadd.f32 0.0, %v1262
    %v1264 = vpop.f32.mrf.mxu0
    %v1265 = vadd.f32 0.0, %v1264
    %v1266 = vpop.f32.mrf.mxu0
    %v1267 = vadd.f32 0.0, %v1266
    %v1268 = vpop.f32.mrf.mxu0
    %v1269 = vadd.f32 0.0, %v1268
    %1270 = vmatprep.mubr.bf16.mxu0 %v149
    %1271 = vmatmul.mubr.bf16.gmra.mxu0 %v148
    %v1272 = vpop.f32.mrf.mxu0
    %v1273 = vadd.f32 0.0, %v1272
    %v1274 = vpop.f32.mrf.mxu0
    %v1275 = vadd.f32 0.0, %v1274
    %v1276 = vpop.f32.mrf.mxu0
    %v1277 = vadd.f32 0.0, %v1276
    %v1278 = vpop.f32.mrf.mxu0
    %v1279 = vadd.f32 0.0, %v1278
    %1280 = vmatprep.mubr.bf16.mxu0 %v151
    %1281 = vmatmul.mubr.bf16.gmra.mxu0 %v150
    %v1282 = vpop.f32.mrf.mxu0
    %v1283 = vadd.f32 0.0, %v1282
    %v1284 = vpop.f32.mrf.mxu0
    %v1285 = vadd.f32 0.0, %v1284
    %v1286 = vpop.f32.mrf.mxu0
    %v1287 = vadd.f32 0.0, %v1286
    %v1288 = vpop.f32.mrf.mxu0
    %v1289 = vadd.f32 0.0, %v1288
    %1290 = vmatprep.mubr.bf16.mxu0 %v153
    %1291 = vmatmul.mubr.bf16.gmra.mxu0 %v152
    %v1292 = vpop.f32.mrf.mxu0
    %v1293 = vadd.f32 0.0, %v1292
    %v1294 = vpop.f32.mrf.mxu0
    %v1295 = vadd.f32 0.0, %v1294
    %v1296 = vpop.f32.mrf.mxu0
    %v1297 = vadd.f32 0.0, %v1296
    %v1298 = vpop.f32.mrf.mxu0
    %v1299 = vadd.f32 0.0, %v1298
    %1300 = vmatprep.mubr.bf16.mxu0 %v155
    %1301 = vmatmul.mubr.bf16.gmra.mxu0 %v154
    %v1302 = vpop.f32.mrf.mxu0
    %v1303 = vadd.f32 0.0, %v1302
    %v1304 = vpop.f32.mrf.mxu0
    %v1305 = vadd.f32 0.0, %v1304
    %v1306 = vpop.f32.mrf.mxu0
    %v1307 = vadd.f32 0.0, %v1306
    %v1308 = vpop.f32.mrf.mxu0
    %v1309 = vadd.f32 0.0, %v1308
    %1310 = vdwg.mxu0
    %v1311 = vpack.c.bf16 %v771, %v767
    %v1312 = vpack.c.bf16 %v781, %v777
    %v1313 = vpack.c.bf16 %v791, %v787
    %v1314 = vpack.c.bf16 %v801, %v797
    %v1315 = vpack.c.bf16 %v811, %v807
    %v1316 = vpack.c.bf16 %v821, %v817
    %v1317 = vpack.c.bf16 %v831, %v827
    %v1318 = vpack.c.bf16 %v841, %v837
    %v1319 = vpack.c.bf16 %v964, %v960
    %v1320 = vpack.c.bf16 %v974, %v970
    %v1321 = vpack.c.bf16 %v984, %v980
    %v1322 = vpack.c.bf16 %v994, %v990
    %v1323 = vpack.c.bf16 %v1004, %v1000
    %v1324 = vpack.c.bf16 %v1014, %v1010
    %v1325 = vpack.c.bf16 %v1024, %v1020
    %v1326 = vpack.c.bf16 %v1034, %v1030
    %v1327 = vpack.c.bf16 %v1157, %v1153
    %v1328 = vpack.c.bf16 %v1167, %v1163
    %v1329 = vpack.c.bf16 %v1177, %v1173
    %v1330 = vpack.c.bf16 %v1187, %v1183
    %v1331 = vpack.c.bf16 %v1197, %v1193
    %v1332 = vpack.c.bf16 %v1207, %v1203
    %v1333 = vpack.c.bf16 %v1217, %v1213
    %v1334 = vpack.c.bf16 %v1227, %v1223
    %1335 = vmatprep.subr.bf16.mxu0 0
    %1336 = vmatpush1.bf16.xpose.msra.mxu0 %v1326
    %1337 = vmatprep.subr.bf16.mxu0 0
    %1338 = vmatpush1.bf16.xpose.msra.mxu0 %v1325
    %1339 = vmatprep.subr.bf16.mxu0 0
    %1340 = vmatpush1.bf16.xpose.msra.mxu0 %v1324
    %1341 = vmatprep.subr.bf16.mxu0 0
    %1342 = vmatpush1.bf16.xpose.msra.mxu0 %v1323
    %1343 = vmatprep.subr.bf16.mxu0 0
    %1344 = vmatpush1.bf16.xpose.msra.mxu0 %v1322
    %1345 = vmatprep.subr.bf16.mxu0 0
    %1346 = vmatpush1.bf16.xpose.msra.mxu0 %v1321
    %1347 = vmatprep.subr.bf16.mxu0 0
    %1348 = vmatpush1.bf16.xpose.msra.mxu0 %v1320
    %1349 = vmatprep.subr.bf16.mxu0 0
    %1350 = vmatpush1.bf16.xpose.msra.mxu0 %v1319
    %1351 = vmatprep.subr.bf16.mxu0 0
    %1352 = vmatpush2.bf16.xpose.msra.mxu0 0
    %1353 = vmatprep.subr.bf16.mxu0 0
    %1354 = vmatpush2.bf16.xpose.msra.mxu0 0
    %1355 = vmatprep.subr.bf16.mxu0 0
    %1356 = vmatpush2.bf16.xpose.msra.mxu0 0
    %1357 = vmatprep.subr.bf16.mxu0 0
    %1358 = vmatpush2.bf16.xpose.msra.mxu0 0
    %1359 = vmatprep.subr.bf16.mxu0 0
    %1360 = vmatpush2.bf16.xpose.msra.mxu0 0
    %1361 = vmatprep.subr.bf16.mxu0 0
    %1362 = vmatpush2.bf16.xpose.msra.mxu0 0
    %1363 = vmatprep.subr.bf16.mxu0 0
    %1364 = vmatpush2.bf16.xpose.msra.mxu0 0
    %1365 = vmatprep.subr.bf16.mxu0 0
    %1366 = vmatpush2.bf16.xpose.msra.mxu0 0
    %1367 = vmatprep.mubr.bf16.mxu0 0
    %1368 = vmatmul.mubr.bf16.gmra.mxu0 %v1311
    %v1369 = vpop.f32.mrf.mxu0
    %v1370 = vadd.f32 0.0, %v1369
    %v1371 = vpop.f32.mrf.mxu0
    %v1372 = vpop.f32.mrf.mxu0
    %v1373 = vadd.f32 0.0, %v1372
    %v1374 = vpop.f32.mrf.mxu0
    %1375 = vmatprep.mubr.bf16.mxu0 0
    %1376 = vmatmul.mubr.bf16.gmra.mxu0 %v1312
    %v1377 = vpop.f32.mrf.mxu0
    %v1378 = vadd.f32 0.0, %v1377
    %v1379 = vpop.f32.mrf.mxu0
    %v1380 = vpop.f32.mrf.mxu0
    %v1381 = vadd.f32 0.0, %v1380
    %v1382 = vpop.f32.mrf.mxu0
    %1383 = vmatprep.mubr.bf16.mxu0 0
    %1384 = vmatmul.mubr.bf16.gmra.mxu0 %v1313
    %v1385 = vpop.f32.mrf.mxu0
    %v1386 = vadd.f32 0.0, %v1385
    %v1387 = vpop.f32.mrf.mxu0
    %v1388 = vpop.f32.mrf.mxu0
    %v1389 = vadd.f32 0.0, %v1388
    %v1390 = vpop.f32.mrf.mxu0
    %1391 = vmatprep.mubr.bf16.mxu0 0
    %1392 = vmatmul.mubr.bf16.gmra.mxu0 %v1314
    %v1393 = vpop.f32.mrf.mxu0
    %v1394 = vadd.f32 0.0, %v1393
    %v1395 = vpop.f32.mrf.mxu0
    %v1396 = vpop.f32.mrf.mxu0
    %v1397 = vadd.f32 0.0, %v1396
    %v1398 = vpop.f32.mrf.mxu0
    %1399 = vmatprep.mubr.bf16.mxu0 0
    %1400 = vmatmul.mubr.bf16.gmra.mxu0 %v1315
    %v1401 = vpop.f32.mrf.mxu0
    %v1402 = vadd.f32 0.0, %v1401
    %v1403 = vpop.f32.mrf.mxu0
    %v1404 = vpop.f32.mrf.mxu0
    %v1405 = vadd.f32 0.0, %v1404
    %v1406 = vpop.f32.mrf.mxu0
    %1407 = vmatprep.mubr.bf16.mxu0 0
    %1408 = vmatmul.mubr.bf16.gmra.mxu0 %v1316
    %v1409 = vpop.f32.mrf.mxu0
    %v1410 = vadd.f32 0.0, %v1409
    %v1411 = vpop.f32.mrf.mxu0
    %v1412 = vpop.f32.mrf.mxu0
    %v1413 = vadd.f32 0.0, %v1412
    %v1414 = vpop.f32.mrf.mxu0
    %1415 = vmatprep.mubr.bf16.mxu0 0
    %1416 = vmatmul.mubr.bf16.gmra.mxu0 %v1317
    %v1417 = vpop.f32.mrf.mxu0
    %v1418 = vadd.f32 0.0, %v1417
    %v1419 = vpop.f32.mrf.mxu0
    %v1420 = vpop.f32.mrf.mxu0
    %v1421 = vadd.f32 0.0, %v1420
    %v1422 = vpop.f32.mrf.mxu0
    %1423 = vmatprep.mubr.bf16.mxu0 0
    %1424 = vmatmul.mubr.bf16.gmra.mxu0 %v1318
    %v1425 = vpop.f32.mrf.mxu0
    %v1426 = vadd.f32 0.0, %v1425
    %v1427 = vpop.f32.mrf.mxu0
    %v1428 = vpop.f32.mrf.mxu0
    %v1429 = vadd.f32 0.0, %v1428
    %v1430 = vpop.f32.mrf.mxu0
    %1431 = vdwg.mxu0
    %1432 = vmax.xlane.f32.xlu0 %v1370
    %v1433 = vpop.xlane.xlu0 %1432
    %1434 = vmax.xlane.f32.xlu0 %v1373
    %v1435 = vpop.xlane.xlu0 %1434
    %1436 = vmax.xlane.f32.xlu0 %v1378
    %v1437 = vpop.xlane.xlu0 %1436
    %1438 = vmax.xlane.f32.xlu0 %v1381
    %v1439 = vpop.xlane.xlu0 %1438
    %1440 = vmax.xlane.f32.xlu0 %v1386
    %v1441 = vpop.xlane.xlu0 %1440
    %1442 = vmax.xlane.f32.xlu0 %v1389
    %v1443 = vpop.xlane.xlu0 %1442
    %1444 = vmax.xlane.f32.xlu0 %v1394
    %v1445 = vpop.xlane.xlu0 %1444
    %1446 = vmax.xlane.f32.xlu0 %v1397
    %v1447 = vpop.xlane.xlu0 %1446
    %1448 = vmax.xlane.f32.xlu0 %v1402
    %v1449 = vpop.xlane.xlu0 %1448
    %1450 = vmax.xlane.f32.xlu0 %v1405
    %v1451 = vpop.xlane.xlu0 %1450
    %1452 = vmax.xlane.f32.xlu0 %v1410
    %v1453 = vpop.xlane.xlu0 %1452
    %1454 = vmax.xlane.f32.xlu0 %v1413
    %v1455 = vpop.xlane.xlu0 %1454
    %1456 = vmax.xlane.f32.xlu0 %v1418
    %v1457 = vpop.xlane.xlu0 %1456
    %1458 = vmax.xlane.f32.xlu0 %v1421
    %v1459 = vpop.xlane.xlu0 %1458
    %1460 = vmax.xlane.f32.xlu0 %v1426
    %v1461 = vpop.xlane.xlu0 %1460
    %1462 = vmax.xlane.f32.xlu0 %v1429
    %v1463 = vpop.xlane.xlu0 %1462
    %v1464 = vsub.f32 %v1370, %v1433
    %v1465 = vsub.f32 %v1373, %v1435
    %v1466 = vsub.f32 %v1378, %v1437
    %v1467 = vsub.f32 %v1381, %v1439
    %v1468 = vsub.f32 %v1386, %v1441
    %v1469 = vsub.f32 %v1389, %v1443
    %v1470 = vsub.f32 %v1394, %v1445
    %v1471 = vsub.f32 %v1397, %v1447
    %v1472 = vsub.f32 %v1402, %v1449
    %v1473 = vsub.f32 %v1405, %v1451
    %v1474 = vsub.f32 %v1410, %v1453
    %v1475 = vsub.f32 %v1413, %v1455
    %v1476 = vsub.f32 %v1418, %v1457
    %v1477 = vsub.f32 %v1421, %v1459
    %v1478 = vsub.f32 %v1426, %v1461
    %v1479 = vsub.f32 %v1429, %v1463
    %v1480 = vmul.f32 %v1464, 1.442695
    %v1481 = vpow.pop %v1480
    %v1482 = vmul.f32 %v1465, 1.442695
    %v1483 = vpow.pop %v1482
    %v1484 = vmul.f32 %v1466, 1.442695
    %v1485 = vpow.pop %v1484
    %v1486 = vmul.f32 %v1467, 1.442695
    %v1487 = vpow.pop %v1486
    %v1488 = vmul.f32 %v1468, 1.442695
    %v1489 = vpow.pop %v1488
    %v1490 = vmul.f32 %v1469, 1.442695
    %v1491 = vpow.pop %v1490
    %v1492 = vmul.f32 %v1470, 1.442695
    %v1493 = vpow.pop %v1492
    %v1494 = vmul.f32 %v1471, 1.442695
    %v1495 = vpow.pop %v1494
    %v1496 = vmul.f32 %v1472, 1.442695
    %v1497 = vpow.pop %v1496
    %v1498 = vmul.f32 %v1473, 1.442695
    %v1499 = vpow.pop %v1498
    %v1500 = vmul.f32 %v1474, 1.442695
    %v1501 = vpow.pop %v1500
    %v1502 = vmul.f32 %v1475, 1.442695
    %v1503 = vpow.pop %v1502
    %v1504 = vmul.f32 %v1476, 1.442695
    %v1505 = vpow.pop %v1504
    %v1506 = vmul.f32 %v1477, 1.442695
    %v1507 = vpow.pop %v1506
    %v1508 = vmul.f32 %v1478, 1.442695
    %v1509 = vpow.pop %v1508
    %v1510 = vmul.f32 %v1479, 1.442695
    %v1511 = vpow.pop %v1510
    %1512 = vadd.xlane.f32.xlu0 %v1481
    %v1513 = vpop.xlane.xlu0 %1512
    %1514 = vadd.xlane.f32.xlu0 %v1483
    %v1515 = vpop.xlane.xlu0 %1514
    %1516 = vadd.xlane.f32.xlu0 %v1485
    %v1517 = vpop.xlane.xlu0 %1516
    %1518 = vadd.xlane.f32.xlu0 %v1487
    %v1519 = vpop.xlane.xlu0 %1518
    %1520 = vadd.xlane.f32.xlu0 %v1489
    %v1521 = vpop.xlane.xlu0 %1520
    %1522 = vadd.xlane.f32.xlu0 %v1491
    %v1523 = vpop.xlane.xlu0 %1522
    %1524 = vadd.xlane.f32.xlu0 %v1493
    %v1525 = vpop.xlane.xlu0 %1524
    %1526 = vadd.xlane.f32.xlu0 %v1495
    %v1527 = vpop.xlane.xlu0 %1526
    %1528 = vadd.xlane.f32.xlu0 %v1497
    %v1529 = vpop.xlane.xlu0 %1528
    %1530 = vadd.xlane.f32.xlu0 %v1499
    %v1531 = vpop.xlane.xlu0 %1530
    %1532 = vadd.xlane.f32.xlu0 %v1501
    %v1533 = vpop.xlane.xlu0 %1532
    %1534 = vadd.xlane.f32.xlu0 %v1503
    %v1535 = vpop.xlane.xlu0 %1534
    %1536 = vadd.xlane.f32.xlu0 %v1505
    %v1537 = vpop.xlane.xlu0 %1536
    %1538 = vadd.xlane.f32.xlu0 %v1507
    %v1539 = vpop.xlane.xlu0 %1538
    %1540 = vadd.xlane.f32.xlu0 %v1509
    %v1541 = vpop.xlane.xlu0 %1540
    %1542 = vadd.xlane.f32.xlu0 %v1511
    %v1543 = vpop.xlane.xlu0 %1542
    %v1544 = vrcp.pop %v1513
    %v1545 = vrcp.pop %v1515
    %v1546 = vrcp.pop %v1517
    %v1547 = vrcp.pop %v1519
    %v1548 = vrcp.pop %v1521
    %v1549 = vrcp.pop %v1523
    %v1550 = vrcp.pop %v1525
    %v1551 = vrcp.pop %v1527
    %v1552 = vrcp.pop %v1529
    %v1553 = vrcp.pop %v1531
    %v1554 = vrcp.pop %v1533
    %v1555 = vrcp.pop %v1535
    %v1556 = vrcp.pop %v1537
    %v1557 = vrcp.pop %v1539
    %v1558 = vrcp.pop %v1541
    %v1559 = vrcp.pop %v1543
    %v1560 = vmul.f32 %v1481, %v1544
    %v1561 = vmul.f32 %v1483, %v1545
    %v1562 = vmul.f32 %v1485, %v1546
    %v1563 = vmul.f32 %v1487, %v1547
    %v1564 = vmul.f32 %v1489, %v1548
    %v1565 = vmul.f32 %v1491, %v1549
    %v1566 = vmul.f32 %v1493, %v1550
    %v1567 = vmul.f32 %v1495, %v1551
    %v1568 = vmul.f32 %v1497, %v1552
    %v1569 = vmul.f32 %v1499, %v1553
    %v1570 = vmul.f32 %v1501, %v1554
    %v1571 = vmul.f32 %v1503, %v1555
    %v1572 = vmul.f32 %v1505, %v1556
    %v1573 = vmul.f32 %v1507, %v1557
    %v1574 = vmul.f32 %v1509, %v1558
    %v1575 = vmul.f32 %v1511, %v1559
    %v1576 = vpack.c.bf16 %v1561, %v1560
    %v1577 = vpack.c.bf16 %v1563, %v1562
    %v1578 = vpack.c.bf16 %v1565, %v1564
    %v1579 = vpack.c.bf16 %v1567, %v1566
    %v1580 = vpack.c.bf16 %v1569, %v1568
    %v1581 = vpack.c.bf16 %v1571, %v1570
    %v1582 = vpack.c.bf16 %v1573, %v1572
    %v1583 = vpack.c.bf16 %v1575, %v1574
    %1584 = vmatprep.subr.bf16.mxu0 0
    %1585 = vmatpush1.bf16.msra.mxu0 %v1334
    %1586 = vmatprep.subr.bf16.mxu0 0
    %1587 = vmatpush1.bf16.msra.mxu0 %v1333
    %1588 = vmatprep.subr.bf16.mxu0 0
    %1589 = vmatpush1.bf16.msra.mxu0 %v1332
    %1590 = vmatprep.subr.bf16.mxu0 0
    %1591 = vmatpush1.bf16.msra.mxu0 %v1331
    %1592 = vmatprep.subr.bf16.mxu0 0
    %1593 = vmatpush1.bf16.msra.mxu0 %v1330
    %1594 = vmatprep.subr.bf16.mxu0 0
    %1595 = vmatpush1.bf16.msra.mxu0 %v1329
    %1596 = vmatprep.subr.bf16.mxu0 0
    %1597 = vmatpush1.bf16.msra.mxu0 %v1328
    %1598 = vmatprep.subr.bf16.mxu0 0
    %1599 = vmatpush1.bf16.msra.mxu0 %v1327
    %1600 = vmatprep.subr.bf16.mxu0 0
    %1601 = vmatpush2.bf16.msra.mxu0 0
    %1602 = vmatprep.subr.bf16.mxu0 0
    %1603 = vmatpush2.bf16.msra.mxu0 0
    %1604 = vmatprep.subr.bf16.mxu0 0
    %1605 = vmatpush2.bf16.msra.mxu0 0
    %1606 = vmatprep.subr.bf16.mxu0 0
    %1607 = vmatpush2.bf16.msra.mxu0 0
    %1608 = vmatprep.subr.bf16.mxu0 0
    %1609 = vmatpush2.bf16.msra.mxu0 0
    %1610 = vmatprep.subr.bf16.mxu0 0
    %1611 = vmatpush2.bf16.msra.mxu0 0
    %1612 = vmatprep.subr.bf16.mxu0 0
    %1613 = vmatpush2.bf16.msra.mxu0 0
    %1614 = vmatprep.subr.bf16.mxu0 0
    %1615 = vmatpush2.bf16.msra.mxu0 0
    %1616 = vmatprep.mubr.bf16.mxu0 0
    %1617 = vmatmul.mubr.bf16.gmra.mxu0 %v1576
    %v1618 = vpop.f32.mrf.mxu0
    %v1619 = vadd.f32 0.0, %v1618
    %v1620 = vpop.f32.mrf.mxu0
    %v1621 = vpop.f32.mrf.mxu0
    %v1622 = vadd.f32 0.0, %v1621
    %v1623 = vpop.f32.mrf.mxu0
    %1624 = vmatprep.mubr.bf16.mxu0 0
    %1625 = vmatmul.mubr.bf16.gmra.mxu0 %v1577
    %v1626 = vpop.f32.mrf.mxu0
    %v1627 = vadd.f32 0.0, %v1626
    %v1628 = vpop.f32.mrf.mxu0
    %v1629 = vpop.f32.mrf.mxu0
    %v1630 = vadd.f32 0.0, %v1629
    %v1631 = vpop.f32.mrf.mxu0
    %1632 = vmatprep.mubr.bf16.mxu0 0
    %1633 = vmatmul.mubr.bf16.gmra.mxu0 %v1578
    %v1634 = vpop.f32.mrf.mxu0
    %v1635 = vadd.f32 0.0, %v1634
    %v1636 = vpop.f32.mrf.mxu0
    %v1637 = vpop.f32.mrf.mxu0
    %v1638 = vadd.f32 0.0, %v1637
    %v1639 = vpop.f32.mrf.mxu0
    %1640 = vmatprep.mubr.bf16.mxu0 0
    %1641 = vmatmul.mubr.bf16.gmra.mxu0 %v1579
    %v1642 = vpop.f32.mrf.mxu0
    %v1643 = vadd.f32 0.0, %v1642
    %v1644 = vpop.f32.mrf.mxu0
    %v1645 = vpop.f32.mrf.mxu0
    %v1646 = vadd.f32 0.0, %v1645
    %v1647 = vpop.f32.mrf.mxu0
    %1648 = vmatprep.mubr.bf16.mxu0 0
    %1649 = vmatmul.mubr.bf16.gmra.mxu0 %v1580
    %v1650 = vpop.f32.mrf.mxu0
    %v1651 = vadd.f32 0.0, %v1650
    %v1652 = vpop.f32.mrf.mxu0
    %v1653 = vpop.f32.mrf.mxu0
    %v1654 = vadd.f32 0.0, %v1653
    %v1655 = vpop.f32.mrf.mxu0
    %1656 = vmatprep.mubr.bf16.mxu0 0
    %1657 = vmatmul.mubr.bf16.gmra.mxu0 %v1581
    %v1658 = vpop.f32.mrf.mxu0
    %v1659 = vadd.f32 0.0, %v1658
    %v1660 = vpop.f32.mrf.mxu0
    %v1661 = vpop.f32.mrf.mxu0
    %v1662 = vadd.f32 0.0, %v1661
    %v1663 = vpop.f32.mrf.mxu0
    %1664 = vmatprep.mubr.bf16.mxu0 0
    %1665 = vmatmul.mubr.bf16.gmra.mxu0 %v1582
    %v1666 = vpop.f32.mrf.mxu0
    %v1667 = vadd.f32 0.0, %v1666
    %v1668 = vpop.f32.mrf.mxu0
    %v1669 = vpop.f32.mrf.mxu0
    %v1670 = vadd.f32 0.0, %v1669
    %v1671 = vpop.f32.mrf.mxu0
    %1672 = vmatprep.mubr.bf16.mxu0 0
    %1673 = vmatmul.mubr.bf16.gmra.mxu0 %v1583
    %v1674 = vpop.f32.mrf.mxu0
    %v1675 = vadd.f32 0.0, %v1674
    %v1676 = vpop.f32.mrf.mxu0
    %v1677 = vpop.f32.mrf.mxu0
    %v1678 = vadd.f32 0.0, %v1677
    %v1679 = vpop.f32.mrf.mxu0
    %1680 = vdwg.mxu0
    %v1681 = vpack.c.bf16 %v1622, %v1619
    %v1682 = vpack.c.bf16 %v1630, %v1627
    %v1683 = vpack.c.bf16 %v1638, %v1635
    %v1684 = vpack.c.bf16 %v1646, %v1643
    %v1685 = vpack.c.bf16 %v1654, %v1651
    %v1686 = vpack.c.bf16 %v1662, %v1659
    %v1687 = vpack.c.bf16 %v1670, %v1667
    %v1688 = vpack.c.bf16 %v1678, %v1675
    %v1697 = vunpack.c.l.b16 %v1681
    %v1698 = vunpack.c.h.b16 %v1681
    %v1699 = vunpack.c.l.b16 %v1682
    %v1700 = vunpack.c.h.b16 %v1682
    %v1701 = vunpack.c.l.b16 %v1683
    %v1702 = vunpack.c.h.b16 %v1683
    %v1703 = vunpack.c.l.b16 %v1684
    %v1704 = vunpack.c.h.b16 %v1684
    %v1705 = vunpack.c.l.b16 %v1685
    %v1706 = vunpack.c.h.b16 %v1685
    %v1707 = vunpack.c.l.b16 %v1686
    %v1708 = vunpack.c.h.b16 %v1686
    %v1709 = vunpack.c.l.b16 %v1687
    %v1710 = vunpack.c.h.b16 %v1687
    %v1711 = vunpack.c.l.b16 %v1688
    %v1712 = vunpack.c.h.b16 %v1688
    %v1713 = vpack.c.b16 %v1697, %v1697
    %v1714 = vpack.c.b16 %v1698, %v1698
    %v1715 = vpack.c.b16 %v1699, %v1699
    %v1716 = vpack.c.b16 %v1700, %v1700
    %v1717 = vpack.c.b16 %v1701, %v1701
    %v1718 = vpack.c.b16 %v1702, %v1702
    %v1719 = vpack.c.b16 %v1703, %v1703
    %v1720 = vpack.c.b16 %v1704, %v1704
    %v1721 = vpack.c.b16 %v1705, %v1705
    %v1722 = vpack.c.b16 %v1706, %v1706
    %v1723 = vpack.c.b16 %v1707, %v1707
    %v1724 = vpack.c.b16 %v1708, %v1708
    %v1725 = vpack.c.b16 %v1709, %v1709
    %v1726 = vpack.c.b16 %v1710, %v1710
    %v1727 = vpack.c.b16 %v1711, %v1711
    %v1728 = vpack.c.b16 %v1712, %v1712
    %1745 = vst [vmem:[#allocation2] sm:$0xf] %v1713
    %1746 = vst [vmem:[#allocation2 + $0x8] sm:$0xf] %v1714
    %1747 = vst [vmem:[#allocation2 + $0x10] sm:$0xf] %v1715
    %1748 = vst [vmem:[#allocation2 + $0x18] sm:$0xf] %v1716
    %1749 = vst [vmem:[#allocation2 + $0x20] sm:$0xf] %v1717
    %1750 = vst [vmem:[#allocation2 + $0x28] sm:$0xf] %v1718
    %1751 = vst [vmem:[#allocation2 + $0x30] sm:$0xf] %v1719
    %1752 = vst [vmem:[#allocation2 + $0x38] sm:$0xf] %v1720
    %1753 = vst [vmem:[#allocation2 + $0x40] sm:$0xf] %v1721
    %1754 = vst [vmem:[#allocation2 + $0x48] sm:$0xf] %v1722
    %1755 = vst [vmem:[#allocation2 + $0x50] sm:$0xf] %v1723
    %1756 = vst [vmem:[#allocation2 + $0x58] sm:$0xf] %v1724
    %1757 = vst [vmem:[#allocation2 + $0x60] sm:$0xf] %v1725
    %1758 = vst [vmem:[#allocation2 + $0x68] sm:$0xf] %v1726
    %1759 = vst [vmem:[#allocation2 + $0x70] sm:$0xf] %v1727
    %1760 = vst [vmem:[#allocation2 + $0x78] sm:$0xf] %v1728
    %v1761 = vpack.c.bf16 %v773, %v769
    %v1762 = vpack.c.bf16 %v783, %v779
    %v1763 = vpack.c.bf16 %v793, %v789
    %v1764 = vpack.c.bf16 %v803, %v799
    %v1765 = vpack.c.bf16 %v813, %v809
    %v1766 = vpack.c.bf16 %v823, %v819
    %v1767 = vpack.c.bf16 %v833, %v829
    %v1768 = vpack.c.bf16 %v843, %v839
    %v1769 = vpack.c.bf16 %v966, %v962
    %v1770 = vpack.c.bf16 %v976, %v972
    %v1771 = vpack.c.bf16 %v986, %v982
    %v1772 = vpack.c.bf16 %v996, %v992
    %v1773 = vpack.c.bf16 %v1006, %v1002
    %v1774 = vpack.c.bf16 %v1016, %v1012
    %v1775 = vpack.c.bf16 %v1026, %v1022
    %v1776 = vpack.c.bf16 %v1036, %v1032
    %v1777 = vpack.c.bf16 %v1159, %v1155
    %v1778 = vpack.c.bf16 %v1169, %v1165
    %v1779 = vpack.c.bf16 %v1179, %v1175
    %v1780 = vpack.c.bf16 %v1189, %v1185
    %v1781 = vpack.c.bf16 %v1199, %v1195
    %v1782 = vpack.c.bf16 %v1209, %v1205
    %v1783 = vpack.c.bf16 %v1219, %v1215
    %v1784 = vpack.c.bf16 %v1229, %v1225
    %1785 = vmatprep.subr.bf16.mxu0 0
    %1786 = vmatpush1.bf16.xpose.msra.mxu0 %v1776
    %1787 = vmatprep.subr.bf16.mxu0 0
    %1788 = vmatpush1.bf16.xpose.msra.mxu0 %v1775
    %1789 = vmatprep.subr.bf16.mxu0 0
    %1790 = vmatpush1.bf16.xpose.msra.mxu0 %v1774
    %1791 = vmatprep.subr.bf16.mxu0 0
    %1792 = vmatpush1.bf16.xpose.msra.mxu0 %v1773
    %1793 = vmatprep.subr.bf16.mxu0 0
    %1794 = vmatpush1.bf16.xpose.msra.mxu0 %v1772
    %1795 = vmatprep.subr.bf16.mxu0 0
    %1796 = vmatpush1.bf16.xpose.msra.mxu0 %v1771
    %1797 = vmatprep.subr.bf16.mxu0 0
    %1798 = vmatpush1.bf16.xpose.msra.mxu0 %v1770
    %1799 = vmatprep.subr.bf16.mxu0 0
    %1800 = vmatpush1.bf16.xpose.msra.mxu0 %v1769
    %1801 = vmatprep.subr.bf16.mxu0 0
    %1802 = vmatpush2.bf16.xpose.msra.mxu0 0
    %1803 = vmatprep.subr.bf16.mxu0 0
    %1804 = vmatpush2.bf16.xpose.msra.mxu0 0
    %1805 = vmatprep.subr.bf16.mxu0 0
    %1806 = vmatpush2.bf16.xpose.msra.mxu0 0
    %1807 = vmatprep.subr.bf16.mxu0 0
    %1808 = vmatpush2.bf16.xpose.msra.mxu0 0
    %1809 = vmatprep.subr.bf16.mxu0 0
    %1810 = vmatpush2.bf16.xpose.msra.mxu0 0
    %1811 = vmatprep.subr.bf16.mxu0 0
    %1812 = vmatpush2.bf16.xpose.msra.mxu0 0
    %1813 = vmatprep.subr.bf16.mxu0 0
    %1814 = vmatpush2.bf16.xpose.msra.mxu0 0
    %1815 = vmatprep.subr.bf16.mxu0 0
    %1816 = vmatpush2.bf16.xpose.msra.mxu0 0
    %1817 = vmatprep.mubr.bf16.mxu0 0
    %1818 = vmatmul.mubr.bf16.gmra.mxu0 %v1761
    %v1819 = vpop.f32.mrf.mxu0
    %v1820 = vadd.f32 0.0, %v1819
    %v1821 = vpop.f32.mrf.mxu0
    %v1822 = vpop.f32.mrf.mxu0
    %v1823 = vadd.f32 0.0, %v1822
    %v1824 = vpop.f32.mrf.mxu0
    %1825 = vmatprep.mubr.bf16.mxu0 0
    %1826 = vmatmul.mubr.bf16.gmra.mxu0 %v1762
    %v1827 = vpop.f32.mrf.mxu0
    %v1828 = vadd.f32 0.0, %v1827
    %v1829 = vpop.f32.mrf.mxu0
    %v1830 = vpop.f32.mrf.mxu0
    %v1831 = vadd.f32 0.0, %v1830
    %v1832 = vpop.f32.mrf.mxu0
    %1833 = vmatprep.mubr.bf16.mxu0 0
    %1834 = vmatmul.mubr.bf16.gmra.mxu0 %v1763
    %v1835 = vpop.f32.mrf.mxu0
    %v1836 = vadd.f32 0.0, %v1835
    %v1837 = vpop.f32.mrf.mxu0
    %v1838 = vpop.f32.mrf.mxu0
    %v1839 = vadd.f32 0.0, %v1838
    %v1840 = vpop.f32.mrf.mxu0
    %1841 = vmatprep.mubr.bf16.mxu0 0
    %1842 = vmatmul.mubr.bf16.gmra.mxu0 %v1764
    %v1843 = vpop.f32.mrf.mxu0
    %v1844 = vadd.f32 0.0, %v1843
    %v1845 = vpop.f32.mrf.mxu0
    %v1846 = vpop.f32.mrf.mxu0
    %v1847 = vadd.f32 0.0, %v1846
    %v1848 = vpop.f32.mrf.mxu0
    %1849 = vmatprep.mubr.bf16.mxu0 0
    %1850 = vmatmul.mubr.bf16.gmra.mxu0 %v1765
    %v1851 = vpop.f32.mrf.mxu0
    %v1852 = vadd.f32 0.0, %v1851
    %v1853 = vpop.f32.mrf.mxu0
    %v1854 = vpop.f32.mrf.mxu0
    %v1855 = vadd.f32 0.0, %v1854
    %v1856 = vpop.f32.mrf.mxu0
    %1857 = vmatprep.mubr.bf16.mxu0 0
    %1858 = vmatmul.mubr.bf16.gmra.mxu0 %v1766
    %v1859 = vpop.f32.mrf.mxu0
    %v1860 = vadd.f32 0.0, %v1859
    %v1861 = vpop.f32.mrf.mxu0
    %v1862 = vpop.f32.mrf.mxu0
    %v1863 = vadd.f32 0.0, %v1862
    %v1864 = vpop.f32.mrf.mxu0
    %1865 = vmatprep.mubr.bf16.mxu0 0
    %1866 = vmatmul.mubr.bf16.gmra.mxu0 %v1767
    %v1867 = vpop.f32.mrf.mxu0
    %v1868 = vadd.f32 0.0, %v1867
    %v1869 = vpop.f32.mrf.mxu0
    %v1870 = vpop.f32.mrf.mxu0
    %v1871 = vadd.f32 0.0, %v1870
    %v1872 = vpop.f32.mrf.mxu0
    %1873 = vmatprep.mubr.bf16.mxu0 0
    %1874 = vmatmul.mubr.bf16.gmra.mxu0 %v1768
    %v1875 = vpop.f32.mrf.mxu0
    %v1876 = vadd.f32 0.0, %v1875
    %v1877 = vpop.f32.mrf.mxu0
    %v1878 = vpop.f32.mrf.mxu0
    %v1879 = vadd.f32 0.0, %v1878
    %v1880 = vpop.f32.mrf.mxu0
    %1881 = vdwg.mxu0
    %1882 = vmax.xlane.f32.xlu0 %v1820
    %v1883 = vpop.xlane.xlu0 %1882
    %1884 = vmax.xlane.f32.xlu0 %v1823
    %v1885 = vpop.xlane.xlu0 %1884
    %1886 = vmax.xlane.f32.xlu0 %v1828
    %v1887 = vpop.xlane.xlu0 %1886
    %1888 = vmax.xlane.f32.xlu0 %v1831
    %v1889 = vpop.xlane.xlu0 %1888
    %1890 = vmax.xlane.f32.xlu0 %v1836
    %v1891 = vpop.xlane.xlu0 %1890
    %1892 = vmax.xlane.f32.xlu0 %v1839
    %v1893 = vpop.xlane.xlu0 %1892
    %1894 = vmax.xlane.f32.xlu0 %v1844
    %v1895 = vpop.xlane.xlu0 %1894
    %1896 = vmax.xlane.f32.xlu0 %v1847
    %v1897 = vpop.xlane.xlu0 %1896
    %1898 = vmax.xlane.f32.xlu0 %v1852
    %v1899 = vpop.xlane.xlu0 %1898
    %1900 = vmax.xlane.f32.xlu0 %v1855
    %v1901 = vpop.xlane.xlu0 %1900
    %1902 = vmax.xlane.f32.xlu0 %v1860
    %v1903 = vpop.xlane.xlu0 %1902
    %1904 = vmax.xlane.f32.xlu0 %v1863
    %v1905 = vpop.xlane.xlu0 %1904
    %1906 = vmax.xlane.f32.xlu0 %v1868
    %v1907 = vpop.xlane.xlu0 %1906
    %1908 = vmax.xlane.f32.xlu0 %v1871
    %v1909 = vpop.xlane.xlu0 %1908
    %1910 = vmax.xlane.f32.xlu0 %v1876
    %v1911 = vpop.xlane.xlu0 %1910
    %1912 = vmax.xlane.f32.xlu0 %v1879
    %v1913 = vpop.xlane.xlu0 %1912
    %v1914 = vsub.f32 %v1820, %v1883
    %v1915 = vsub.f32 %v1823, %v1885
    %v1916 = vsub.f32 %v1828, %v1887
    %v1917 = vsub.f32 %v1831, %v1889
    %v1918 = vsub.f32 %v1836, %v1891
    %v1919 = vsub.f32 %v1839, %v1893
    %v1920 = vsub.f32 %v1844, %v1895
    %v1921 = vsub.f32 %v1847, %v1897
    %v1922 = vsub.f32 %v1852, %v1899
    %v1923 = vsub.f32 %v1855, %v1901
    %v1924 = vsub.f32 %v1860, %v1903
    %v1925 = vsub.f32 %v1863, %v1905
    %v1926 = vsub.f32 %v1868, %v1907
    %v1927 = vsub.f32 %v1871, %v1909
    %v1928 = vsub.f32 %v1876, %v1911
    %v1929 = vsub.f32 %v1879, %v1913
    %v1930 = vmul.f32 %v1914, 1.442695
    %v1931 = vpow.pop %v1930
    %v1932 = vmul.f32 %v1915, 1.442695
    %v1933 = vpow.pop %v1932
    %v1934 = vmul.f32 %v1916, 1.442695
    %v1935 = vpow.pop %v1934
    %v1936 = vmul.f32 %v1917, 1.442695
    %v1937 = vpow.pop %v1936
    %v1938 = vmul.f32 %v1918, 1.442695
    %v1939 = vpow.pop %v1938
    %v1940 = vmul.f32 %v1919, 1.442695
    %v1941 = vpow.pop %v1940
    %v1942 = vmul.f32 %v1920, 1.442695
    %v1943 = vpow.pop %v1942
    %v1944 = vmul.f32 %v1921, 1.442695
    %v1945 = vpow.pop %v1944
    %v1946 = vmul.f32 %v1922, 1.442695
    %v1947 = vpow.pop %v1946
    %v1948 = vmul.f32 %v1923, 1.442695
    %v1949 = vpow.pop %v1948
    %v1950 = vmul.f32 %v1924, 1.442695
    %v1951 = vpow.pop %v1950
    %v1952 = vmul.f32 %v1925, 1.442695
    %v1953 = vpow.pop %v1952
    %v1954 = vmul.f32 %v1926, 1.442695
    %v1955 = vpow.pop %v1954
    %v1956 = vmul.f32 %v1927, 1.442695
    %v1957 = vpow.pop %v1956
    %v1958 = vmul.f32 %v1928, 1.442695
    %v1959 = vpow.pop %v1958
    %v1960 = vmul.f32 %v1929, 1.442695
    %v1961 = vpow.pop %v1960
    %1962 = vadd.xlane.f32.xlu0 %v1931
    %v1963 = vpop.xlane.xlu0 %1962
    %1964 = vadd.xlane.f32.xlu0 %v1933
    %v1965 = vpop.xlane.xlu0 %1964
    %1966 = vadd.xlane.f32.xlu0 %v1935
    %v1967 = vpop.xlane.xlu0 %1966
    %1968 = vadd.xlane.f32.xlu0 %v1937
    %v1969 = vpop.xlane.xlu0 %1968
    %1970 = vadd.xlane.f32.xlu0 %v1939
    %v1971 = vpop.xlane.xlu0 %1970
    %1972 = vadd.xlane.f32.xlu0 %v1941
    %v1973 = vpop.xlane.xlu0 %1972
    %1974 = vadd.xlane.f32.xlu0 %v1943
    %v1975 = vpop.xlane.xlu0 %1974
    %1976 = vadd.xlane.f32.xlu0 %v1945
    %v1977 = vpop.xlane.xlu0 %1976
    %1978 = vadd.xlane.f32.xlu0 %v1947
    %v1979 = vpop.xlane.xlu0 %1978
    %1980 = vadd.xlane.f32.xlu0 %v1949
    %v1981 = vpop.xlane.xlu0 %1980
    %1982 = vadd.xlane.f32.xlu0 %v1951
    %v1983 = vpop.xlane.xlu0 %1982
    %1984 = vadd.xlane.f32.xlu0 %v1953
    %v1985 = vpop.xlane.xlu0 %1984
    %1986 = vadd.xlane.f32.xlu0 %v1955
    %v1987 = vpop.xlane.xlu0 %1986
    %1988 = vadd.xlane.f32.xlu0 %v1957
    %v1989 = vpop.xlane.xlu0 %1988
    %1990 = vadd.xlane.f32.xlu0 %v1959
    %v1991 = vpop.xlane.xlu0 %1990
    %1992 = vadd.xlane.f32.xlu0 %v1961
    %v1993 = vpop.xlane.xlu0 %1992
    %v1994 = vrcp.pop %v1963
    %v1995 = vrcp.pop %v1965
    %v1996 = vrcp.pop %v1967
    %v1997 = vrcp.pop %v1969
    %v1998 = vrcp.pop %v1971
    %v1999 = vrcp.pop %v1973
    %v2000 = vrcp.pop %v1975
    %v2001 = vrcp.pop %v1977
    %v2002 = vrcp.pop %v1979
    %v2003 = vrcp.pop %v1981
    %v2004 = vrcp.pop %v1983
    %v2005 = vrcp.pop %v1985
    %v2006 = vrcp.pop %v1987
    %v2007 = vrcp.pop %v1989
    %v2008 = vrcp.pop %v1991
    %v2009 = vrcp.pop %v1993
    %v2010 = vmul.f32 %v1931, %v1994
    %v2011 = vmul.f32 %v1933, %v1995
    %v2012 = vmul.f32 %v1935, %v1996
    %v2013 = vmul.f32 %v1937, %v1997
    %v2014 = vmul.f32 %v1939, %v1998
    %v2015 = vmul.f32 %v1941, %v1999
    %v2016 = vmul.f32 %v1943, %v2000
    %v2017 = vmul.f32 %v1945, %v2001
    %v2018 = vmul.f32 %v1947, %v2002
    %v2019 = vmul.f32 %v1949, %v2003
    %v2020 = vmul.f32 %v1951, %v2004
    %v2021 = vmul.f32 %v1953, %v2005
    %v2022 = vmul.f32 %v1955, %v2006
    %v2023 = vmul.f32 %v1957, %v2007
    %v2024 = vmul.f32 %v1959, %v2008
    %v2025 = vmul.f32 %v1961, %v2009
    %v2026 = vpack.c.bf16 %v2011, %v2010
    %v2027 = vpack.c.bf16 %v2013, %v2012
    %v2028 = vpack.c.bf16 %v2015, %v2014
    %v2029 = vpack.c.bf16 %v2017, %v2016
    %v2030 = vpack.c.bf16 %v2019, %v2018
    %v2031 = vpack.c.bf16 %v2021, %v2020
    %v2032 = vpack.c.bf16 %v2023, %v2022
    %v2033 = vpack.c.bf16 %v2025, %v2024
    %2034 = vmatprep.subr.bf16.mxu0 0
    %2035 = vmatpush1.bf16.msra.mxu0 %v1784
    %2036 = vmatprep.subr.bf16.mxu0 0
    %2037 = vmatpush1.bf16.msra.mxu0 %v1783
    %2038 = vmatprep.subr.bf16.mxu0 0
    %2039 = vmatpush1.bf16.msra.mxu0 %v1782
    %2040 = vmatprep.subr.bf16.mxu0 0
    %2041 = vmatpush1.bf16.msra.mxu0 %v1781
    %2042 = vmatprep.subr.bf16.mxu0 0
    %2043 = vmatpush1.bf16.msra.mxu0 %v1780
    %2044 = vmatprep.subr.bf16.mxu0 0
    %2045 = vmatpush1.bf16.msra.mxu0 %v1779
    %2046 = vmatprep.subr.bf16.mxu0 0
    %2047 = vmatpush1.bf16.msra.mxu0 %v1778
    %2048 = vmatprep.subr.bf16.mxu0 0
    %2049 = vmatpush1.bf16.msra.mxu0 %v1777
    %2050 = vmatprep.subr.bf16.mxu0 0
    %2051 = vmatpush2.bf16.msra.mxu0 0
    %2052 = vmatprep.subr.bf16.mxu0 0
    %2053 = vmatpush2.bf16.msra.mxu0 0
    %2054 = vmatprep.subr.bf16.mxu0 0
    %2055 = vmatpush2.bf16.msra.mxu0 0
    %2056 = vmatprep.subr.bf16.mxu0 0
    %2057 = vmatpush2.bf16.msra.mxu0 0
    %2058 = vmatprep.subr.bf16.mxu0 0
    %2059 = vmatpush2.bf16.msra.mxu0 0
    %2060 = vmatprep.subr.bf16.mxu0 0
    %2061 = vmatpush2.bf16.msra.mxu0 0
    %2062 = vmatprep.subr.bf16.mxu0 0
    %2063 = vmatpush2.bf16.msra.mxu0 0
    %2064 = vmatprep.subr.bf16.mxu0 0
    %2065 = vmatpush2.bf16.msra.mxu0 0
    %2066 = vmatprep.mubr.bf16.mxu0 0
    %2067 = vmatmul.mubr.bf16.gmra.mxu0 %v2026
    %v2068 = vpop.f32.mrf.mxu0
    %v2069 = vadd.f32 0.0, %v2068
    %v2070 = vpop.f32.mrf.mxu0
    %v2071 = vpop.f32.mrf.mxu0
    %v2072 = vadd.f32 0.0, %v2071
    %v2073 = vpop.f32.mrf.mxu0
    %2074 = vmatprep.mubr.bf16.mxu0 0
    %2075 = vmatmul.mubr.bf16.gmra.mxu0 %v2027
    %v2076 = vpop.f32.mrf.mxu0
    %v2077 = vadd.f32 0.0, %v2076
    %v2078 = vpop.f32.mrf.mxu0
    %v2079 = vpop.f32.mrf.mxu0
    %v2080 = vadd.f32 0.0, %v2079
    %v2081 = vpop.f32.mrf.mxu0
    %2082 = vmatprep.mubr.bf16.mxu0 0
    %2083 = vmatmul.mubr.bf16.gmra.mxu0 %v2028
    %v2084 = vpop.f32.mrf.mxu0
    %v2085 = vadd.f32 0.0, %v2084
    %v2086 = vpop.f32.mrf.mxu0
    %v2087 = vpop.f32.mrf.mxu0
    %v2088 = vadd.f32 0.0, %v2087
    %v2089 = vpop.f32.mrf.mxu0
    %2090 = vmatprep.mubr.bf16.mxu0 0
    %2091 = vmatmul.mubr.bf16.gmra.mxu0 %v2029
    %v2092 = vpop.f32.mrf.mxu0
    %v2093 = vadd.f32 0.0, %v2092
    %v2094 = vpop.f32.mrf.mxu0
    %v2095 = vpop.f32.mrf.mxu0
    %v2096 = vadd.f32 0.0, %v2095
    %v2097 = vpop.f32.mrf.mxu0
    %2098 = vmatprep.mubr.bf16.mxu0 0
    %2099 = vmatmul.mubr.bf16.gmra.mxu0 %v2030
    %v2100 = vpop.f32.mrf.mxu0
    %v2101 = vadd.f32 0.0, %v2100
    %v2102 = vpop.f32.mrf.mxu0
    %v2103 = vpop.f32.mrf.mxu0
    %v2104 = vadd.f32 0.0, %v2103
    %v2105 = vpop.f32.mrf.mxu0
    %2106 = vmatprep.mubr.bf16.mxu0 0
    %2107 = vmatmul.mubr.bf16.gmra.mxu0 %v2031
    %v2108 = vpop.f32.mrf.mxu0
    %v2109 = vadd.f32 0.0, %v2108
    %v2110 = vpop.f32.mrf.mxu0
    %v2111 = vpop.f32.mrf.mxu0
    %v2112 = vadd.f32 0.0, %v2111
    %v2113 = vpop.f32.mrf.mxu0
    %2114 = vmatprep.mubr.bf16.mxu0 0
    %2115 = vmatmul.mubr.bf16.gmra.mxu0 %v2032
    %v2116 = vpop.f32.mrf.mxu0
    %v2117 = vadd.f32 0.0, %v2116
    %v2118 = vpop.f32.mrf.mxu0
    %v2119 = vpop.f32.mrf.mxu0
    %v2120 = vadd.f32 0.0, %v2119
    %v2121 = vpop.f32.mrf.mxu0
    %2122 = vmatprep.mubr.bf16.mxu0 0
    %2123 = vmatmul.mubr.bf16.gmra.mxu0 %v2033
    %v2124 = vpop.f32.mrf.mxu0
    %v2125 = vadd.f32 0.0, %v2124
    %v2126 = vpop.f32.mrf.mxu0
    %v2127 = vpop.f32.mrf.mxu0
    %v2128 = vadd.f32 0.0, %v2127
    %v2129 = vpop.f32.mrf.mxu0
    %2130 = vdwg.mxu0
    %v2131 = vpack.c.bf16 %v2072, %v2069
    %v2132 = vpack.c.bf16 %v2080, %v2077
    %v2133 = vpack.c.bf16 %v2088, %v2085
    %v2134 = vpack.c.bf16 %v2096, %v2093
    %v2135 = vpack.c.bf16 %v2104, %v2101
    %v2136 = vpack.c.bf16 %v2112, %v2109
    %v2137 = vpack.c.bf16 %v2120, %v2117
    %v2138 = vpack.c.bf16 %v2128, %v2125
    %v2147 = vunpack.c.l.b16 %v2131
    %v2148 = vunpack.c.h.b16 %v2131
    %v2149 = vunpack.c.l.b16 %v2132
    %v2150 = vunpack.c.h.b16 %v2132
    %v2151 = vunpack.c.l.b16 %v2133
    %v2152 = vunpack.c.h.b16 %v2133
    %v2153 = vunpack.c.l.b16 %v2134
    %v2154 = vunpack.c.h.b16 %v2134
    %v2155 = vunpack.c.l.b16 %v2135
    %v2156 = vunpack.c.h.b16 %v2135
    %v2157 = vunpack.c.l.b16 %v2136
    %v2158 = vunpack.c.h.b16 %v2136
    %v2159 = vunpack.c.l.b16 %v2137
    %v2160 = vunpack.c.h.b16 %v2137
    %v2161 = vunpack.c.l.b16 %v2138
    %v2162 = vunpack.c.h.b16 %v2138
    %v2163 = vpack.c.b16 %v2147, %v2147
    %v2164 = vpack.c.b16 %v2148, %v2148
    %v2165 = vpack.c.b16 %v2149, %v2149
    %v2166 = vpack.c.b16 %v2150, %v2150
    %v2167 = vpack.c.b16 %v2151, %v2151
    %v2168 = vpack.c.b16 %v2152, %v2152
    %v2169 = vpack.c.b16 %v2153, %v2153
    %v2170 = vpack.c.b16 %v2154, %v2154
    %v2171 = vpack.c.b16 %v2155, %v2155
    %v2172 = vpack.c.b16 %v2156, %v2156
    %v2173 = vpack.c.b16 %v2157, %v2157
    %v2174 = vpack.c.b16 %v2158, %v2158
    %v2175 = vpack.c.b16 %v2159, %v2159
    %v2176 = vpack.c.b16 %v2160, %v2160
    %v2177 = vpack.c.b16 %v2161, %v2161
    %v2178 = vpack.c.b16 %v2162, %v2162
    %2195 = vst [vmem:[#allocation2 + $0x4] sm:$0xf] %v2163
    %2196 = vst [vmem:[#allocation2 + $0xc] sm:$0xf] %v2164
    %2197 = vst [vmem:[#allocation2 + $0x14] sm:$0xf] %v2165
    %2198 = vst [vmem:[#allocation2 + $0x1c] sm:$0xf] %v2166
    %2199 = vst [vmem:[#allocation2 + $0x24] sm:$0xf] %v2167
    %2200 = vst [vmem:[#allocation2 + $0x2c] sm:$0xf] %v2168
    %2201 = vst [vmem:[#allocation2 + $0x34] sm:$0xf] %v2169
    %2202 = vst [vmem:[#allocation2 + $0x3c] sm:$0xf] %v2170
    %2203 = vst [vmem:[#allocation2 + $0x44] sm:$0xf] %v2171
    %2204 = vst [vmem:[#allocation2 + $0x4c] sm:$0xf] %v2172
    %2205 = vst [vmem:[#allocation2 + $0x54] sm:$0xf] %v2173
    %2206 = vst [vmem:[#allocation2 + $0x5c] sm:$0xf] %v2174
    %2207 = vst [vmem:[#allocation2 + $0x64] sm:$0xf] %v2175
    %2208 = vst [vmem:[#allocation2 + $0x6c] sm:$0xf] %v2176
    %2209 = vst [vmem:[#allocation2 + $0x74] sm:$0xf] %v2177
    %2210 = vst [vmem:[#allocation2 + $0x7c] sm:$0xf] %v2178
    %v2211 = vpack.c.bf16 %v851, %v847
    %v2212 = vpack.c.bf16 %v861, %v857
    %v2213 = vpack.c.bf16 %v871, %v867
    %v2214 = vpack.c.bf16 %v881, %v877
    %v2215 = vpack.c.bf16 %v891, %v887
    %v2216 = vpack.c.bf16 %v901, %v897
    %v2217 = vpack.c.bf16 %v911, %v907
    %v2218 = vpack.c.bf16 %v921, %v917
    %v2219 = vpack.c.bf16 %v1044, %v1040
    %v2220 = vpack.c.bf16 %v1054, %v1050
    %v2221 = vpack.c.bf16 %v1064, %v1060
    %v2222 = vpack.c.bf16 %v1074, %v1070
    %v2223 = vpack.c.bf16 %v1084, %v1080
    %v2224 = vpack.c.bf16 %v1094, %v1090
    %v2225 = vpack.c.bf16 %v1104, %v1100
    %v2226 = vpack.c.bf16 %v1114, %v1110
    %v2227 = vpack.c.bf16 %v1237, %v1233
    %v2228 = vpack.c.bf16 %v1247, %v1243
    %v2229 = vpack.c.bf16 %v1257, %v1253
    %v2230 = vpack.c.bf16 %v1267, %v1263
    %v2231 = vpack.c.bf16 %v1277, %v1273
    %v2232 = vpack.c.bf16 %v1287, %v1283
    %v2233 = vpack.c.bf16 %v1297, %v1293
    %v2234 = vpack.c.bf16 %v1307, %v1303
    %2235 = vmatprep.subr.bf16.mxu0 0
    %2236 = vmatpush1.bf16.xpose.msra.mxu0 %v2226
    %2237 = vmatprep.subr.bf16.mxu0 0
    %2238 = vmatpush1.bf16.xpose.msra.mxu0 %v2225
    %2239 = vmatprep.subr.bf16.mxu0 0
    %2240 = vmatpush1.bf16.xpose.msra.mxu0 %v2224
    %2241 = vmatprep.subr.bf16.mxu0 0
    %2242 = vmatpush1.bf16.xpose.msra.mxu0 %v2223
    %2243 = vmatprep.subr.bf16.mxu0 0
    %2244 = vmatpush1.bf16.xpose.msra.mxu0 %v2222
    %2245 = vmatprep.subr.bf16.mxu0 0
    %2246 = vmatpush1.bf16.xpose.msra.mxu0 %v2221
    %2247 = vmatprep.subr.bf16.mxu0 0
    %2248 = vmatpush1.bf16.xpose.msra.mxu0 %v2220
    %2249 = vmatprep.subr.bf16.mxu0 0
    %2250 = vmatpush1.bf16.xpose.msra.mxu0 %v2219
    %2251 = vmatprep.subr.bf16.mxu0 0
    %2252 = vmatpush2.bf16.xpose.msra.mxu0 0
    %2253 = vmatprep.subr.bf16.mxu0 0
    %2254 = vmatpush2.bf16.xpose.msra.mxu0 0
    %2255 = vmatprep.subr.bf16.mxu0 0
    %2256 = vmatpush2.bf16.xpose.msra.mxu0 0
    %2257 = vmatprep.subr.bf16.mxu0 0
    %2258 = vmatpush2.bf16.xpose.msra.mxu0 0
    %2259 = vmatprep.subr.bf16.mxu0 0
    %2260 = vmatpush2.bf16.xpose.msra.mxu0 0
    %2261 = vmatprep.subr.bf16.mxu0 0
    %2262 = vmatpush2.bf16.xpose.msra.mxu0 0
    %2263 = vmatprep.subr.bf16.mxu0 0
    %2264 = vmatpush2.bf16.xpose.msra.mxu0 0
    %2265 = vmatprep.subr.bf16.mxu0 0
    %2266 = vmatpush2.bf16.xpose.msra.mxu0 0
    %2267 = vmatprep.mubr.bf16.mxu0 0
    %2268 = vmatmul.mubr.bf16.gmra.mxu0 %v2211
    %v2269 = vpop.f32.mrf.mxu0
    %v2270 = vadd.f32 0.0, %v2269
    %v2271 = vpop.f32.mrf.mxu0
    %v2272 = vpop.f32.mrf.mxu0
    %v2273 = vadd.f32 0.0, %v2272
    %v2274 = vpop.f32.mrf.mxu0
    %2275 = vmatprep.mubr.bf16.mxu0 0
    %2276 = vmatmul.mubr.bf16.gmra.mxu0 %v2212
    %v2277 = vpop.f32.mrf.mxu0
    %v2278 = vadd.f32 0.0, %v2277
    %v2279 = vpop.f32.mrf.mxu0
    %v2280 = vpop.f32.mrf.mxu0
    %v2281 = vadd.f32 0.0, %v2280
    %v2282 = vpop.f32.mrf.mxu0
    %2283 = vmatprep.mubr.bf16.mxu0 0
    %2284 = vmatmul.mubr.bf16.gmra.mxu0 %v2213
    %v2285 = vpop.f32.mrf.mxu0
    %v2286 = vadd.f32 0.0, %v2285
    %v2287 = vpop.f32.mrf.mxu0
    %v2288 = vpop.f32.mrf.mxu0
    %v2289 = vadd.f32 0.0, %v2288
    %v2290 = vpop.f32.mrf.mxu0
    %2291 = vmatprep.mubr.bf16.mxu0 0
    %2292 = vmatmul.mubr.bf16.gmra.mxu0 %v2214
    %v2293 = vpop.f32.mrf.mxu0
    %v2294 = vadd.f32 0.0, %v2293
    %v2295 = vpop.f32.mrf.mxu0
    %v2296 = vpop.f32.mrf.mxu0
    %v2297 = vadd.f32 0.0, %v2296
    %v2298 = vpop.f32.mrf.mxu0
    %2299 = vmatprep.mubr.bf16.mxu0 0
    %2300 = vmatmul.mubr.bf16.gmra.mxu0 %v2215
    %v2301 = vpop.f32.mrf.mxu0
    %v2302 = vadd.f32 0.0, %v2301
    %v2303 = vpop.f32.mrf.mxu0
    %v2304 = vpop.f32.mrf.mxu0
    %v2305 = vadd.f32 0.0, %v2304
    %v2306 = vpop.f32.mrf.mxu0
    %2307 = vmatprep.mubr.bf16.mxu0 0
    %2308 = vmatmul.mubr.bf16.gmra.mxu0 %v2216
    %v2309 = vpop.f32.mrf.mxu0
    %v2310 = vadd.f32 0.0, %v2309
    %v2311 = vpop.f32.mrf.mxu0
    %v2312 = vpop.f32.mrf.mxu0
    %v2313 = vadd.f32 0.0, %v2312
    %v2314 = vpop.f32.mrf.mxu0
    %2315 = vmatprep.mubr.bf16.mxu0 0
    %2316 = vmatmul.mubr.bf16.gmra.mxu0 %v2217
    %v2317 = vpop.f32.mrf.mxu0
    %v2318 = vadd.f32 0.0, %v2317
    %v2319 = vpop.f32.mrf.mxu0
    %v2320 = vpop.f32.mrf.mxu0
    %v2321 = vadd.f32 0.0, %v2320
    %v2322 = vpop.f32.mrf.mxu0
    %2323 = vmatprep.mubr.bf16.mxu0 0
    %2324 = vmatmul.mubr.bf16.gmra.mxu0 %v2218
    %v2325 = vpop.f32.mrf.mxu0
    %v2326 = vadd.f32 0.0, %v2325
    %v2327 = vpop.f32.mrf.mxu0
    %v2328 = vpop.f32.mrf.mxu0
    %v2329 = vadd.f32 0.0, %v2328
    %v2330 = vpop.f32.mrf.mxu0
    %2331 = vdwg.mxu0
    %2332 = vmax.xlane.f32.xlu0 %v2270
    %v2333 = vpop.xlane.xlu0 %2332
    %2334 = vmax.xlane.f32.xlu0 %v2273
    %v2335 = vpop.xlane.xlu0 %2334
    %2336 = vmax.xlane.f32.xlu0 %v2278
    %v2337 = vpop.xlane.xlu0 %2336
    %2338 = vmax.xlane.f32.xlu0 %v2281
    %v2339 = vpop.xlane.xlu0 %2338
    %2340 = vmax.xlane.f32.xlu0 %v2286
    %v2341 = vpop.xlane.xlu0 %2340
    %2342 = vmax.xlane.f32.xlu0 %v2289
    %v2343 = vpop.xlane.xlu0 %2342
    %2344 = vmax.xlane.f32.xlu0 %v2294
    %v2345 = vpop.xlane.xlu0 %2344
    %2346 = vmax.xlane.f32.xlu0 %v2297
    %v2347 = vpop.xlane.xlu0 %2346
    %2348 = vmax.xlane.f32.xlu0 %v2302
    %v2349 = vpop.xlane.xlu0 %2348
    %2350 = vmax.xlane.f32.xlu0 %v2305
    %v2351 = vpop.xlane.xlu0 %2350
    %2352 = vmax.xlane.f32.xlu0 %v2310
    %v2353 = vpop.xlane.xlu0 %2352
    %2354 = vmax.xlane.f32.xlu0 %v2313
    %v2355 = vpop.xlane.xlu0 %2354
    %2356 = vmax.xlane.f32.xlu0 %v2318
    %v2357 = vpop.xlane.xlu0 %2356
    %2358 = vmax.xlane.f32.xlu0 %v2321
    %v2359 = vpop.xlane.xlu0 %2358
    %2360 = vmax.xlane.f32.xlu0 %v2326
    %v2361 = vpop.xlane.xlu0 %2360
    %2362 = vmax.xlane.f32.xlu0 %v2329
    %v2363 = vpop.xlane.xlu0 %2362
    %v2364 = vsub.f32 %v2270, %v2333
    %v2365 = vsub.f32 %v2273, %v2335
    %v2366 = vsub.f32 %v2278, %v2337
    %v2367 = vsub.f32 %v2281, %v2339
    %v2368 = vsub.f32 %v2286, %v2341
    %v2369 = vsub.f32 %v2289, %v2343
    %v2370 = vsub.f32 %v2294, %v2345
    %v2371 = vsub.f32 %v2297, %v2347
    %v2372 = vsub.f32 %v2302, %v2349
    %v2373 = vsub.f32 %v2305, %v2351
    %v2374 = vsub.f32 %v2310, %v2353
    %v2375 = vsub.f32 %v2313, %v2355
    %v2376 = vsub.f32 %v2318, %v2357
    %v2377 = vsub.f32 %v2321, %v2359
    %v2378 = vsub.f32 %v2326, %v2361
    %v2379 = vsub.f32 %v2329, %v2363
    %v2380 = vmul.f32 %v2364, 1.442695
    %v2381 = vpow.pop %v2380
    %v2382 = vmul.f32 %v2365, 1.442695
    %v2383 = vpow.pop %v2382
    %v2384 = vmul.f32 %v2366, 1.442695
    %v2385 = vpow.pop %v2384
    %v2386 = vmul.f32 %v2367, 1.442695
    %v2387 = vpow.pop %v2386
    %v2388 = vmul.f32 %v2368, 1.442695
    %v2389 = vpow.pop %v2388
    %v2390 = vmul.f32 %v2369, 1.442695
    %v2391 = vpow.pop %v2390
    %v2392 = vmul.f32 %v2370, 1.442695
    %v2393 = vpow.pop %v2392
    %v2394 = vmul.f32 %v2371, 1.442695
    %v2395 = vpow.pop %v2394
    %v2396 = vmul.f32 %v2372, 1.442695
    %v2397 = vpow.pop %v2396
    %v2398 = vmul.f32 %v2373, 1.442695
    %v2399 = vpow.pop %v2398
    %v2400 = vmul.f32 %v2374, 1.442695
    %v2401 = vpow.pop %v2400
    %v2402 = vmul.f32 %v2375, 1.442695
    %v2403 = vpow.pop %v2402
    %v2404 = vmul.f32 %v2376, 1.442695
    %v2405 = vpow.pop %v2404
    %v2406 = vmul.f32 %v2377, 1.442695
    %v2407 = vpow.pop %v2406
    %v2408 = vmul.f32 %v2378, 1.442695
    %v2409 = vpow.pop %v2408
    %v2410 = vmul.f32 %v2379, 1.442695
    %v2411 = vpow.pop %v2410
    %2412 = vadd.xlane.f32.xlu0 %v2381
    %v2413 = vpop.xlane.xlu0 %2412
    %2414 = vadd.xlane.f32.xlu0 %v2383
    %v2415 = vpop.xlane.xlu0 %2414
    %2416 = vadd.xlane.f32.xlu0 %v2385
    %v2417 = vpop.xlane.xlu0 %2416
    %2418 = vadd.xlane.f32.xlu0 %v2387
    %v2419 = vpop.xlane.xlu0 %2418
    %2420 = vadd.xlane.f32.xlu0 %v2389
    %v2421 = vpop.xlane.xlu0 %2420
    %2422 = vadd.xlane.f32.xlu0 %v2391
    %v2423 = vpop.xlane.xlu0 %2422
    %2424 = vadd.xlane.f32.xlu0 %v2393
    %v2425 = vpop.xlane.xlu0 %2424
    %2426 = vadd.xlane.f32.xlu0 %v2395
    %v2427 = vpop.xlane.xlu0 %2426
    %2428 = vadd.xlane.f32.xlu0 %v2397
    %v2429 = vpop.xlane.xlu0 %2428
    %2430 = vadd.xlane.f32.xlu0 %v2399
    %v2431 = vpop.xlane.xlu0 %2430
    %2432 = vadd.xlane.f32.xlu0 %v2401
    %v2433 = vpop.xlane.xlu0 %2432
    %2434 = vadd.xlane.f32.xlu0 %v2403
    %v2435 = vpop.xlane.xlu0 %2434
    %2436 = vadd.xlane.f32.xlu0 %v2405
    %v2437 = vpop.xlane.xlu0 %2436
    %2438 = vadd.xlane.f32.xlu0 %v2407
    %v2439 = vpop.xlane.xlu0 %2438
    %2440 = vadd.xlane.f32.xlu0 %v2409
    %v2441 = vpop.xlane.xlu0 %2440
    %2442 = vadd.xlane.f32.xlu0 %v2411
    %v2443 = vpop.xlane.xlu0 %2442
    %v2444 = vrcp.pop %v2413
    %v2445 = vrcp.pop %v2415
    %v2446 = vrcp.pop %v2417
    %v2447 = vrcp.pop %v2419
    %v2448 = vrcp.pop %v2421
    %v2449 = vrcp.pop %v2423
    %v2450 = vrcp.pop %v2425
    %v2451 = vrcp.pop %v2427
    %v2452 = vrcp.pop %v2429
    %v2453 = vrcp.pop %v2431
    %v2454 = vrcp.pop %v2433
    %v2455 = vrcp.pop %v2435
    %v2456 = vrcp.pop %v2437
    %v2457 = vrcp.pop %v2439
    %v2458 = vrcp.pop %v2441
    %v2459 = vrcp.pop %v2443
    %v2460 = vmul.f32 %v2381, %v2444
    %v2461 = vmul.f32 %v2383, %v2445
    %v2462 = vmul.f32 %v2385, %v2446
    %v2463 = vmul.f32 %v2387, %v2447
    %v2464 = vmul.f32 %v2389, %v2448
    %v2465 = vmul.f32 %v2391, %v2449
    %v2466 = vmul.f32 %v2393, %v2450
    %v2467 = vmul.f32 %v2395, %v2451
    %v2468 = vmul.f32 %v2397, %v2452
    %v2469 = vmul.f32 %v2399, %v2453
    %v2470 = vmul.f32 %v2401, %v2454
    %v2471 = vmul.f32 %v2403, %v2455
    %v2472 = vmul.f32 %v2405, %v2456
    %v2473 = vmul.f32 %v2407, %v2457
    %v2474 = vmul.f32 %v2409, %v2458
    %v2475 = vmul.f32 %v2411, %v2459
    %v2476 = vpack.c.bf16 %v2461, %v2460
    %v2477 = vpack.c.bf16 %v2463, %v2462
    %v2478 = vpack.c.bf16 %v2465, %v2464
    %v2479 = vpack.c.bf16 %v2467, %v2466
    %v2480 = vpack.c.bf16 %v2469, %v2468
    %v2481 = vpack.c.bf16 %v2471, %v2470
    %v2482 = vpack.c.bf16 %v2473, %v2472
    %v2483 = vpack.c.bf16 %v2475, %v2474
    %2484 = vmatprep.subr.bf16.mxu0 0
    %2485 = vmatpush1.bf16.msra.mxu0 %v2234
    %2486 = vmatprep.subr.bf16.mxu0 0
    %2487 = vmatpush1.bf16.msra.mxu0 %v2233
    %2488 = vmatprep.subr.bf16.mxu0 0
    %2489 = vmatpush1.bf16.msra.mxu0 %v2232
    %2490 = vmatprep.subr.bf16.mxu0 0
    %2491 = vmatpush1.bf16.msra.mxu0 %v2231
    %2492 = vmatprep.subr.bf16.mxu0 0
    %2493 = vmatpush1.bf16.msra.mxu0 %v2230
    %2494 = vmatprep.subr.bf16.mxu0 0
    %2495 = vmatpush1.bf16.msra.mxu0 %v2229
    %2496 = vmatprep.subr.bf16.mxu0 0
    %2497 = vmatpush1.bf16.msra.mxu0 %v2228
    %2498 = vmatprep.subr.bf16.mxu0 0
    %2499 = vmatpush1.bf16.msra.mxu0 %v2227
    %2500 = vmatprep.subr.bf16.mxu0 0
    %2501 = vmatpush2.bf16.msra.mxu0 0
    %2502 = vmatprep.subr.bf16.mxu0 0
    %2503 = vmatpush2.bf16.msra.mxu0 0
    %2504 = vmatprep.subr.bf16.mxu0 0
    %2505 = vmatpush2.bf16.msra.mxu0 0
    %2506 = vmatprep.subr.bf16.mxu0 0
    %2507 = vmatpush2.bf16.msra.mxu0 0
    %2508 = vmatprep.subr.bf16.mxu0 0
    %2509 = vmatpush2.bf16.msra.mxu0 0
    %2510 = vmatprep.subr.bf16.mxu0 0
    %2511 = vmatpush2.bf16.msra.mxu0 0
    %2512 = vmatprep.subr.bf16.mxu0 0
    %2513 = vmatpush2.bf16.msra.mxu0 0
    %2514 = vmatprep.subr.bf16.mxu0 0
    %2515 = vmatpush2.bf16.msra.mxu0 0
    %2516 = vmatprep.mubr.bf16.mxu0 0
    %2517 = vmatmul.mubr.bf16.gmra.mxu0 %v2476
    %v2518 = vpop.f32.mrf.mxu0
    %v2519 = vadd.f32 0.0, %v2518
    %v2520 = vpop.f32.mrf.mxu0
    %v2521 = vpop.f32.mrf.mxu0
    %v2522 = vadd.f32 0.0, %v2521
    %v2523 = vpop.f32.mrf.mxu0
    %2524 = vmatprep.mubr.bf16.mxu0 0
    %2525 = vmatmul.mubr.bf16.gmra.mxu0 %v2477
    %v2526 = vpop.f32.mrf.mxu0
    %v2527 = vadd.f32 0.0, %v2526
    %v2528 = vpop.f32.mrf.mxu0
    %v2529 = vpop.f32.mrf.mxu0
    %v2530 = vadd.f32 0.0, %v2529
    %v2531 = vpop.f32.mrf.mxu0
    %2532 = vmatprep.mubr.bf16.mxu0 0
    %2533 = vmatmul.mubr.bf16.gmra.mxu0 %v2478
    %v2534 = vpop.f32.mrf.mxu0
    %v2535 = vadd.f32 0.0, %v2534
    %v2536 = vpop.f32.mrf.mxu0
    %v2537 = vpop.f32.mrf.mxu0
    %v2538 = vadd.f32 0.0, %v2537
    %v2539 = vpop.f32.mrf.mxu0
    %2540 = vmatprep.mubr.bf16.mxu0 0
    %2541 = vmatmul.mubr.bf16.gmra.mxu0 %v2479
    %v2542 = vpop.f32.mrf.mxu0
    %v2543 = vadd.f32 0.0, %v2542
    %v2544 = vpop.f32.mrf.mxu0
    %v2545 = vpop.f32.mrf.mxu0
    %v2546 = vadd.f32 0.0, %v2545
    %v2547 = vpop.f32.mrf.mxu0
    %2548 = vmatprep.mubr.bf16.mxu0 0
    %2549 = vmatmul.mubr.bf16.gmra.mxu0 %v2480
    %v2550 = vpop.f32.mrf.mxu0
    %v2551 = vadd.f32 0.0, %v2550
    %v2552 = vpop.f32.mrf.mxu0
    %v2553 = vpop.f32.mrf.mxu0
    %v2554 = vadd.f32 0.0, %v2553
    %v2555 = vpop.f32.mrf.mxu0
    %2556 = vmatprep.mubr.bf16.mxu0 0
    %2557 = vmatmul.mubr.bf16.gmra.mxu0 %v2481
    %v2558 = vpop.f32.mrf.mxu0
    %v2559 = vadd.f32 0.0, %v2558
    %v2560 = vpop.f32.mrf.mxu0
    %v2561 = vpop.f32.mrf.mxu0
    %v2562 = vadd.f32 0.0, %v2561
    %v2563 = vpop.f32.mrf.mxu0
    %2564 = vmatprep.mubr.bf16.mxu0 0
    %2565 = vmatmul.mubr.bf16.gmra.mxu0 %v2482
    %v2566 = vpop.f32.mrf.mxu0
    %v2567 = vadd.f32 0.0, %v2566
    %v2568 = vpop.f32.mrf.mxu0
    %v2569 = vpop.f32.mrf.mxu0
    %v2570 = vadd.f32 0.0, %v2569
    %v2571 = vpop.f32.mrf.mxu0
    %2572 = vmatprep.mubr.bf16.mxu0 0
    %2573 = vmatmul.mubr.bf16.gmra.mxu0 %v2483
    %v2574 = vpop.f32.mrf.mxu0
    %v2575 = vadd.f32 0.0, %v2574
    %v2576 = vpop.f32.mrf.mxu0
    %v2577 = vpop.f32.mrf.mxu0
    %v2578 = vadd.f32 0.0, %v2577
    %v2579 = vpop.f32.mrf.mxu0
    %2580 = vdwg.mxu0
    %v2581 = vpack.c.bf16 %v2522, %v2519
    %v2582 = vpack.c.bf16 %v2530, %v2527
    %v2583 = vpack.c.bf16 %v2538, %v2535
    %v2584 = vpack.c.bf16 %v2546, %v2543
    %v2585 = vpack.c.bf16 %v2554, %v2551
    %v2586 = vpack.c.bf16 %v2562, %v2559
    %v2587 = vpack.c.bf16 %v2570, %v2567
    %v2588 = vpack.c.bf16 %v2578, %v2575
    %v2597 = vunpack.c.l.b16 %v2581
    %v2598 = vunpack.c.h.b16 %v2581
    %v2599 = vunpack.c.l.b16 %v2582
    %v2600 = vunpack.c.h.b16 %v2582
    %v2601 = vunpack.c.l.b16 %v2583
    %v2602 = vunpack.c.h.b16 %v2583
    %v2603 = vunpack.c.l.b16 %v2584
    %v2604 = vunpack.c.h.b16 %v2584
    %v2605 = vunpack.c.l.b16 %v2585
    %v2606 = vunpack.c.h.b16 %v2585
    %v2607 = vunpack.c.l.b16 %v2586
    %v2608 = vunpack.c.h.b16 %v2586
    %v2609 = vunpack.c.l.b16 %v2587
    %v2610 = vunpack.c.h.b16 %v2587
    %v2611 = vunpack.c.l.b16 %v2588
    %v2612 = vunpack.c.h.b16 %v2588
    %v2613 = vpack.c.b16 %v2597, %v2597
    %v2614 = vpack.c.b16 %v2598, %v2598
    %v2615 = vpack.c.b16 %v2599, %v2599
    %v2616 = vpack.c.b16 %v2600, %v2600
    %v2617 = vpack.c.b16 %v2601, %v2601
    %v2618 = vpack.c.b16 %v2602, %v2602
    %v2619 = vpack.c.b16 %v2603, %v2603
    %v2620 = vpack.c.b16 %v2604, %v2604
    %v2621 = vpack.c.b16 %v2605, %v2605
    %v2622 = vpack.c.b16 %v2606, %v2606
    %v2623 = vpack.c.b16 %v2607, %v2607
    %v2624 = vpack.c.b16 %v2608, %v2608
    %v2625 = vpack.c.b16 %v2609, %v2609
    %v2626 = vpack.c.b16 %v2610, %v2610
    %v2627 = vpack.c.b16 %v2611, %v2611
    %v2628 = vpack.c.b16 %v2612, %v2612
    %2645 = vst [vmem:[#allocation2 + $0x80] sm:$0xf] %v2613
    %2646 = vst [vmem:[#allocation2 + $0x88] sm:$0xf] %v2614
    %2647 = vst [vmem:[#allocation2 + $0x90] sm:$0xf] %v2615
    %2648 = vst [vmem:[#allocation2 + $0x98] sm:$0xf] %v2616
    %2649 = vst [vmem:[#allocation2 + $0xa0] sm:$0xf] %v2617
    %2650 = vst [vmem:[#allocation2 + $0xa8] sm:$0xf] %v2618
    %2651 = vst [vmem:[#allocation2 + $0xb0] sm:$0xf] %v2619
    %2652 = vst [vmem:[#allocation2 + $0xb8] sm:$0xf] %v2620
    %2653 = vst [vmem:[#allocation2 + $0xc0] sm:$0xf] %v2621
    %2654 = vst [vmem:[#allocation2 + $0xc8] sm:$0xf] %v2622
    %2655 = vst [vmem:[#allocation2 + $0xd0] sm:$0xf] %v2623
    %2656 = vst [vmem:[#allocation2 + $0xd8] sm:$0xf] %v2624
    %2657 = vst [vmem:[#allocation2 + $0xe0] sm:$0xf] %v2625
    %2658 = vst [vmem:[#allocation2 + $0xe8] sm:$0xf] %v2626
    %2659 = vst [vmem:[#allocation2 + $0xf0] sm:$0xf] %v2627
    %2660 = vst [vmem:[#allocation2 + $0xf8] sm:$0xf] %v2628
    %v2661 = vpack.c.bf16 %v853, %v849
    %v2662 = vpack.c.bf16 %v863, %v859
    %v2663 = vpack.c.bf16 %v873, %v869
    %v2664 = vpack.c.bf16 %v883, %v879
    %v2665 = vpack.c.bf16 %v893, %v889
    %v2666 = vpack.c.bf16 %v903, %v899
    %v2667 = vpack.c.bf16 %v913, %v909
    %v2668 = vpack.c.bf16 %v923, %v919
    %v2669 = vpack.c.bf16 %v1046, %v1042
    %v2670 = vpack.c.bf16 %v1056, %v1052
    %v2671 = vpack.c.bf16 %v1066, %v1062
    %v2672 = vpack.c.bf16 %v1076, %v1072
    %v2673 = vpack.c.bf16 %v1086, %v1082
    %v2674 = vpack.c.bf16 %v1096, %v1092
    %v2675 = vpack.c.bf16 %v1106, %v1102
    %v2676 = vpack.c.bf16 %v1116, %v1112
    %v2677 = vpack.c.bf16 %v1239, %v1235
    %v2678 = vpack.c.bf16 %v1249, %v1245
    %v2679 = vpack.c.bf16 %v1259, %v1255
    %v2680 = vpack.c.bf16 %v1269, %v1265
    %v2681 = vpack.c.bf16 %v1279, %v1275
    %v2682 = vpack.c.bf16 %v1289, %v1285
    %v2683 = vpack.c.bf16 %v1299, %v1295
    %v2684 = vpack.c.bf16 %v1309, %v1305
    %2685 = vmatprep.subr.bf16.mxu0 0
    %2686 = vmatpush1.bf16.xpose.msra.mxu0 %v2676
    %2687 = vmatprep.subr.bf16.mxu0 0
    %2688 = vmatpush1.bf16.xpose.msra.mxu0 %v2675
    %2689 = vmatprep.subr.bf16.mxu0 0
    %2690 = vmatpush1.bf16.xpose.msra.mxu0 %v2674
    %2691 = vmatprep.subr.bf16.mxu0 0
    %2692 = vmatpush1.bf16.xpose.msra.mxu0 %v2673
    %2693 = vmatprep.subr.bf16.mxu0 0
    %2694 = vmatpush1.bf16.xpose.msra.mxu0 %v2672
    %2695 = vmatprep.subr.bf16.mxu0 0
    %2696 = vmatpush1.bf16.xpose.msra.mxu0 %v2671
    %2697 = vmatprep.subr.bf16.mxu0 0
    %2698 = vmatpush1.bf16.xpose.msra.mxu0 %v2670
    %2699 = vmatprep.subr.bf16.mxu0 0
    %2700 = vmatpush1.bf16.xpose.msra.mxu0 %v2669
    %2701 = vmatprep.subr.bf16.mxu0 0
    %2702 = vmatpush2.bf16.xpose.msra.mxu0 0
    %2703 = vmatprep.subr.bf16.mxu0 0
    %2704 = vmatpush2.bf16.xpose.msra.mxu0 0
    %2705 = vmatprep.subr.bf16.mxu0 0
    %2706 = vmatpush2.bf16.xpose.msra.mxu0 0
    %2707 = vmatprep.subr.bf16.mxu0 0
    %2708 = vmatpush2.bf16.xpose.msra.mxu0 0
    %2709 = vmatprep.subr.bf16.mxu0 0
    %2710 = vmatpush2.bf16.xpose.msra.mxu0 0
    %2711 = vmatprep.subr.bf16.mxu0 0
    %2712 = vmatpush2.bf16.xpose.msra.mxu0 0
    %2713 = vmatprep.subr.bf16.mxu0 0
    %2714 = vmatpush2.bf16.xpose.msra.mxu0 0
    %2715 = vmatprep.subr.bf16.mxu0 0
    %2716 = vmatpush2.bf16.xpose.msra.mxu0 0
    %2717 = vmatprep.mubr.bf16.mxu0 0
    %2718 = vmatmul.mubr.bf16.gmra.mxu0 %v2661
    %v2719 = vpop.f32.mrf.mxu0
    %v2720 = vadd.f32 0.0, %v2719
    %v2721 = vpop.f32.mrf.mxu0
    %v2722 = vpop.f32.mrf.mxu0
    %v2723 = vadd.f32 0.0, %v2722
    %v2724 = vpop.f32.mrf.mxu0
    %2725 = vmatprep.mubr.bf16.mxu0 0
    %2726 = vmatmul.mubr.bf16.gmra.mxu0 %v2662
    %v2727 = vpop.f32.mrf.mxu0
    %v2728 = vadd.f32 0.0, %v2727
    %v2729 = vpop.f32.mrf.mxu0
    %v2730 = vpop.f32.mrf.mxu0
    %v2731 = vadd.f32 0.0, %v2730
    %v2732 = vpop.f32.mrf.mxu0
    %2733 = vmatprep.mubr.bf16.mxu0 0
    %2734 = vmatmul.mubr.bf16.gmra.mxu0 %v2663
    %v2735 = vpop.f32.mrf.mxu0
    %v2736 = vadd.f32 0.0, %v2735
    %v2737 = vpop.f32.mrf.mxu0
    %v2738 = vpop.f32.mrf.mxu0
    %v2739 = vadd.f32 0.0, %v2738
    %v2740 = vpop.f32.mrf.mxu0
    %2741 = vmatprep.mubr.bf16.mxu0 0
    %2742 = vmatmul.mubr.bf16.gmra.mxu0 %v2664
    %v2743 = vpop.f32.mrf.mxu0
    %v2744 = vadd.f32 0.0, %v2743
    %v2745 = vpop.f32.mrf.mxu0
    %v2746 = vpop.f32.mrf.mxu0
    %v2747 = vadd.f32 0.0, %v2746
    %v2748 = vpop.f32.mrf.mxu0
    %2749 = vmatprep.mubr.bf16.mxu0 0
    %2750 = vmatmul.mubr.bf16.gmra.mxu0 %v2665
    %v2751 = vpop.f32.mrf.mxu0
    %v2752 = vadd.f32 0.0, %v2751
    %v2753 = vpop.f32.mrf.mxu0
    %v2754 = vpop.f32.mrf.mxu0
    %v2755 = vadd.f32 0.0, %v2754
    %v2756 = vpop.f32.mrf.mxu0
    %2757 = vmatprep.mubr.bf16.mxu0 0
    %2758 = vmatmul.mubr.bf16.gmra.mxu0 %v2666
    %v2759 = vpop.f32.mrf.mxu0
    %v2760 = vadd.f32 0.0, %v2759
    %v2761 = vpop.f32.mrf.mxu0
    %v2762 = vpop.f32.mrf.mxu0
    %v2763 = vadd.f32 0.0, %v2762
    %v2764 = vpop.f32.mrf.mxu0
    %2765 = vmatprep.mubr.bf16.mxu0 0
    %2766 = vmatmul.mubr.bf16.gmra.mxu0 %v2667
    %v2767 = vpop.f32.mrf.mxu0
    %v2768 = vadd.f32 0.0, %v2767
    %v2769 = vpop.f32.mrf.mxu0
    %v2770 = vpop.f32.mrf.mxu0
    %v2771 = vadd.f32 0.0, %v2770
    %v2772 = vpop.f32.mrf.mxu0
    %2773 = vmatprep.mubr.bf16.mxu0 0
    %2774 = vmatmul.mubr.bf16.gmra.mxu0 %v2668
    %v2775 = vpop.f32.mrf.mxu0
    %v2776 = vadd.f32 0.0, %v2775
    %v2777 = vpop.f32.mrf.mxu0
    %v2778 = vpop.f32.mrf.mxu0
    %v2779 = vadd.f32 0.0, %v2778
    %v2780 = vpop.f32.mrf.mxu0
    %2781 = vdwg.mxu0
    %2782 = vmax.xlane.f32.xlu0 %v2720
    %v2783 = vpop.xlane.xlu0 %2782
    %2784 = vmax.xlane.f32.xlu0 %v2723
    %v2785 = vpop.xlane.xlu0 %2784
    %2786 = vmax.xlane.f32.xlu0 %v2728
    %v2787 = vpop.xlane.xlu0 %2786
    %2788 = vmax.xlane.f32.xlu0 %v2731
    %v2789 = vpop.xlane.xlu0 %2788
    %2790 = vmax.xlane.f32.xlu0 %v2736
    %v2791 = vpop.xlane.xlu0 %2790
    %2792 = vmax.xlane.f32.xlu0 %v2739
    %v2793 = vpop.xlane.xlu0 %2792
    %2794 = vmax.xlane.f32.xlu0 %v2744
    %v2795 = vpop.xlane.xlu0 %2794
    %2796 = vmax.xlane.f32.xlu0 %v2747
    %v2797 = vpop.xlane.xlu0 %2796
    %2798 = vmax.xlane.f32.xlu0 %v2752
    %v2799 = vpop.xlane.xlu0 %2798
    %2800 = vmax.xlane.f32.xlu0 %v2755
    %v2801 = vpop.xlane.xlu0 %2800
    %2802 = vmax.xlane.f32.xlu0 %v2760
    %v2803 = vpop.xlane.xlu0 %2802
    %2804 = vmax.xlane.f32.xlu0 %v2763
    %v2805 = vpop.xlane.xlu0 %2804
    %2806 = vmax.xlane.f32.xlu0 %v2768
    %v2807 = vpop.xlane.xlu0 %2806
    %2808 = vmax.xlane.f32.xlu0 %v2771
    %v2809 = vpop.xlane.xlu0 %2808
    %2810 = vmax.xlane.f32.xlu0 %v2776
    %v2811 = vpop.xlane.xlu0 %2810
    %2812 = vmax.xlane.f32.xlu0 %v2779
    %v2813 = vpop.xlane.xlu0 %2812
    %v2814 = vsub.f32 %v2720, %v2783
    %v2815 = vsub.f32 %v2723, %v2785
    %v2816 = vsub.f32 %v2728, %v2787
    %v2817 = vsub.f32 %v2731, %v2789
    %v2818 = vsub.f32 %v2736, %v2791
    %v2819 = vsub.f32 %v2739, %v2793
    %v2820 = vsub.f32 %v2744, %v2795
    %v2821 = vsub.f32 %v2747, %v2797
    %v2822 = vsub.f32 %v2752, %v2799
    %v2823 = vsub.f32 %v2755, %v2801
    %v2824 = vsub.f32 %v2760, %v2803
    %v2825 = vsub.f32 %v2763, %v2805
    %v2826 = vsub.f32 %v2768, %v2807
    %v2827 = vsub.f32 %v2771, %v2809
    %v2828 = vsub.f32 %v2776, %v2811
    %v2829 = vsub.f32 %v2779, %v2813
    %v2830 = vmul.f32 %v2814, 1.442695
    %v2831 = vpow.pop %v2830
    %v2832 = vmul.f32 %v2815, 1.442695
    %v2833 = vpow.pop %v2832
    %v2834 = vmul.f32 %v2816, 1.442695
    %v2835 = vpow.pop %v2834
    %v2836 = vmul.f32 %v2817, 1.442695
    %v2837 = vpow.pop %v2836
    %v2838 = vmul.f32 %v2818, 1.442695
    %v2839 = vpow.pop %v2838
    %v2840 = vmul.f32 %v2819, 1.442695
    %v2841 = vpow.pop %v2840
    %v2842 = vmul.f32 %v2820, 1.442695
    %v2843 = vpow.pop %v2842
    %v2844 = vmul.f32 %v2821, 1.442695
    %v2845 = vpow.pop %v2844
    %v2846 = vmul.f32 %v2822, 1.442695
    %v2847 = vpow.pop %v2846
    %v2848 = vmul.f32 %v2823, 1.442695
    %v2849 = vpow.pop %v2848
    %v2850 = vmul.f32 %v2824, 1.442695
    %v2851 = vpow.pop %v2850
    %v2852 = vmul.f32 %v2825, 1.442695
    %v2853 = vpow.pop %v2852
    %v2854 = vmul.f32 %v2826, 1.442695
    %v2855 = vpow.pop %v2854
    %v2856 = vmul.f32 %v2827, 1.442695
    %v2857 = vpow.pop %v2856
    %v2858 = vmul.f32 %v2828, 1.442695
    %v2859 = vpow.pop %v2858
    %v2860 = vmul.f32 %v2829, 1.442695
    %v2861 = vpow.pop %v2860
    %2862 = vadd.xlane.f32.xlu0 %v2831
    %v2863 = vpop.xlane.xlu0 %2862
    %2864 = vadd.xlane.f32.xlu0 %v2833
    %v2865 = vpop.xlane.xlu0 %2864
    %2866 = vadd.xlane.f32.xlu0 %v2835
    %v2867 = vpop.xlane.xlu0 %2866
    %2868 = vadd.xlane.f32.xlu0 %v2837
    %v2869 = vpop.xlane.xlu0 %2868
    %2870 = vadd.xlane.f32.xlu0 %v2839
    %v2871 = vpop.xlane.xlu0 %2870
    %2872 = vadd.xlane.f32.xlu0 %v2841
    %v2873 = vpop.xlane.xlu0 %2872
    %2874 = vadd.xlane.f32.xlu0 %v2843
    %v2875 = vpop.xlane.xlu0 %2874
    %2876 = vadd.xlane.f32.xlu0 %v2845
    %v2877 = vpop.xlane.xlu0 %2876
    %2878 = vadd.xlane.f32.xlu0 %v2847
    %v2879 = vpop.xlane.xlu0 %2878
    %2880 = vadd.xlane.f32.xlu0 %v2849
    %v2881 = vpop.xlane.xlu0 %2880
    %2882 = vadd.xlane.f32.xlu0 %v2851
    %v2883 = vpop.xlane.xlu0 %2882
    %2884 = vadd.xlane.f32.xlu0 %v2853
    %v2885 = vpop.xlane.xlu0 %2884
    %2886 = vadd.xlane.f32.xlu0 %v2855
    %v2887 = vpop.xlane.xlu0 %2886
    %2888 = vadd.xlane.f32.xlu0 %v2857
    %v2889 = vpop.xlane.xlu0 %2888
    %2890 = vadd.xlane.f32.xlu0 %v2859
    %v2891 = vpop.xlane.xlu0 %2890
    %2892 = vadd.xlane.f32.xlu0 %v2861
    %v2893 = vpop.xlane.xlu0 %2892
    %v2894 = vrcp.pop %v2863
    %v2895 = vrcp.pop %v2865
    %v2896 = vrcp.pop %v2867
    %v2897 = vrcp.pop %v2869
    %v2898 = vrcp.pop %v2871
    %v2899 = vrcp.pop %v2873
    %v2900 = vrcp.pop %v2875
    %v2901 = vrcp.pop %v2877
    %v2902 = vrcp.pop %v2879
    %v2903 = vrcp.pop %v2881
    %v2904 = vrcp.pop %v2883
    %v2905 = vrcp.pop %v2885
    %v2906 = vrcp.pop %v2887
    %v2907 = vrcp.pop %v2889
    %v2908 = vrcp.pop %v2891
    %v2909 = vrcp.pop %v2893
    %v2910 = vmul.f32 %v2831, %v2894
    %v2911 = vmul.f32 %v2833, %v2895
    %v2912 = vmul.f32 %v2835, %v2896
    %v2913 = vmul.f32 %v2837, %v2897
    %v2914 = vmul.f32 %v2839, %v2898
    %v2915 = vmul.f32 %v2841, %v2899
    %v2916 = vmul.f32 %v2843, %v2900
    %v2917 = vmul.f32 %v2845, %v2901
    %v2918 = vmul.f32 %v2847, %v2902
    %v2919 = vmul.f32 %v2849, %v2903
    %v2920 = vmul.f32 %v2851, %v2904
    %v2921 = vmul.f32 %v2853, %v2905
    %v2922 = vmul.f32 %v2855, %v2906
    %v2923 = vmul.f32 %v2857, %v2907
    %v2924 = vmul.f32 %v2859, %v2908
    %v2925 = vmul.f32 %v2861, %v2909
    %v2926 = vpack.c.bf16 %v2911, %v2910
    %v2927 = vpack.c.bf16 %v2913, %v2912
    %v2928 = vpack.c.bf16 %v2915, %v2914
    %v2929 = vpack.c.bf16 %v2917, %v2916
    %v2930 = vpack.c.bf16 %v2919, %v2918
    %v2931 = vpack.c.bf16 %v2921, %v2920
    %v2932 = vpack.c.bf16 %v2923, %v2922
    %v2933 = vpack.c.bf16 %v2925, %v2924
    %2934 = vmatprep.subr.bf16.mxu0 0
    %2935 = vmatpush1.bf16.msra.mxu0 %v2684
    %2936 = vmatprep.subr.bf16.mxu0 0
    %2937 = vmatpush1.bf16.msra.mxu0 %v2683
    %2938 = vmatprep.subr.bf16.mxu0 0
    %2939 = vmatpush1.bf16.msra.mxu0 %v2682
    %2940 = vmatprep.subr.bf16.mxu0 0
    %2941 = vmatpush1.bf16.msra.mxu0 %v2681
    %2942 = vmatprep.subr.bf16.mxu0 0
    %2943 = vmatpush1.bf16.msra.mxu0 %v2680
    %2944 = vmatprep.subr.bf16.mxu0 0
    %2945 = vmatpush1.bf16.msra.mxu0 %v2679
    %2946 = vmatprep.subr.bf16.mxu0 0
    %2947 = vmatpush1.bf16.msra.mxu0 %v2678
    %2948 = vmatprep.subr.bf16.mxu0 0
    %2949 = vmatpush1.bf16.msra.mxu0 %v2677
    %2950 = vmatprep.subr.bf16.mxu0 0
    %2951 = vmatpush2.bf16.msra.mxu0 0
    %2952 = vmatprep.subr.bf16.mxu0 0
    %2953 = vmatpush2.bf16.msra.mxu0 0
    %2954 = vmatprep.subr.bf16.mxu0 0
    %2955 = vmatpush2.bf16.msra.mxu0 0
    %2956 = vmatprep.subr.bf16.mxu0 0
    %2957 = vmatpush2.bf16.msra.mxu0 0
    %2958 = vmatprep.subr.bf16.mxu0 0
    %2959 = vmatpush2.bf16.msra.mxu0 0
    %2960 = vmatprep.subr.bf16.mxu0 0
    %2961 = vmatpush2.bf16.msra.mxu0 0
    %2962 = vmatprep.subr.bf16.mxu0 0
    %2963 = vmatpush2.bf16.msra.mxu0 0
    %2964 = vmatprep.subr.bf16.mxu0 0
    %2965 = vmatpush2.bf16.msra.mxu0 0
    %2966 = vmatprep.mubr.bf16.mxu0 0
    %2967 = vmatmul.mubr.bf16.gmra.mxu0 %v2926
    %v2968 = vpop.f32.mrf.mxu0
    %v2969 = vadd.f32 0.0, %v2968
    %v2970 = vpop.f32.mrf.mxu0
    %v2971 = vpop.f32.mrf.mxu0
    %v2972 = vadd.f32 0.0, %v2971
    %v2973 = vpop.f32.mrf.mxu0
    %2974 = vmatprep.mubr.bf16.mxu0 0
    %2975 = vmatmul.mubr.bf16.gmra.mxu0 %v2927
    %v2976 = vpop.f32.mrf.mxu0
    %v2977 = vadd.f32 0.0, %v2976
    %v2978 = vpop.f32.mrf.mxu0
    %v2979 = vpop.f32.mrf.mxu0
    %v2980 = vadd.f32 0.0, %v2979
    %v2981 = vpop.f32.mrf.mxu0
    %2982 = vmatprep.mubr.bf16.mxu0 0
    %2983 = vmatmul.mubr.bf16.gmra.mxu0 %v2928
    %v2984 = vpop.f32.mrf.mxu0
    %v2985 = vadd.f32 0.0, %v2984
    %v2986 = vpop.f32.mrf.mxu0
    %v2987 = vpop.f32.mrf.mxu0
    %v2988 = vadd.f32 0.0, %v2987
    %v2989 = vpop.f32.mrf.mxu0
    %2990 = vmatprep.mubr.bf16.mxu0 0
    %2991 = vmatmul.mubr.bf16.gmra.mxu0 %v2929
    %v2992 = vpop.f32.mrf.mxu0
    %v2993 = vadd.f32 0.0, %v2992
    %v2994 = vpop.f32.mrf.mxu0
    %v2995 = vpop.f32.mrf.mxu0
    %v2996 = vadd.f32 0.0, %v2995
    %v2997 = vpop.f32.mrf.mxu0
    %2998 = vmatprep.mubr.bf16.mxu0 0
    %2999 = vmatmul.mubr.bf16.gmra.mxu0 %v2930
    %v3000 = vpop.f32.mrf.mxu0
    %v3001 = vadd.f32 0.0, %v3000
    %v3002 = vpop.f32.mrf.mxu0
    %v3003 = vpop.f32.mrf.mxu0
    %v3004 = vadd.f32 0.0, %v3003
    %v3005 = vpop.f32.mrf.mxu0
    %3006 = vmatprep.mubr.bf16.mxu0 0
    %3007 = vmatmul.mubr.bf16.gmra.mxu0 %v2931
    %v3008 = vpop.f32.mrf.mxu0
    %v3009 = vadd.f32 0.0, %v3008
    %v3010 = vpop.f32.mrf.mxu0
    %v3011 = vpop.f32.mrf.mxu0
    %v3012 = vadd.f32 0.0, %v3011
    %v3013 = vpop.f32.mrf.mxu0
    %3014 = vmatprep.mubr.bf16.mxu0 0
    %3015 = vmatmul.mubr.bf16.gmra.mxu0 %v2932
    %v3016 = vpop.f32.mrf.mxu0
    %v3017 = vadd.f32 0.0, %v3016
    %v3018 = vpop.f32.mrf.mxu0
    %v3019 = vpop.f32.mrf.mxu0
    %v3020 = vadd.f32 0.0, %v3019
    %v3021 = vpop.f32.mrf.mxu0
    %3022 = vmatprep.mubr.bf16.mxu0 0
    %3023 = vmatmul.mubr.bf16.gmra.mxu0 %v2933
    %v3024 = vpop.f32.mrf.mxu0
    %v3025 = vadd.f32 0.0, %v3024
    %v3026 = vpop.f32.mrf.mxu0
    %v3027 = vpop.f32.mrf.mxu0
    %v3028 = vadd.f32 0.0, %v3027
    %v3029 = vpop.f32.mrf.mxu0
    %3030 = vdwg.mxu0
    %v3031 = vpack.c.bf16 %v2972, %v2969
    %v3032 = vpack.c.bf16 %v2980, %v2977
    %v3033 = vpack.c.bf16 %v2988, %v2985
    %v3034 = vpack.c.bf16 %v2996, %v2993
    %v3035 = vpack.c.bf16 %v3004, %v3001
    %v3036 = vpack.c.bf16 %v3012, %v3009
    %v3037 = vpack.c.bf16 %v3020, %v3017
    %v3038 = vpack.c.bf16 %v3028, %v3025
    %v3047 = vunpack.c.l.b16 %v3031
    %v3048 = vunpack.c.h.b16 %v3031
    %v3049 = vunpack.c.l.b16 %v3032
    %v3050 = vunpack.c.h.b16 %v3032
    %v3051 = vunpack.c.l.b16 %v3033
    %v3052 = vunpack.c.h.b16 %v3033
    %v3053 = vunpack.c.l.b16 %v3034
    %v3054 = vunpack.c.h.b16 %v3034
    %v3055 = vunpack.c.l.b16 %v3035
    %v3056 = vunpack.c.h.b16 %v3035
    %v3057 = vunpack.c.l.b16 %v3036
    %v3058 = vunpack.c.h.b16 %v3036
    %v3059 = vunpack.c.l.b16 %v3037
    %v3060 = vunpack.c.h.b16 %v3037
    %v3061 = vunpack.c.l.b16 %v3038
    %v3062 = vunpack.c.h.b16 %v3038
    %v3063 = vpack.c.b16 %v3047, %v3047
    %v3064 = vpack.c.b16 %v3048, %v3048
    %v3065 = vpack.c.b16 %v3049, %v3049
    %v3066 = vpack.c.b16 %v3050, %v3050
    %v3067 = vpack.c.b16 %v3051, %v3051
    %v3068 = vpack.c.b16 %v3052, %v3052
    %v3069 = vpack.c.b16 %v3053, %v3053
    %v3070 = vpack.c.b16 %v3054, %v3054
    %v3071 = vpack.c.b16 %v3055, %v3055
    %v3072 = vpack.c.b16 %v3056, %v3056
    %v3073 = vpack.c.b16 %v3057, %v3057
    %v3074 = vpack.c.b16 %v3058, %v3058
    %v3075 = vpack.c.b16 %v3059, %v3059
    %v3076 = vpack.c.b16 %v3060, %v3060
    %v3077 = vpack.c.b16 %v3061, %v3061
    %v3078 = vpack.c.b16 %v3062, %v3062
    %3095 = vst [vmem:[#allocation2 + $0x84] sm:$0xf] %v3063
    %3096 = vst [vmem:[#allocation2 + $0x8c] sm:$0xf] %v3064
    %3097 = vst [vmem:[#allocation2 + $0x94] sm:$0xf] %v3065
    %3098 = vst [vmem:[#allocation2 + $0x9c] sm:$0xf] %v3066
    %3099 = vst [vmem:[#allocation2 + $0xa4] sm:$0xf] %v3067
    %3100 = vst [vmem:[#allocation2 + $0xac] sm:$0xf] %v3068
    %3101 = vst [vmem:[#allocation2 + $0xb4] sm:$0xf] %v3069
    %3102 = vst [vmem:[#allocation2 + $0xbc] sm:$0xf] %v3070
    %3103 = vst [vmem:[#allocation2 + $0xc4] sm:$0xf] %v3071
    %3104 = vst [vmem:[#allocation2 + $0xcc] sm:$0xf] %v3072
    %3105 = vst [vmem:[#allocation2 + $0xd4] sm:$0xf] %v3073
    %3106 = vst [vmem:[#allocation2 + $0xdc] sm:$0xf] %v3074
    %3107 = vst [vmem:[#allocation2 + $0xe4] sm:$0xf] %v3075
    %3108 = vst [vmem:[#allocation2 + $0xec] sm:$0xf] %v3076
    %3109 = vst [vmem:[#allocation2 + $0xf4] sm:$0xf] %v3077
    %3110 = vst [vmem:[#allocation2 + $0xfc] sm:$0xf] %v3078
    %v3111 = vld [vmem:[#allocation2] sm:$0xff]
    %v3112 = vld [vmem:[#allocation2 + $0x8] sm:$0xff]
    %v3113 = vld [vmem:[#allocation2 + $0x10] sm:$0xff]
    %v3114 = vld [vmem:[#allocation2 + $0x18] sm:$0xff]
    %v3115 = vld [vmem:[#allocation2 + $0x20] sm:$0xff]
    %v3116 = vld [vmem:[#allocation2 + $0x28] sm:$0xff]
    %v3117 = vld [vmem:[#allocation2 + $0x30] sm:$0xff]
    %v3118 = vld [vmem:[#allocation2 + $0x38] sm:$0xff]
    %v3119 = vld [vmem:[#allocation2 + $0x40] sm:$0xff]
    %v3120 = vld [vmem:[#allocation2 + $0x48] sm:$0xff]
    %v3121 = vld [vmem:[#allocation2 + $0x50] sm:$0xff]
    %v3122 = vld [vmem:[#allocation2 + $0x58] sm:$0xff]
    %v3123 = vld [vmem:[#allocation2 + $0x60] sm:$0xff]
    %v3124 = vld [vmem:[#allocation2 + $0x68] sm:$0xff]
    %v3125 = vld [vmem:[#allocation2 + $0x70] sm:$0xff]
    %v3126 = vld [vmem:[#allocation2 + $0x78] sm:$0xff]
    %v3127 = vld [vmem:[#allocation2 + $0x80] sm:$0xff]
    %v3128 = vld [vmem:[#allocation2 + $0x88] sm:$0xff]
    %v3129 = vld [vmem:[#allocation2 + $0x90] sm:$0xff]
    %v3130 = vld [vmem:[#allocation2 + $0x98] sm:$0xff]
    %v3131 = vld [vmem:[#allocation2 + $0xa0] sm:$0xff]
    %v3132 = vld [vmem:[#allocation2 + $0xa8] sm:$0xff]
    %v3133 = vld [vmem:[#allocation2 + $0xb0] sm:$0xff]
    %v3134 = vld [vmem:[#allocation2 + $0xb8] sm:$0xff]
    %v3135 = vld [vmem:[#allocation2 + $0xc0] sm:$0xff]
    %v3136 = vld [vmem:[#allocation2 + $0xc8] sm:$0xff]
    %v3137 = vld [vmem:[#allocation2 + $0xd0] sm:$0xff]
    %v3138 = vld [vmem:[#allocation2 + $0xd8] sm:$0xff]
    %v3139 = vld [vmem:[#allocation2 + $0xe0] sm:$0xff]
    %v3140 = vld [vmem:[#allocation2 + $0xe8] sm:$0xff]
    %v3141 = vld [vmem:[#allocation2 + $0xf0] sm:$0xff]
    %v3142 = vld [vmem:[#allocation2 + $0xf8] sm:$0xff]
    %v3143 = vld [vmem:[#allocation8] sm:$0xff]
    %v3144 = vld [vmem:[#allocation8 + $0x8] sm:$0xff]
    %v3145 = vld [vmem:[#allocation8 + $0x10] sm:$0xff]
    %v3146 = vld [vmem:[#allocation8 + $0x18] sm:$0xff]
    %v3147 = vld [vmem:[#allocation8 + $0x20] sm:$0xff]
    %v3148 = vld [vmem:[#allocation8 + $0x28] sm:$0xff]
    %v3149 = vld [vmem:[#allocation8 + $0x30] sm:$0xff]
    %v3150 = vld [vmem:[#allocation8 + $0x38] sm:$0xff]
    %v3151 = vld [vmem:[#allocation8 + $0x40] sm:$0xff]
    %v3152 = vld [vmem:[#allocation8 + $0x48] sm:$0xff]
    %v3153 = vld [vmem:[#allocation8 + $0x50] sm:$0xff]
    %v3154 = vld [vmem:[#allocation8 + $0x58] sm:$0xff]
    %v3155 = vld [vmem:[#allocation8 + $0x60] sm:$0xff]
    %v3156 = vld [vmem:[#allocation8 + $0x68] sm:$0xff]
    %v3157 = vld [vmem:[#allocation8 + $0x70] sm:$0xff]
    %v3158 = vld [vmem:[#allocation8 + $0x78] sm:$0xff]
    %v3159 = vld [vmem:[#allocation8 + $0x80] sm:$0xff]
    %v3160 = vld [vmem:[#allocation8 + $0x88] sm:$0xff]
    %v3161 = vld [vmem:[#allocation8 + $0x90] sm:$0xff]
    %v3162 = vld [vmem:[#allocation8 + $0x98] sm:$0xff]
    %v3163 = vld [vmem:[#allocation8 + $0xa0] sm:$0xff]
    %v3164 = vld [vmem:[#allocation8 + $0xa8] sm:$0xff]
    %v3165 = vld [vmem:[#allocation8 + $0xb0] sm:$0xff]
    %v3166 = vld [vmem:[#allocation8 + $0xb8] sm:$0xff]
    %v3167 = vld [vmem:[#allocation8 + $0xc0] sm:$0xff]
    %v3168 = vld [vmem:[#allocation8 + $0xc8] sm:$0xff]
    %v3169 = vld [vmem:[#allocation8 + $0xd0] sm:$0xff]
    %v3170 = vld [vmem:[#allocation8 + $0xd8] sm:$0xff]
    %v3171 = vld [vmem:[#allocation8 + $0xe0] sm:$0xff]
    %v3172 = vld [vmem:[#allocation8 + $0xe8] sm:$0xff]
    %v3173 = vld [vmem:[#allocation8 + $0xf0] sm:$0xff]
    %v3174 = vld [vmem:[#allocation8 + $0xf8] sm:$0xff]
    %v3175 = vld [vmem:[%s3] sm:$0x3]
    %v3177 = vlaneseq
    %v3178 = vshrl.u32 %v3177, 7
    %v3179 = vsub.s32 0, %v3178
    %v3180 = vrot.slane %v3175, %v3179
    %v3181 = vlaneseq
    %v3182 = vshrl.u32 %v3181, 7
    %v3183 = vsub.s32 1, %v3182
    %v3184 = vrot.slane %v3175, %v3183
    %v3219 = vunpack.c.l.b16 %v3111
    %v3220 = vunpack.c.h.b16 %v3111
    %v3221 = vunpack.c.l.b16 %v3112
    %v3222 = vunpack.c.h.b16 %v3112
    %v3223 = vunpack.c.l.b16 %v3113
    %v3224 = vunpack.c.h.b16 %v3113
    %v3225 = vunpack.c.l.b16 %v3114
    %v3226 = vunpack.c.h.b16 %v3114
    %v3227 = vunpack.c.l.b16 %v3115
    %v3228 = vunpack.c.h.b16 %v3115
    %v3229 = vunpack.c.l.b16 %v3116
    %v3230 = vunpack.c.h.b16 %v3116
    %v3231 = vunpack.c.l.b16 %v3117
    %v3232 = vunpack.c.h.b16 %v3117
    %v3233 = vunpack.c.l.b16 %v3118
    %v3234 = vunpack.c.h.b16 %v3118
    %v3235 = vunpack.c.l.b16 %v3119
    %v3236 = vunpack.c.h.b16 %v3119
    %v3237 = vunpack.c.l.b16 %v3120
    %v3238 = vunpack.c.h.b16 %v3120
    %v3239 = vunpack.c.l.b16 %v3121
    %v3240 = vunpack.c.h.b16 %v3121
    %v3241 = vunpack.c.l.b16 %v3122
    %v3242 = vunpack.c.h.b16 %v3122
    %v3243 = vunpack.c.l.b16 %v3123
    %v3244 = vunpack.c.h.b16 %v3123
    %v3245 = vunpack.c.l.b16 %v3124
    %v3246 = vunpack.c.h.b16 %v3124
    %v3247 = vunpack.c.l.b16 %v3125
    %v3248 = vunpack.c.h.b16 %v3125
    %v3249 = vunpack.c.l.b16 %v3126
    %v3250 = vunpack.c.h.b16 %v3126
    %v3251 = vunpack.c.l.b16 %v3127
    %v3252 = vunpack.c.h.b16 %v3127
    %v3253 = vunpack.c.l.b16 %v3128
    %v3254 = vunpack.c.h.b16 %v3128
    %v3255 = vunpack.c.l.b16 %v3129
    %v3256 = vunpack.c.h.b16 %v3129
    %v3257 = vunpack.c.l.b16 %v3130
    %v3258 = vunpack.c.h.b16 %v3130
    %v3259 = vunpack.c.l.b16 %v3131
    %v3260 = vunpack.c.h.b16 %v3131
    %v3261 = vunpack.c.l.b16 %v3132
    %v3262 = vunpack.c.h.b16 %v3132
    %v3263 = vunpack.c.l.b16 %v3133
    %v3264 = vunpack.c.h.b16 %v3133
    %v3265 = vunpack.c.l.b16 %v3134
    %v3266 = vunpack.c.h.b16 %v3134
    %v3267 = vunpack.c.l.b16 %v3135
    %v3268 = vunpack.c.h.b16 %v3135
    %v3269 = vunpack.c.l.b16 %v3136
    %v3270 = vunpack.c.h.b16 %v3136
    %v3271 = vunpack.c.l.b16 %v3137
    %v3272 = vunpack.c.h.b16 %v3137
    %v3273 = vunpack.c.l.b16 %v3138
    %v3274 = vunpack.c.h.b16 %v3138
    %v3275 = vunpack.c.l.b16 %v3139
    %v3276 = vunpack.c.h.b16 %v3139
    %v3277 = vunpack.c.l.b16 %v3140
    %v3278 = vunpack.c.h.b16 %v3140
    %v3279 = vunpack.c.l.b16 %v3141
    %v3280 = vunpack.c.h.b16 %v3141
    %v3281 = vunpack.c.l.b16 %v3142
    %v3282 = vunpack.c.h.b16 %v3142
    %v3283 = vpack.c.b16 %v3221, %v3219
    %v3284 = vpack.c.b16 %v3222, %v3220
    %v3285 = vpack.c.b16 %v3225, %v3223
    %v3286 = vpack.c.b16 %v3226, %v3224
    %v3287 = vpack.c.b16 %v3229, %v3227
    %v3288 = vpack.c.b16 %v3230, %v3228
    %v3289 = vpack.c.b16 %v3233, %v3231
    %v3290 = vpack.c.b16 %v3234, %v3232
    %v3291 = vpack.c.b16 %v3237, %v3235
    %v3292 = vpack.c.b16 %v3238, %v3236
    %v3293 = vpack.c.b16 %v3241, %v3239
    %v3294 = vpack.c.b16 %v3242, %v3240
    %v3295 = vpack.c.b16 %v3245, %v3243
    %v3296 = vpack.c.b16 %v3246, %v3244
    %v3297 = vpack.c.b16 %v3249, %v3247
    %v3298 = vpack.c.b16 %v3250, %v3248
    %v3299 = vpack.c.b16 %v3253, %v3251
    %v3300 = vpack.c.b16 %v3254, %v3252
    %v3301 = vpack.c.b16 %v3257, %v3255
    %v3302 = vpack.c.b16 %v3258, %v3256
    %v3303 = vpack.c.b16 %v3261, %v3259
    %v3304 = vpack.c.b16 %v3262, %v3260
    %v3305 = vpack.c.b16 %v3265, %v3263
    %v3306 = vpack.c.b16 %v3266, %v3264
    %v3307 = vpack.c.b16 %v3269, %v3267
    %v3308 = vpack.c.b16 %v3270, %v3268
    %v3309 = vpack.c.b16 %v3273, %v3271
    %v3310 = vpack.c.b16 %v3274, %v3272
    %v3311 = vpack.c.b16 %v3277, %v3275
    %v3312 = vpack.c.b16 %v3278, %v3276
    %v3313 = vpack.c.b16 %v3281, %v3279
    %v3314 = vpack.c.b16 %v3282, %v3280
    %v3379 = vunpack.c.l.b16 %v3143
    %v3380 = vunpack.c.h.b16 %v3143
    %v3381 = vunpack.c.l.b16 %v3144
    %v3382 = vunpack.c.h.b16 %v3144
    %v3383 = vunpack.c.l.b16 %v3145
    %v3384 = vunpack.c.h.b16 %v3145
    %v3385 = vunpack.c.l.b16 %v3146
    %v3386 = vunpack.c.h.b16 %v3146
    %v3387 = vunpack.c.l.b16 %v3147
    %v3388 = vunpack.c.h.b16 %v3147
    %v3389 = vunpack.c.l.b16 %v3148
    %v3390 = vunpack.c.h.b16 %v3148
    %v3391 = vunpack.c.l.b16 %v3149
    %v3392 = vunpack.c.h.b16 %v3149
    %v3393 = vunpack.c.l.b16 %v3150
    %v3394 = vunpack.c.h.b16 %v3150
    %v3395 = vunpack.c.l.b16 %v3151
    %v3396 = vunpack.c.h.b16 %v3151
    %v3397 = vunpack.c.l.b16 %v3152
    %v3398 = vunpack.c.h.b16 %v3152
    %v3399 = vunpack.c.l.b16 %v3153
    %v3400 = vunpack.c.h.b16 %v3153
    %v3401 = vunpack.c.l.b16 %v3154
    %v3402 = vunpack.c.h.b16 %v3154
    %v3403 = vunpack.c.l.b16 %v3155
    %v3404 = vunpack.c.h.b16 %v3155
    %v3405 = vunpack.c.l.b16 %v3156
    %v3406 = vunpack.c.h.b16 %v3156
    %v3407 = vunpack.c.l.b16 %v3157
    %v3408 = vunpack.c.h.b16 %v3157
    %v3409 = vunpack.c.l.b16 %v3158
    %v3410 = vunpack.c.h.b16 %v3158
    %v3411 = vunpack.c.l.b16 %v3159
    %v3412 = vunpack.c.h.b16 %v3159
    %v3413 = vunpack.c.l.b16 %v3160
    %v3414 = vunpack.c.h.b16 %v3160
    %v3415 = vunpack.c.l.b16 %v3161
    %v3416 = vunpack.c.h.b16 %v3161
    %v3417 = vunpack.c.l.b16 %v3162
    %v3418 = vunpack.c.h.b16 %v3162
    %v3419 = vunpack.c.l.b16 %v3163
    %v3420 = vunpack.c.h.b16 %v3163
    %v3421 = vunpack.c.l.b16 %v3164
    %v3422 = vunpack.c.h.b16 %v3164
    %v3423 = vunpack.c.l.b16 %v3165
    %v3424 = vunpack.c.h.b16 %v3165
    %v3425 = vunpack.c.l.b16 %v3166
    %v3426 = vunpack.c.h.b16 %v3166
    %v3427 = vunpack.c.l.b16 %v3167
    %v3428 = vunpack.c.h.b16 %v3167
    %v3429 = vunpack.c.l.b16 %v3168
    %v3430 = vunpack.c.h.b16 %v3168
    %v3431 = vunpack.c.l.b16 %v3169
    %v3432 = vunpack.c.h.b16 %v3169
    %v3433 = vunpack.c.l.b16 %v3170
    %v3434 = vunpack.c.h.b16 %v3170
    %v3435 = vunpack.c.l.b16 %v3171
    %v3436 = vunpack.c.h.b16 %v3171
    %v3437 = vunpack.c.l.b16 %v3172
    %v3438 = vunpack.c.h.b16 %v3172
    %v3439 = vunpack.c.l.b16 %v3173
    %v3440 = vunpack.c.h.b16 %v3173
    %v3441 = vunpack.c.l.b16 %v3174
    %v3442 = vunpack.c.h.b16 %v3174
    %v3443 = vpack.c.b16 %v3381, %v3379
    %v3444 = vpack.c.b16 %v3382, %v3380
    %v3445 = vpack.c.b16 %v3385, %v3383
    %v3446 = vpack.c.b16 %v3386, %v3384
    %v3447 = vpack.c.b16 %v3389, %v3387
    %v3448 = vpack.c.b16 %v3390, %v3388
    %v3449 = vpack.c.b16 %v3393, %v3391
    %v3450 = vpack.c.b16 %v3394, %v3392
    %v3451 = vpack.c.b16 %v3397, %v3395
    %v3452 = vpack.c.b16 %v3398, %v3396
    %v3453 = vpack.c.b16 %v3401, %v3399
    %v3454 = vpack.c.b16 %v3402, %v3400
    %v3455 = vpack.c.b16 %v3405, %v3403
    %v3456 = vpack.c.b16 %v3406, %v3404
    %v3457 = vpack.c.b16 %v3409, %v3407
    %v3458 = vpack.c.b16 %v3410, %v3408
    %v3459 = vpack.c.b16 %v3413, %v3411
    %v3460 = vpack.c.b16 %v3414, %v3412
    %v3461 = vpack.c.b16 %v3417, %v3415
    %v3462 = vpack.c.b16 %v3418, %v3416
    %v3463 = vpack.c.b16 %v3421, %v3419
    %v3464 = vpack.c.b16 %v3422, %v3420
    %v3465 = vpack.c.b16 %v3425, %v3423
    %v3466 = vpack.c.b16 %v3426, %v3424
    %v3467 = vpack.c.b16 %v3429, %v3427
    %v3468 = vpack.c.b16 %v3430, %v3428
    %v3469 = vpack.c.b16 %v3433, %v3431
    %v3470 = vpack.c.b16 %v3434, %v3432
    %v3471 = vpack.c.b16 %v3437, %v3435
    %v3472 = vpack.c.b16 %v3438, %v3436
    %v3473 = vpack.c.b16 %v3441, %v3439
    %v3474 = vpack.c.b16 %v3442, %v3440
    %3507 = vmatprep.subr.bf16.mxu0 %v3458
    %3508 = vmatpush1.bf16.msra.mxu0 %v3457
    %3509 = vmatprep.subr.bf16.mxu0 %v3456
    %3510 = vmatpush1.bf16.msra.mxu0 %v3455
    %3511 = vmatprep.subr.bf16.mxu0 %v3454
    %3512 = vmatpush1.bf16.msra.mxu0 %v3453
    %3513 = vmatprep.subr.bf16.mxu0 %v3452
    %3514 = vmatpush1.bf16.msra.mxu0 %v3451
    %3515 = vmatprep.subr.bf16.mxu0 %v3450
    %3516 = vmatpush1.bf16.msra.mxu0 %v3449
    %3517 = vmatprep.subr.bf16.mxu0 %v3448
    %3518 = vmatpush1.bf16.msra.mxu0 %v3447
    %3519 = vmatprep.subr.bf16.mxu0 %v3446
    %3520 = vmatpush1.bf16.msra.mxu0 %v3445
    %3521 = vmatprep.subr.bf16.mxu0 %v3444
    %3522 = vmatpush1.bf16.msra.mxu0 %v3443
    %3523 = vmatprep.subr.bf16.mxu0 %v3474
    %3524 = vmatpush2.bf16.msra.mxu0 %v3473
    %3525 = vmatprep.subr.bf16.mxu0 %v3472
    %3526 = vmatpush2.bf16.msra.mxu0 %v3471
    %3527 = vmatprep.subr.bf16.mxu0 %v3470
    %3528 = vmatpush2.bf16.msra.mxu0 %v3469
    %3529 = vmatprep.subr.bf16.mxu0 %v3468
    %3530 = vmatpush2.bf16.msra.mxu0 %v3467
    %3531 = vmatprep.subr.bf16.mxu0 %v3466
    %3532 = vmatpush2.bf16.msra.mxu0 %v3465
    %3533 = vmatprep.subr.bf16.mxu0 %v3464
    %3534 = vmatpush2.bf16.msra.mxu0 %v3463
    %3535 = vmatprep.subr.bf16.mxu0 %v3462
    %3536 = vmatpush2.bf16.msra.mxu0 %v3461
    %3537 = vmatprep.subr.bf16.mxu0 %v3460
    %3538 = vmatpush2.bf16.msra.mxu0 %v3459
    %3539 = vmatprep.mubr.bf16.mxu0 %v3284
    %3540 = vmatmul.mubr.bf16.gmra.mxu0 %v3283
    %v3541 = vpop.f32.mrf.mxu0
    %v3542 = vadd.f32 %v3180, %v3541
    %v3543 = vpop.f32.mrf.mxu0
    %v3544 = vadd.f32 %v3184, %v3543
    %v3545 = vpop.f32.mrf.mxu0
    %v3546 = vadd.f32 %v3180, %v3545
    %v3547 = vpop.f32.mrf.mxu0
    %v3548 = vadd.f32 %v3184, %v3547
    %3549 = vmatprep.mubr.bf16.mxu0 %v3286
    %3550 = vmatmul.mubr.bf16.gmra.mxu0 %v3285
    %v3551 = vpop.f32.mrf.mxu0
    %v3552 = vadd.f32 %v3180, %v3551
    %v3553 = vpop.f32.mrf.mxu0
    %v3554 = vadd.f32 %v3184, %v3553
    %v3555 = vpop.f32.mrf.mxu0
    %v3556 = vadd.f32 %v3180, %v3555
    %v3557 = vpop.f32.mrf.mxu0
    %v3558 = vadd.f32 %v3184, %v3557
    %3559 = vmatprep.mubr.bf16.mxu0 %v3288
    %3560 = vmatmul.mubr.bf16.gmra.mxu0 %v3287
    %v3561 = vpop.f32.mrf.mxu0
    %v3562 = vadd.f32 %v3180, %v3561
    %v3563 = vpop.f32.mrf.mxu0
    %v3564 = vadd.f32 %v3184, %v3563
    %v3565 = vpop.f32.mrf.mxu0
    %v3566 = vadd.f32 %v3180, %v3565
    %v3567 = vpop.f32.mrf.mxu0
    %v3568 = vadd.f32 %v3184, %v3567
    %3569 = vmatprep.mubr.bf16.mxu0 %v3290
    %3570 = vmatmul.mubr.bf16.gmra.mxu0 %v3289
    %v3571 = vpop.f32.mrf.mxu0
    %v3572 = vadd.f32 %v3180, %v3571
    %v3573 = vpop.f32.mrf.mxu0
    %v3574 = vadd.f32 %v3184, %v3573
    %v3575 = vpop.f32.mrf.mxu0
    %v3576 = vadd.f32 %v3180, %v3575
    %v3577 = vpop.f32.mrf.mxu0
    %v3578 = vadd.f32 %v3184, %v3577
    %3579 = vmatprep.mubr.bf16.mxu0 %v3292
    %3580 = vmatmul.mubr.bf16.gmra.mxu0 %v3291
    %v3581 = vpop.f32.mrf.mxu0
    %v3582 = vadd.f32 %v3180, %v3581
    %v3583 = vpop.f32.mrf.mxu0
    %v3584 = vadd.f32 %v3184, %v3583
    %v3585 = vpop.f32.mrf.mxu0
    %v3586 = vadd.f32 %v3180, %v3585
    %v3587 = vpop.f32.mrf.mxu0
    %v3588 = vadd.f32 %v3184, %v3587
    %3589 = vmatprep.mubr.bf16.mxu0 %v3294
    %3590 = vmatmul.mubr.bf16.gmra.mxu0 %v3293
    %v3591 = vpop.f32.mrf.mxu0
    %v3592 = vadd.f32 %v3180, %v3591
    %v3593 = vpop.f32.mrf.mxu0
    %v3594 = vadd.f32 %v3184, %v3593
    %v3595 = vpop.f32.mrf.mxu0
    %v3596 = vadd.f32 %v3180, %v3595
    %v3597 = vpop.f32.mrf.mxu0
    %v3598 = vadd.f32 %v3184, %v3597
    %3599 = vmatprep.mubr.bf16.mxu0 %v3296
    %3600 = vmatmul.mubr.bf16.gmra.mxu0 %v3295
    %v3601 = vpop.f32.mrf.mxu0
    %v3602 = vadd.f32 %v3180, %v3601
    %v3603 = vpop.f32.mrf.mxu0
    %v3604 = vadd.f32 %v3184, %v3603
    %v3605 = vpop.f32.mrf.mxu0
    %v3606 = vadd.f32 %v3180, %v3605
    %v3607 = vpop.f32.mrf.mxu0
    %v3608 = vadd.f32 %v3184, %v3607
    %3609 = vmatprep.mubr.bf16.mxu0 %v3298
    %3610 = vmatmul.mubr.bf16.gmra.mxu0 %v3297
    %v3611 = vpop.f32.mrf.mxu0
    %v3612 = vadd.f32 %v3180, %v3611
    %v3613 = vpop.f32.mrf.mxu0
    %v3614 = vadd.f32 %v3184, %v3613
    %v3615 = vpop.f32.mrf.mxu0
    %v3616 = vadd.f32 %v3180, %v3615
    %v3617 = vpop.f32.mrf.mxu0
    %v3618 = vadd.f32 %v3184, %v3617
    %3619 = vmatprep.mubr.bf16.mxu0 %v3300
    %3620 = vmatmul.mubr.bf16.gmra.mxu0 %v3299
    %v3621 = vpop.f32.mrf.mxu0
    %v3622 = vadd.f32 %v3180, %v3621
    %v3623 = vpop.f32.mrf.mxu0
    %v3624 = vadd.f32 %v3184, %v3623
    %v3625 = vpop.f32.mrf.mxu0
    %v3626 = vadd.f32 %v3180, %v3625
    %v3627 = vpop.f32.mrf.mxu0
    %v3628 = vadd.f32 %v3184, %v3627
    %3629 = vmatprep.mubr.bf16.mxu0 %v3302
    %3630 = vmatmul.mubr.bf16.gmra.mxu0 %v3301
    %v3631 = vpop.f32.mrf.mxu0
    %v3632 = vadd.f32 %v3180, %v3631
    %v3633 = vpop.f32.mrf.mxu0
    %v3634 = vadd.f32 %v3184, %v3633
    %v3635 = vpop.f32.mrf.mxu0
    %v3636 = vadd.f32 %v3180, %v3635
    %v3637 = vpop.f32.mrf.mxu0
    %v3638 = vadd.f32 %v3184, %v3637
    %3639 = vmatprep.mubr.bf16.mxu0 %v3304
    %3640 = vmatmul.mubr.bf16.gmra.mxu0 %v3303
    %v3641 = vpop.f32.mrf.mxu0
    %v3642 = vadd.f32 %v3180, %v3641
    %v3643 = vpop.f32.mrf.mxu0
    %v3644 = vadd.f32 %v3184, %v3643
    %v3645 = vpop.f32.mrf.mxu0
    %v3646 = vadd.f32 %v3180, %v3645
    %v3647 = vpop.f32.mrf.mxu0
    %v3648 = vadd.f32 %v3184, %v3647
    %3649 = vmatprep.mubr.bf16.mxu0 %v3306
    %3650 = vmatmul.mubr.bf16.gmra.mxu0 %v3305
    %v3651 = vpop.f32.mrf.mxu0
    %v3652 = vadd.f32 %v3180, %v3651
    %v3653 = vpop.f32.mrf.mxu0
    %v3654 = vadd.f32 %v3184, %v3653
    %v3655 = vpop.f32.mrf.mxu0
    %v3656 = vadd.f32 %v3180, %v3655
    %v3657 = vpop.f32.mrf.mxu0
    %v3658 = vadd.f32 %v3184, %v3657
    %3659 = vmatprep.mubr.bf16.mxu0 %v3308
    %3660 = vmatmul.mubr.bf16.gmra.mxu0 %v3307
    %v3661 = vpop.f32.mrf.mxu0
    %v3662 = vadd.f32 %v3180, %v3661
    %v3663 = vpop.f32.mrf.mxu0
    %v3664 = vadd.f32 %v3184, %v3663
    %v3665 = vpop.f32.mrf.mxu0
    %v3666 = vadd.f32 %v3180, %v3665
    %v3667 = vpop.f32.mrf.mxu0
    %v3668 = vadd.f32 %v3184, %v3667
    %3669 = vmatprep.mubr.bf16.mxu0 %v3310
    %3670 = vmatmul.mubr.bf16.gmra.mxu0 %v3309
    %v3671 = vpop.f32.mrf.mxu0
    %v3672 = vadd.f32 %v3180, %v3671
    %v3673 = vpop.f32.mrf.mxu0
    %v3674 = vadd.f32 %v3184, %v3673
    %v3675 = vpop.f32.mrf.mxu0
    %v3676 = vadd.f32 %v3180, %v3675
    %v3677 = vpop.f32.mrf.mxu0
    %v3678 = vadd.f32 %v3184, %v3677
    %3679 = vmatprep.mubr.bf16.mxu0 %v3312
    %3680 = vmatmul.mubr.bf16.gmra.mxu0 %v3311
    %v3681 = vpop.f32.mrf.mxu0
    %v3682 = vadd.f32 %v3180, %v3681
    %v3683 = vpop.f32.mrf.mxu0
    %v3684 = vadd.f32 %v3184, %v3683
    %v3685 = vpop.f32.mrf.mxu0
    %v3686 = vadd.f32 %v3180, %v3685
    %v3687 = vpop.f32.mrf.mxu0
    %v3688 = vadd.f32 %v3184, %v3687
    %3689 = vmatprep.mubr.bf16.mxu0 %v3314
    %3690 = vmatmul.mubr.bf16.gmra.mxu0 %v3313
    %v3691 = vpop.f32.mrf.mxu0
    %v3692 = vadd.f32 %v3180, %v3691
    %v3693 = vpop.f32.mrf.mxu0
    %v3694 = vadd.f32 %v3184, %v3693
    %v3695 = vpop.f32.mrf.mxu0
    %v3696 = vadd.f32 %v3180, %v3695
    %v3697 = vpop.f32.mrf.mxu0
    %v3698 = vadd.f32 %v3184, %v3697
    %3699 = vdwg.mxu0
    %3700 = vst [vmem:[#allocation9] sm:$0xff] %v3542
    %3701 = vst [vmem:[#allocation9 + $0x8] sm:$0xff] %v3544
    %3702 = vst [vmem:[#allocation9 + $0x10] sm:$0xff] %v3546
    %3703 = vst [vmem:[#allocation9 + $0x18] sm:$0xff] %v3548
    %3704 = vst [vmem:[#allocation9 + $0x20] sm:$0xff] %v3552
    %3705 = vst [vmem:[#allocation9 + $0x28] sm:$0xff] %v3554
    %3706 = vst [vmem:[#allocation9 + $0x30] sm:$0xff] %v3556
    %3707 = vst [vmem:[#allocation9 + $0x38] sm:$0xff] %v3558
    %3708 = vst [vmem:[#allocation9 + $0x40] sm:$0xff] %v3562
    %3709 = vst [vmem:[#allocation9 + $0x48] sm:$0xff] %v3564
    %3710 = vst [vmem:[#allocation9 + $0x50] sm:$0xff] %v3566
    %3711 = vst [vmem:[#allocation9 + $0x58] sm:$0xff] %v3568
    %3712 = vst [vmem:[#allocation9 + $0x60] sm:$0xff] %v3572
    %3713 = vst [vmem:[#allocation9 + $0x68] sm:$0xff] %v3574
    %3714 = vst [vmem:[#allocation9 + $0x70] sm:$0xff] %v3576
    %3715 = vst [vmem:[#allocation9 + $0x78] sm:$0xff] %v3578
    %3716 = vst [vmem:[#allocation9 + $0x80] sm:$0xff] %v3582
    %3717 = vst [vmem:[#allocation9 + $0x88] sm:$0xff] %v3584
    %3718 = vst [vmem:[#allocation9 + $0x90] sm:$0xff] %v3586
    %3719 = vst [vmem:[#allocation9 + $0x98] sm:$0xff] %v3588
    %3720 = vst [vmem:[#allocation9 + $0xa0] sm:$0xff] %v3592
    %3721 = vst [vmem:[#allocation9 + $0xa8] sm:$0xff] %v3594
    %3722 = vst [vmem:[#allocation9 + $0xb0] sm:$0xff] %v3596
    %3723 = vst [vmem:[#allocation9 + $0xb8] sm:$0xff] %v3598
    %3724 = vst [vmem:[#allocation9 + $0xc0] sm:$0xff] %v3602
    %3725 = vst [vmem:[#allocation9 + $0xc8] sm:$0xff] %v3604
    %3726 = vst [vmem:[#allocation9 + $0xd0] sm:$0xff] %v3606
    %3727 = vst [vmem:[#allocation9 + $0xd8] sm:$0xff] %v3608
    %3728 = vst [vmem:[#allocation9 + $0xe0] sm:$0xff] %v3612
    %3729 = vst [vmem:[#allocation9 + $0xe8] sm:$0xff] %v3614
    %3730 = vst [vmem:[#allocation9 + $0xf0] sm:$0xff] %v3616
    %3731 = vst [vmem:[#allocation9 + $0xf8] sm:$0xff] %v3618
    %3732 = vst [vmem:[#allocation9 + $0x100] sm:$0xff] %v3622
    %3733 = vst [vmem:[#allocation9 + $0x108] sm:$0xff] %v3624
    %3734 = vst [vmem:[#allocation9 + $0x110] sm:$0xff] %v3626
    %3735 = vst [vmem:[#allocation9 + $0x118] sm:$0xff] %v3628
    %3736 = vst [vmem:[#allocation9 + $0x120] sm:$0xff] %v3632
    %3737 = vst [vmem:[#allocation9 + $0x128] sm:$0xff] %v3634
    %3738 = vst [vmem:[#allocation9 + $0x130] sm:$0xff] %v3636
    %3739 = vst [vmem:[#allocation9 + $0x138] sm:$0xff] %v3638
    %3740 = vst [vmem:[#allocation9 + $0x140] sm:$0xff] %v3642
    %3741 = vst [vmem:[#allocation9 + $0x148] sm:$0xff] %v3644
    %3742 = vst [vmem:[#allocation9 + $0x150] sm:$0xff] %v3646
    %3743 = vst [vmem:[#allocation9 + $0x158] sm:$0xff] %v3648
    %3744 = vst [vmem:[#allocation9 + $0x160] sm:$0xff] %v3652
    %3745 = vst [vmem:[#allocation9 + $0x168] sm:$0xff] %v3654
    %3746 = vst [vmem:[#allocation9 + $0x170] sm:$0xff] %v3656
    %3747 = vst [vmem:[#allocation9 + $0x178] sm:$0xff] %v3658
    %3748 = vst [vmem:[#allocation9 + $0x180] sm:$0xff] %v3662
    %3749 = vst [vmem:[#allocation9 + $0x188] sm:$0xff] %v3664
    %3750 = vst [vmem:[#allocation9 + $0x190] sm:$0xff] %v3666
    %3751 = vst [vmem:[#allocation9 + $0x198] sm:$0xff] %v3668
    %3752 = vst [vmem:[#allocation9 + $0x1a0] sm:$0xff] %v3672
    %3753 = vst [vmem:[#allocation9 + $0x1a8] sm:$0xff] %v3674
    %3754 = vst [vmem:[#allocation9 + $0x1b0] sm:$0xff] %v3676
    %3755 = vst [vmem:[#allocation9 + $0x1b8] sm:$0xff] %v3678
    %3756 = vst [vmem:[#allocation9 + $0x1c0] sm:$0xff] %v3682
    %3757 = vst [vmem:[#allocation9 + $0x1c8] sm:$0xff] %v3684
    %3758 = vst [vmem:[#allocation9 + $0x1d0] sm:$0xff] %v3686
    %3759 = vst [vmem:[#allocation9 + $0x1d8] sm:$0xff] %v3688
    %3760 = vst [vmem:[#allocation9 + $0x1e0] sm:$0xff] %v3692
    %3761 = vst [vmem:[#allocation9 + $0x1e8] sm:$0xff] %v3694
    %3762 = vst [vmem:[#allocation9 + $0x1f0] sm:$0xff] %v3696
    %3763 = vst [vmem:[#allocation9 + $0x1f8] sm:$0xff] %v3698
    // Predicated region
    $region30: #{attention_forward.1} parent=1 // pred_check
      _
    $region31: #{attention_forward.1} parent=1 // pred_check_branch
      %3765 = sbr.rel (0) target = $region33
    $region32: #{attention_forward.1} parent=1 // pred_region
      %s3767 = ssub.s32 8192, 8192
      %3768 = vsyncadd [#allocation5], %s3767
      %s3769 = sshll.u32 [#allocation9], 4
      %s3770 = int_to_ptr.vmem [resolvable:$true] %s3769
      %3775 = dma.vmem_to_hbm [thread:$0]  %s3770, 8192, %s4, [#allocation5], 256, 256, 16
    $region33: #{attention_forward.1} parent=1 // pred_fallthru
      _
    // Predicated region
    $region34: #{attention_forward.1} parent=1 // pred_check
      _
    $region35: #{attention_forward.1} parent=1 // pred_check_branch
      %3777 = sbr.rel (0) target = $region37
    $region36: #{attention_forward.1} parent=1 // pred_region
      %3778 = dma.done [#allocation5], 8192
    $region37: #{attention_forward.1} parent=1 // pred_fallthru
      _
    %3779 = vsyncpa [#allocation4], 1
    %3780 = vsyncpa [#allocation7], 1
    %3781 = vsyncpa [#allocation5], 1

</llo_original>
